<compile_context>
chip_gen: v7x
topology: tpu7x:2x2x1
jax: 0.10.0
libtpu: 0.0.40
codegen_flags: <defaults>
</compile_context>

<pallas_src>
import functools

import jax
import jax.numpy as jnp
from jax import lax
from jax.experimental import pallas as pl
from jax.experimental.pallas import tpu as pltpu

LANE = 128   # lane width: channel dims zero-padded to a multiple of this
SUB = 8      # sublane width: time / halo rows aligned to this
MXU_DTYPE = jnp.bfloat16   # matmul operand dtype (accumulation is always f32)


def _round_up(n, m):
    return ((n + m - 1) // m) * m


# ----------------------------------------------------------------------------
# Fused whole-model kernel (one grid step = one batch tile of B_TILE elements)
# ----------------------------------------------------------------------------
def _fused_tcn_kernel(block_cfg, B_TILE, T, T_LAST, OFF, *refs):
    """Fused TCN forward for a tile of B_TILE batch elements.

    refs = (x_ref (B_TILE, T, Cin_p),
            per block: w1 (K*Cin_p, Cout_p), b1 (1, Cout_p),
                       w2 (K*Cout_p, Cout_p), b2 (1, Cout_p),
                       [wd (Cin_p, Cout_p), bd (1, Cout_p)]  if downsample,
            fc_w (Clast_p, Out_p), fc_b (1, Out_p),
            o_ref (B_TILE, Out_p),
            xpad_ref VMEM scratch (B_TILE, OFF + T, C_max_p))

    block_cfg : tuple of (kernel_size, dilation, has_downsample) per TemporalBlock.
    T         : (padded) sequence length, multiple of 8.
    T_LAST    : index of the last *real* timestep (original T - 1).
    OFF       : 8-aligned causal zero-halo rows per batch element.
    """
    x_ref = refs[0]
    fc_w_ref = refs[-4]
    fc_b_ref = refs[-3]
    o_ref = refs[-2]
    xpad_ref = refs[-1]
    w_refs = refs[1:-4]

    c_max = xpad_ref.shape[2]
    M = B_TILE * T

    # Zero the causal halo every grid step (each TensorCore must zero its own
    # scratch when the grid axis is "parallel"); only ever read afterwards.
    xpad_ref[:, 0:OFF, :] = jnp.zeros((B_TILE, OFF, c_max), jnp.float32)

    def causal_conv(h2, w_ref, b_ref, k, d):
        """Dilated causal conv (Conv1d(pad=(k-1)*d) + Chomp1d) as ONE matmul.

        h2: (B_TILE*T, Cin_p) f32.  Writes the activation below each element's
        zero halo, reads the K causally-shifted taps, lane-concatenates them
        into a (B_TILE*T, K*Cin_p) slab and runs a single lane-dense MXU
        contraction with M = B_TILE*T.
        """
        cin = w_ref.shape[0] // k
        xpad_ref[:, OFF:OFF + T, 0:cin] = h2.reshape(B_TILE, T, cin)
        taps = []
        for j in range(k):
            shift = (k - 1 - j) * d            # out[t] += w[j] . x[t - shift]
            start = OFF - shift
            taps.append(xpad_ref[:, start:start + T, 0:cin])
        xk = taps[0] if k == 1 else jnp.concatenate(taps, axis=2)  # (B_TILE,T,K*Cin_p)
        xk2 = xk.reshape(M, k * cin)
        y = jnp.dot(xk2.astype(MXU_DTYPE), w_ref[...],
                    preferred_element_type=jnp.float32)
        return y + b_ref[...]                                      # bias is f32

    h = x_ref[...].reshape(M, x_ref.shape[2]).astype(jnp.float32)  # (M, Cin_p)

    idx = 0
    for (k, d, has_ds) in block_cfg:
        w1, b1, w2, b2 = w_refs[idx:idx + 4]
        idx += 4
        if has_ds:
            wd, bd = w_refs[idx:idx + 2]
            idx += 2
            res = jnp.dot(h.astype(MXU_DTYPE), wd[...],
                          preferred_element_type=jnp.float32) + bd[...]
        else:
            res = h
        # conv1 -> chomp -> relu -> (dropout = identity)
        h1 = jnp.maximum(causal_conv(h, w1, b1, k, d), 0.0)
        # conv2 -> chomp -> relu -> (dropout = identity)
        out = jnp.maximum(causal_conv(h1, w2, b2, k, d), 0.0)
        # relu(out + res)
        h = jnp.maximum(out + res, 0.0)

    # Gather the last *real* timestep of every element with a one-hot selection
    # matmul (avoids sublane shuffles), then one batched FC matmul (M = B_TILE).
    r = lax.broadcasted_iota(jnp.int32, (B_TILE, M), 0)
    c = lax.broadcasted_iota(jnp.int32, (B_TILE, M), 1)
    sel = (c == r * T + T_LAST).astype(jnp.float32)                # (B_TILE, M)
    y_last = jnp.dot(sel, h, preferred_element_type=jnp.float32)   # (B_TILE, Clast_p)

    logits = jnp.dot(y_last.astype(MXU_DTYPE), fc_w_ref[...],
                     preferred_element_type=jnp.float32) + fc_b_ref[...]
    o_ref[...] = logits.astype(o_ref.dtype)                        # dense (B_TILE, Out_p)


# ----------------------------------------------------------------------------
# Wrapper (single pallas_call, batch-tiled grid)
# ----------------------------------------------------------------------------
def imu_tcn_forward(x, params, *, b_tile=8):
    """x: (B, T, input_size) float32 -> (B, output_size) float32."""
    B, T0, cin = x.shape
    cin_p = params["cin_p"]
    out_p = params["fc_b"].shape[1]
    c_max = params["c_max_p"]
    block_cfg = params["block_cfg"]
    flat_w = params["flat_weights"]
    fc_w, fc_b = params["fc_w"], params["fc_b"]

    B_TILE = max(1, min(b_tile, B))
    Bp = _round_up(B, B_TILE)            # pad batch so the grid divides evenly
    Tp = _round_up(T0, SUB)              # pad time (causal => padded tail is inert)

    # One-time host-side padding: batch, time, and channel->128 lanes.
    xp = jnp.pad(x, ((0, Bp - B), (0, Tp - T0), (0, cin_p - cin)))

    max_pad = max((k - 1) * d for (k, d, _) in block_cfg)
    OFF = _round_up(max(max_pad, 1), SUB)        # 8-aligned causal halo rows

    kernel = functools.partial(_fused_tcn_kernel, block_cfg, B_TILE, Tp, T0 - 1, OFF)

    in_specs = [pl.BlockSpec((B_TILE, Tp, cin_p), lambda b: (b, 0, 0))]
    # Weights: constant index maps => VMEM-resident across all grid steps.
    in_specs += [pl.BlockSpec(w.shape, lambda b: (0, 0)) for w in flat_w]
    in_specs += [pl.BlockSpec(fc_w.shape, lambda b: (0, 0)),
                 pl.BlockSpec(fc_b.shape, lambda b: (0, 0))]

    # Advisory cost estimate so XLA can overlap surrounding ops with the kernel.
    m_total = Bp * Tp
    flops = 0
    for w in flat_w:
        if w.shape[0] > 1:                       # matmul weights (biases are (1, C))
            flops += 2 * m_total * int(w.shape[0]) * int(w.shape[1])
    flops += 2 * Bp * int(fc_w.shape[0]) * int(fc_w.shape[1])
    bytes_accessed = (
        xp.size * 4
        + sum(int(w.size) * w.dtype.itemsize for w in flat_w)
        + int(fc_w.size) * fc_w.dtype.itemsize + int(fc_b.size) * 4
        + Bp * out_p * 4
    )

    out = pl.pallas_call(
        kernel,
        out_shape=jax.ShapeDtypeStruct((Bp, out_p), jnp.float32),
        grid=(Bp // B_TILE,),
        in_specs=in_specs,
        out_specs=pl.BlockSpec((B_TILE, out_p), lambda b: (b, 0)),
        scratch_shapes=[pltpu.VMEM((B_TILE, OFF + Tp, c_max), jnp.float32)],
        compiler_params=pltpu.CompilerParams(
            dimension_semantics=("parallel",),   # batch tiles shard across TCs on v7x
            vmem_limit_bytes=32 * 1024 * 1024,
        ),
        cost_estimate=pl.CostEstimate(
            flops=flops, transcendentals=0, bytes_accessed=bytes_accessed),
    )(xp, *flat_w, fc_w, fc_b)

    return out[:B, :params["output_size"]]


# ----------------------------------------------------------------------------
# Parameter construction (deterministic, synthetic; mirrors the PyTorch module)
# ----------------------------------------------------------------------------
def _weight_norm_effective(v, g):
    """PyTorch weight_norm (dim=0): w = g * v / ||v||, norm over (Cin, K) per out ch."""
    norm = jnp.sqrt(jnp.sum(v * v, axis=(1, 2), keepdims=True))
    return g.reshape(-1, 1, 1) * v / norm


def _conv_w_to_kernel_layout(w_oik, cin_p, cout_p):
    """(Cout, Cin, K) -> (K, Cin, Cout) -> pad channels -> (K*Cin_p, Cout_p) bf16."""
    k = w_oik.shape[2]
    w = jnp.transpose(w_oik, (2, 1, 0))                                  # (K, Cin, Cout)
    w = jnp.pad(w, ((0, 0), (0, cin_p - w.shape[1]), (0, cout_p - w.shape[2])))
    return w.reshape(k * cin_p, cout_p).astype(MXU_DTYPE)


def _bias_to_kernel_layout(b, cout_p):
    return jnp.pad(b, (0, cout_p - b.shape[0])).reshape(1, cout_p).astype(jnp.float32)


def init_params(key, input_size, num_channels, kernel_size, output_size):
    flat, cfg = [], []
    widths = [input_size] + list(num_channels)
    for i, out_ch in enumerate(num_channels):
        in_ch = widths[i]
        dilation = 2 ** i
        cin_p = _round_up(in_ch, LANE)
        cout_p = _round_up(out_ch, LANE)
        key, k1, k2, k3, k4, k5, k6 = jax.random.split(key, 7)
        v1 = 0.01 * jax.random.normal(k1, (out_ch, in_ch, kernel_size), jnp.float32)
        g1 = jnp.sqrt(jnp.sum(v1 * v1, axis=(1, 2)))      # weight_norm init: g = ||v||
        v2 = 0.01 * jax.random.normal(k2, (out_ch, out_ch, kernel_size), jnp.float32)
        g2 = jnp.sqrt(jnp.sum(v2 * v2, axis=(1, 2)))
        b1 = 0.01 * jax.random.normal(k3, (out_ch,), jnp.float32)
        b2 = 0.01 * jax.random.normal(k4, (out_ch,), jnp.float32)
        flat += [
            _conv_w_to_kernel_layout(_weight_norm_effective(v1, g1), cin_p, cout_p),
            _bias_to_kernel_layout(b1, cout_p),
            _conv_w_to_kernel_layout(_weight_norm_effective(v2, g2), cout_p, cout_p),
            _bias_to_kernel_layout(b2, cout_p),
        ]
        has_ds = in_ch != out_ch
        if has_ds:  # 1x1 downsample conv (no weight_norm in the PyTorch reference)
            wd = 0.01 * jax.random.normal(k5, (out_ch, in_ch, 1), jnp.float32)
            bd = 0.01 * jax.random.normal(k6, (out_ch,), jnp.float32)
            flat += [_conv_w_to_kernel_layout(wd, cin_p, cout_p),
                     _bias_to_kernel_layout(bd, cout_p)]
        cfg.append((kernel_size, dilation, has_ds))

    key, kf1, kf2 = jax.random.split(key, 3)
    c_last = num_channels[-1]
    c_last_p = _round_up(c_last, LANE)
    out_p = _round_up(output_size, LANE)
    # NOTE: fc_w is stored (in, out), i.e. the transpose of nn.Linear's (out, in)
    # weight; transpose when loading a real IMUTCNModel checkpoint.
    fc_w = 0.05 * jax.random.normal(kf1, (c_last, output_size), jnp.float32)
    fc_b = 0.05 * jax.random.normal(kf2, (output_size,), jnp.float32)
    return {
        "flat_weights": flat,
        "block_cfg": tuple(cfg),
        "fc_w": jnp.pad(fc_w, ((0, c_last_p - c_last),
                               (0, out_p - output_size))).astype(MXU_DTYPE),
        "fc_b": _bias_to_kernel_layout(fc_b, out_p),
        "output_size": output_size,
        "cin_p": _round_up(input_size, LANE),
        "c_max_p": max(_round_up(w, LANE) for w in widths),
    }


# ----------------------------------------------------------------------------
if __name__ == "__main__":
    # Small IMU-like configuration.  B=16 with B_TILE=8 gives a 2-step grid
    # (both v7x TensorCores busy) and M = 8*16 = 128 rows per conv matmul.
    B, T = 16, 16
    input_size = 6
    num_channels = [8, 16]
    kernel_size = 3
    output_size = 5

    key = jax.random.PRNGKey(0)
    key, kx = jax.random.split(key)
    x = jax.random.normal(kx, (B, T, input_size), jnp.float32)

    params = init_params(key, input_size, num_channels, kernel_size, output_size)

    out = imu_tcn_forward(x, params, b_tile=8)
    out = jax.block_until_ready(out)
    assert out.shape == (B, output_size), out.shape
    print("KERNEL_OK")
</pallas_src>

<mosaic_0001>
module attributes {stable_mosaic.version = 11 : i64} {
  func.func @_fused_tcn_kernel(%arg0: i32, %arg1: memref<8x16x128xf32, #tpu.memory_space<vmem>>, %arg2: memref<384x128xbf16, #tpu.memory_space<vmem>>, %arg3: memref<1x128xf32, #tpu.memory_space<vmem>>, %arg4: memref<384x128xbf16, #tpu.memory_space<vmem>>, %arg5: memref<1x128xf32, #tpu.memory_space<vmem>>, %arg6: memref<128x128xbf16, #tpu.memory_space<vmem>>, %arg7: memref<1x128xf32, #tpu.memory_space<vmem>>, %arg8: memref<384x128xbf16, #tpu.memory_space<vmem>>, %arg9: memref<1x128xf32, #tpu.memory_space<vmem>>, %arg10: memref<384x128xbf16, #tpu.memory_space<vmem>>, %arg11: memref<1x128xf32, #tpu.memory_space<vmem>>, %arg12: memref<128x128xbf16, #tpu.memory_space<vmem>>, %arg13: memref<1x128xf32, #tpu.memory_space<vmem>>, %arg14: memref<128x128xbf16, #tpu.memory_space<vmem>>, %arg15: memref<1x128xf32, #tpu.memory_space<vmem>>, %arg16: memref<8x128xf32, #tpu.memory_space<vmem>>, %arg17: memref<8x24x128xf32, #tpu.memory_space<vmem>>) attributes {dimension_semantics = [#tpu.dimension_semantics<parallel>], iteration_bounds = array<i64: 2>, scalar_prefetch = 0 : i64, scratch_operands = 1 : i64, tpu.core_type = #tpu.core_type<tc>, window_params = [{transform_indices = @transform_0, window_bounds = array<i64: 8, 16, 128>}, {pipeline_mode = #tpu.pipeline_mode<synchronous>, transform_indices = @transform_1, window_bounds = array<i64: 384, 128>}, {pipeline_mode = #tpu.pipeline_mode<synchronous>, transform_indices = @transform_2, window_bounds = array<i64: 1, 128>}, {pipeline_mode = #tpu.pipeline_mode<synchronous>, transform_indices = @transform_3, window_bounds = array<i64: 384, 128>}, {pipeline_mode = #tpu.pipeline_mode<synchronous>, transform_indices = @transform_4, window_bounds = array<i64: 1, 128>}, {pipeline_mode = #tpu.pipeline_mode<synchronous>, transform_indices = @transform_5, window_bounds = array<i64: 128, 128>}, {pipeline_mode = #tpu.pipeline_mode<synchronous>, transform_indices = @transform_6, window_bounds = array<i64: 1, 128>}, {pipeline_mode = #tpu.pipeline_mode<synchronous>, transform_indices = @transform_7, window_bounds = array<i64: 384, 128>}, {pipeline_mode = #tpu.pipeline_mode<synchronous>, transform_indices = @transform_8, window_bounds = array<i64: 1, 128>}, {pipeline_mode = #tpu.pipeline_mode<synchronous>, transform_indices = @transform_9, window_bounds = array<i64: 384, 128>}, {pipeline_mode = #tpu.pipeline_mode<synchronous>, transform_indices = @transform_10, window_bounds = array<i64: 1, 128>}, {pipeline_mode = #tpu.pipeline_mode<synchronous>, transform_indices = @transform_11, window_bounds = array<i64: 128, 128>}, {pipeline_mode = #tpu.pipeline_mode<synchronous>, transform_indices = @transform_12, window_bounds = array<i64: 1, 128>}, {pipeline_mode = #tpu.pipeline_mode<synchronous>, transform_indices = @transform_13, window_bounds = array<i64: 128, 128>}, {pipeline_mode = #tpu.pipeline_mode<synchronous>, transform_indices = @transform_14, window_bounds = array<i64: 1, 128>}, {transform_indices = @transform_15, window_bounds = array<i64: 8, 128>}]} {
    %cst = arith.constant 0.000000e+00 : f32
    %0 = vector.broadcast %cst : f32 to vector<8x8x128xf32>
    %c0 = arith.constant 0 : index
    %c0_0 = arith.constant 0 : index
    %c0_1 = arith.constant 0 : index
    %1 = vector.load %arg17[%c0, %c0_0, %c0_1] : memref<8x24x128xf32, #tpu.memory_space<vmem>>, vector<8x8x128xf32>
    tpu.vector_store %arg17[%c0, %c0_0, %c0_1], %0 {strides = array<i32>} : memref<8x24x128xf32, #tpu.memory_space<vmem>>, vector<8x8x128xf32>,
    %c0_2 = arith.constant 0 : index
    %c0_3 = arith.constant 0 : index
    %c0_4 = arith.constant 0 : index
    %2 = vector.load %arg1[%c0_2, %c0_3, %c0_4] : memref<8x16x128xf32, #tpu.memory_space<vmem>>, vector<8x16x128xf32>
    %3 = vector.shape_cast %2 : vector<8x16x128xf32> to vector<128x128xf32>
    %4 = arith.truncf %3 : vector<128x128xf32> to vector<128x128xbf16>
    %c0_5 = arith.constant 0 : index
    %c0_6 = arith.constant 0 : index
    %5 = vector.load %arg6[%c0_5, %c0_6] : memref<128x128xbf16, #tpu.memory_space<vmem>>, vector<128x128xbf16>
    %cst_7 = arith.constant dense<0.000000e+00> : vector<128x128xf32>
    %6 = tpu.matmul %4, %5, %cst_7 {dimension_numbers = #tpu.dot_dimension_numbers<[1], [0], [0], [1], [0, 0, 1, 1], [], []>} : vector<128x128xbf16>, vector<128x128xbf16>, vector<128x128xf32> -> vector<128x128xf32>
    %c0_8 = arith.constant 0 : index
    %c0_9 = arith.constant 0 : index
    %7 = vector.load %arg7[%c0_8, %c0_9] : memref<1x128xf32, #tpu.memory_space<vmem>>, vector<1x128xf32>
    %8 = vector.broadcast %7 : vector<1x128xf32> to vector<128x128xf32>
    %9 = arith.addf %6, %8 : vector<128x128xf32>
    %10 = vector.shape_cast %3 : vector<128x128xf32> to vector<8x16x128xf32>
    %c0_10 = arith.constant 0 : index
    %c8 = arith.constant 8 : index
    %c0_11 = arith.constant 0 : index
    %11 = vector.load %arg17[%c0_10, %c8, %c0_11] : memref<8x24x128xf32, #tpu.memory_space<vmem>>, vector<8x16x128xf32>
    tpu.vector_store %arg17[%c0_10, %c8, %c0_11], %10 {strides = array<i32>} : memref<8x24x128xf32, #tpu.memory_space<vmem>>, vector<8x16x128xf32>,
    %c0_12 = arith.constant 0 : index
    %c6 = arith.constant 6 : index
    %c0_13 = arith.constant 0 : index
    %12 = vector.load %arg17[%c0_12, %c6, %c0_13] : memref<8x24x128xf32, #tpu.memory_space<vmem>>, vector<8x16x128xf32>
    %c0_14 = arith.constant 0 : index
    %c7 = arith.constant 7 : index
    %c0_15 = arith.constant 0 : index
    %13 = vector.load %arg17[%c0_14, %c7, %c0_15] : memref<8x24x128xf32, #tpu.memory_space<vmem>>, vector<8x16x128xf32>
    %c0_16 = arith.constant 0 : index
    %c8_17 = arith.constant 8 : index
    %c0_18 = arith.constant 0 : index
    %14 = vector.load %arg17[%c0_16, %c8_17, %c0_18] : memref<8x24x128xf32, #tpu.memory_space<vmem>>, vector<8x16x128xf32>
    %15 = tpu.concatenate %12, %13, %14 in 2 : vector<8x16x128xf32>, vector<8x16x128xf32>, vector<8x16x128xf32> -> vector<8x16x384xf32>
    %16 = vector.shape_cast %15 : vector<8x16x384xf32> to vector<128x384xf32>
    %17 = arith.truncf %16 : vector<128x384xf32> to vector<128x384xbf16>
    %c0_19 = arith.constant 0 : index
    %c0_20 = arith.constant 0 : index
    %18 = vector.load %arg2[%c0_19, %c0_20] : memref<384x128xbf16, #tpu.memory_space<vmem>>, vector<384x128xbf16>
    %cst_21 = arith.constant dense<0.000000e+00> : vector<128x128xf32>
    %19 = tpu.matmul %17, %18, %cst_21 {dimension_numbers = #tpu.dot_dimension_numbers<[1], [0], [0], [1], [0, 0, 1, 1], [], []>} : vector<128x384xbf16>, vector<384x128xbf16>, vector<128x128xf32> -> vector<128x128xf32>
    %c0_22 = arith.constant 0 : index
    %c0_23 = arith.constant 0 : index
    %20 = vector.load %arg3[%c0_22, %c0_23] : memref<1x128xf32, #tpu.memory_space<vmem>>, vector<1x128xf32>
    %21 = vector.broadcast %20 : vector<1x128xf32> to vector<128x128xf32>
    %22 = arith.addf %19, %21 : vector<128x128xf32>
    %cst_24 = arith.constant 0.000000e+00 : f32
    %23 = vector.broadcast %cst_24 : f32 to vector<128x128xf32>
    %24 = arith.maximumf %22, %23 : vector<128x128xf32>
    %25 = vector.shape_cast %24 : vector<128x128xf32> to vector<8x16x128xf32>
    %c0_25 = arith.constant 0 : index
    %c8_26 = arith.constant 8 : index
    %c0_27 = arith.constant 0 : index
    %26 = vector.load %arg17[%c0_25, %c8_26, %c0_27] : memref<8x24x128xf32, #tpu.memory_space<vmem>>, vector<8x16x128xf32>
    tpu.vector_store %arg17[%c0_25, %c8_26, %c0_27], %25 {strides = array<i32>} : memref<8x24x128xf32, #tpu.memory_space<vmem>>, vector<8x16x128xf32>,
    %c0_28 = arith.constant 0 : index
    %c6_29 = arith.constant 6 : index
    %c0_30 = arith.constant 0 : index
    %27 = vector.load %arg17[%c0_28, %c6_29, %c0_30] : memref<8x24x128xf32, #tpu.memory_space<vmem>>, vector<8x16x128xf32>
    %c0_31 = arith.constant 0 : index
    %c7_32 = arith.constant 7 : index
    %c0_33 = arith.constant 0 : index
    %28 = vector.load %arg17[%c0_31, %c7_32, %c0_33] : memref<8x24x128xf32, #tpu.memory_space<vmem>>, vector<8x16x128xf32>
    %c0_34 = arith.constant 0 : index
    %c8_35 = arith.constant 8 : index
    %c0_36 = arith.constant 0 : index
    %29 = vector.load %arg17[%c0_34, %c8_35, %c0_36] : memref<8x24x128xf32, #tpu.memory_space<vmem>>, vector<8x16x128xf32>
    %30 = tpu.concatenate %27, %28, %29 in 2 : vector<8x16x128xf32>, vector<8x16x128xf32>, vector<8x16x128xf32> -> vector<8x16x384xf32>
    %31 = vector.shape_cast %30 : vector<8x16x384xf32> to vector<128x384xf32>
    %32 = arith.truncf %31 : vector<128x384xf32> to vector<128x384xbf16>
    %c0_37 = arith.constant 0 : index
    %c0_38 = arith.constant 0 : index
    %33 = vector.load %arg4[%c0_37, %c0_38] : memref<384x128xbf16, #tpu.memory_space<vmem>>, vector<384x128xbf16>
    %cst_39 = arith.constant dense<0.000000e+00> : vector<128x128xf32>
    %34 = tpu.matmul %32, %33, %cst_39 {dimension_numbers = #tpu.dot_dimension_numbers<[1], [0], [0], [1], [0, 0, 1, 1], [], []>} : vector<128x384xbf16>, vector<384x128xbf16>, vector<128x128xf32> -> vector<128x128xf32>
    %c0_40 = arith.constant 0 : index
    %c0_41 = arith.constant 0 : index
    %35 = vector.load %arg5[%c0_40, %c0_41] : memref<1x128xf32, #tpu.memory_space<vmem>>, vector<1x128xf32>
    %36 = vector.broadcast %35 : vector<1x128xf32> to vector<128x128xf32>
    %37 = arith.addf %34, %36 : vector<128x128xf32>
    %cst_42 = arith.constant 0.000000e+00 : f32
    %38 = vector.broadcast %cst_42 : f32 to vector<128x128xf32>
    %39 = arith.maximumf %37, %38 : vector<128x128xf32>
    %40 = arith.addf %39, %9 : vector<128x128xf32>
    %cst_43 = arith.constant 0.000000e+00 : f32
    %41 = vector.broadcast %cst_43 : f32 to vector<128x128xf32>
    %42 = arith.maximumf %40, %41 : vector<128x128xf32>
    %43 = arith.truncf %42 : vector<128x128xf32> to vector<128x128xbf16>
    %c0_44 = arith.constant 0 : index
    %c0_45 = arith.constant 0 : index
    %44 = vector.load %arg12[%c0_44, %c0_45] : memref<128x128xbf16, #tpu.memory_space<vmem>>, vector<128x128xbf16>
    %cst_46 = arith.constant dense<0.000000e+00> : vector<128x128xf32>
    %45 = tpu.matmul %43, %44, %cst_46 {dimension_numbers = #tpu.dot_dimension_numbers<[1], [0], [0], [1], [0, 0, 1, 1], [], []>} : vector<128x128xbf16>, vector<128x128xbf16>, vector<128x128xf32> -> vector<128x128xf32>
    %c0_47 = arith.constant 0 : index
    %c0_48 = arith.constant 0 : index
    %46 = vector.load %arg13[%c0_47, %c0_48] : memref<1x128xf32, #tpu.memory_space<vmem>>, vector<1x128xf32>
    %47 = vector.broadcast %46 : vector<1x128xf32> to vector<128x128xf32>
    %48 = arith.addf %45, %47 : vector<128x128xf32>
    %49 = vector.shape_cast %42 : vector<128x128xf32> to vector<8x16x128xf32>
    %c0_49 = arith.constant 0 : index
    %c8_50 = arith.constant 8 : index
    %c0_51 = arith.constant 0 : index
    %50 = vector.load %arg17[%c0_49, %c8_50, %c0_51] : memref<8x24x128xf32, #tpu.memory_space<vmem>>, vector<8x16x128xf32>
    tpu.vector_store %arg17[%c0_49, %c8_50, %c0_51], %49 {strides = array<i32>} : memref<8x24x128xf32, #tpu.memory_space<vmem>>, vector<8x16x128xf32>,
    %c0_52 = arith.constant 0 : index
    %c4 = arith.constant 4 : index
    %c0_53 = arith.constant 0 : index
    %51 = vector.load %arg17[%c0_52, %c4, %c0_53] : memref<8x24x128xf32, #tpu.memory_space<vmem>>, vector<8x16x128xf32>
    %c0_54 = arith.constant 0 : index
    %c6_55 = arith.constant 6 : index
    %c0_56 = arith.constant 0 : index
    %52 = vector.load %arg17[%c0_54, %c6_55, %c0_56] : memref<8x24x128xf32, #tpu.memory_space<vmem>>, vector<8x16x128xf32>
    %c0_57 = arith.constant 0 : index
    %c8_58 = arith.constant 8 : index
    %c0_59 = arith.constant 0 : index
    %53 = vector.load %arg17[%c0_57, %c8_58, %c0_59] : memref<8x24x128xf32, #tpu.memory_space<vmem>>, vector<8x16x128xf32>
    %54 = tpu.concatenate %51, %52, %53 in 2 : vector<8x16x128xf32>, vector<8x16x128xf32>, vector<8x16x128xf32> -> vector<8x16x384xf32>
    %55 = vector.shape_cast %54 : vector<8x16x384xf32> to vector<128x384xf32>
    %56 = arith.truncf %55 : vector<128x384xf32> to vector<128x384xbf16>
    %c0_60 = arith.constant 0 : index
    %c0_61 = arith.constant 0 : index
    %57 = vector.load %arg8[%c0_60, %c0_61] : memref<384x128xbf16, #tpu.memory_space<vmem>>, vector<384x128xbf16>
    %cst_62 = arith.constant dense<0.000000e+00> : vector<128x128xf32>
    %58 = tpu.matmul %56, %57, %cst_62 {dimension_numbers = #tpu.dot_dimension_numbers<[1], [0], [0], [1], [0, 0, 1, 1], [], []>} : vector<128x384xbf16>, vector<384x128xbf16>, vector<128x128xf32> -> vector<128x128xf32>
    %c0_63 = arith.constant 0 : index
    %c0_64 = arith.constant 0 : index
    %59 = vector.load %arg9[%c0_63, %c0_64] : memref<1x128xf32, #tpu.memory_space<vmem>>, vector<1x128xf32>
    %60 = vector.broadcast %59 : vector<1x128xf32> to vector<128x128xf32>
    %61 = arith.addf %58, %60 : vector<128x128xf32>
    %cst_65 = arith.constant 0.000000e+00 : f32
    %62 = vector.broadcast %cst_65 : f32 to vector<128x128xf32>
    %63 = arith.maximumf %61, %62 : vector<128x128xf32>
    %64 = vector.shape_cast %63 : vector<128x128xf32> to vector<8x16x128xf32>
    %c0_66 = arith.constant 0 : index
    %c8_67 = arith.constant 8 : index
    %c0_68 = arith.constant 0 : index
    %65 = vector.load %arg17[%c0_66, %c8_67, %c0_68] : memref<8x24x128xf32, #tpu.memory_space<vmem>>, vector<8x16x128xf32>
    tpu.vector_store %arg17[%c0_66, %c8_67, %c0_68], %64 {strides = array<i32>} : memref<8x24x128xf32, #tpu.memory_space<vmem>>, vector<8x16x128xf32>,
    %c0_69 = arith.constant 0 : index
    %c4_70 = arith.constant 4 : index
    %c0_71 = arith.constant 0 : index
    %66 = vector.load %arg17[%c0_69, %c4_70, %c0_71] : memref<8x24x128xf32, #tpu.memory_space<vmem>>, vector<8x16x128xf32>
    %c0_72 = arith.constant 0 : index
    %c6_73 = arith.constant 6 : index
    %c0_74 = arith.constant 0 : index
    %67 = vector.load %arg17[%c0_72, %c6_73, %c0_74] : memref<8x24x128xf32, #tpu.memory_space<vmem>>, vector<8x16x128xf32>
    %c0_75 = arith.constant 0 : index
    %c8_76 = arith.constant 8 : index
    %c0_77 = arith.constant 0 : index
    %68 = vector.load %arg17[%c0_75, %c8_76, %c0_77] : memref<8x24x128xf32, #tpu.memory_space<vmem>>, vector<8x16x128xf32>
    %69 = tpu.concatenate %66, %67, %68 in 2 : vector<8x16x128xf32>, vector<8x16x128xf32>, vector<8x16x128xf32> -> vector<8x16x384xf32>
    %70 = vector.shape_cast %69 : vector<8x16x384xf32> to vector<128x384xf32>
    %71 = arith.truncf %70 : vector<128x384xf32> to vector<128x384xbf16>
    %c0_78 = arith.constant 0 : index
    %c0_79 = arith.constant 0 : index
    %72 = vector.load %arg10[%c0_78, %c0_79] : memref<384x128xbf16, #tpu.memory_space<vmem>>, vector<384x128xbf16>
    %cst_80 = arith.constant dense<0.000000e+00> : vector<128x128xf32>
    %73 = tpu.matmul %71, %72, %cst_80 {dimension_numbers = #tpu.dot_dimension_numbers<[1], [0], [0], [1], [0, 0, 1, 1], [], []>} : vector<128x384xbf16>, vector<384x128xbf16>, vector<128x128xf32> -> vector<128x128xf32>
    %c0_81 = arith.constant 0 : index
    %c0_82 = arith.constant 0 : index
    %74 = vector.load %arg11[%c0_81, %c0_82] : memref<1x128xf32, #tpu.memory_space<vmem>>, vector<1x128xf32>
    %75 = vector.broadcast %74 : vector<1x128xf32> to vector<128x128xf32>
    %76 = arith.addf %73, %75 : vector<128x128xf32>
    %cst_83 = arith.constant 0.000000e+00 : f32
    %77 = vector.broadcast %cst_83 : f32 to vector<128x128xf32>
    %78 = arith.maximumf %76, %77 : vector<128x128xf32>
    %79 = arith.addf %78, %48 : vector<128x128xf32>
    %cst_84 = arith.constant 0.000000e+00 : f32
    %80 = vector.broadcast %cst_84 : f32 to vector<128x128xf32>
    %81 = arith.maximumf %79, %80 : vector<128x128xf32>
    %82 = tpu.iota {dimensions = array<i32: 0>} : vector<8x128xi32>
    %83 = tpu.iota {dimensions = array<i32: 1>} : vector<8x128xi32>
    %c16_i32 = arith.constant 16 : i32
    %84 = vector.broadcast %c16_i32 : i32 to vector<8x128xi32>
    %85 = arith.muli %82, %84 : vector<8x128xi32>
    %c15_i32 = arith.constant 15 : i32
    %86 = vector.broadcast %c15_i32 : i32 to vector<8x128xi32>
    %87 = arith.addi %85, %86 : vector<8x128xi32>
    %88 = arith.cmpi eq, %83, %87 : vector<8x128xi32>
    %89 = arith.extui %88 : vector<8x128xi1> to vector<8x128xi32>
    %90 = arith.sitofp %89 : vector<8x128xi32> to vector<8x128xf32>
    %cst_85 = arith.constant dense<0.000000e+00> : vector<8x128xf32>
    %91 = tpu.matmul %90, %81, %cst_85 {dimension_numbers = #tpu.dot_dimension_numbers<[1], [0], [0], [1], [0, 0, 1, 1], [], []>} : vector<8x128xf32>, vector<128x128xf32>, vector<8x128xf32> -> vector<8x128xf32>
    %92 = arith.truncf %91 : vector<8x128xf32> to vector<8x128xbf16>
    %c0_86 = arith.constant 0 : index
    %c0_87 = arith.constant 0 : index
    %93 = vector.load %arg14[%c0_86, %c0_87] : memref<128x128xbf16, #tpu.memory_space<vmem>>, vector<128x128xbf16>
    %cst_88 = arith.constant dense<0.000000e+00> : vector<8x128xf32>
    %94 = tpu.matmul %92, %93, %cst_88 {dimension_numbers = #tpu.dot_dimension_numbers<[1], [0], [0], [1], [0, 0, 1, 1], [], []>} : vector<8x128xbf16>, vector<128x128xbf16>, vector<8x128xf32> -> vector<8x128xf32>
    %c0_89 = arith.constant 0 : index
    %c0_90 = arith.constant 0 : index
    %95 = vector.load %arg15[%c0_89, %c0_90] : memref<1x128xf32, #tpu.memory_space<vmem>>, vector<1x128xf32>
    %96 = vector.broadcast %95 : vector<1x128xf32> to vector<8x128xf32>
    %97 = arith.addf %94, %96 : vector<8x128xf32>
    %c0_91 = arith.constant 0 : index
    %c0_92 = arith.constant 0 : index
    %98 = vector.load %arg16[%c0_91, %c0_92] : memref<8x128xf32, #tpu.memory_space<vmem>>, vector<8x128xf32>
    tpu.vector_store %arg16[%c0_91, %c0_92], %97 {strides = array<i32>} : memref<8x128xf32, #tpu.memory_space<vmem>>, vector<8x128xf32>,
    return
  }
  func.func @transform_0(%arg0: i32) -> (i32, i32, i32) {
    %c0_i32 = arith.constant 0 : i32
    %c0_i32_0 = arith.constant 0 : i32
    %c0_i32_1 = arith.constant 0 : i32
    return %arg0, %c0_i32, %c0_i32_0 : i32, i32, i32
  }
  func.func @transform_1(%arg0: i32) -> (i32, i32) {
    %c0_i32 = arith.constant 0 : i32
    %c0_i32_0 = arith.constant 0 : i32
    %c0_i32_1 = arith.constant 0 : i32
    return %c0_i32, %c0_i32_0 : i32, i32
  }
  func.func @transform_2(%arg0: i32) -> (i32, i32) {
    %c0_i32 = arith.constant 0 : i32
    %c0_i32_0 = arith.constant 0 : i32
    %c0_i32_1 = arith.constant 0 : i32
    return %c0_i32, %c0_i32_0 : i32, i32
  }
  func.func @transform_3(%arg0: i32) -> (i32, i32) {
    %c0_i32 = arith.constant 0 : i32
    %c0_i32_0 = arith.constant 0 : i32
    %c0_i32_1 = arith.constant 0 : i32
    return %c0_i32, %c0_i32_0 : i32, i32
  }
  func.func @transform_4(%arg0: i32) -> (i32, i32) {
    %c0_i32 = arith.constant 0 : i32
    %c0_i32_0 = arith.constant 0 : i32
    %c0_i32_1 = arith.constant 0 : i32
    return %c0_i32, %c0_i32_0 : i32, i32
  }
  func.func @transform_5(%arg0: i32) -> (i32, i32) {
    %c0_i32 = arith.constant 0 : i32
    %c0_i32_0 = arith.constant 0 : i32
    %c0_i32_1 = arith.constant 0 : i32
    return %c0_i32, %c0_i32_0 : i32, i32
  }
  func.func @transform_6(%arg0: i32) -> (i32, i32) {
    %c0_i32 = arith.constant 0 : i32
    %c0_i32_0 = arith.constant 0 : i32
    %c0_i32_1 = arith.constant 0 : i32
    return %c0_i32, %c0_i32_0 : i32, i32
  }
  func.func @transform_7(%arg0: i32) -> (i32, i32) {
    %c0_i32 = arith.constant 0 : i32
    %c0_i32_0 = arith.constant 0 : i32
    %c0_i32_1 = arith.constant 0 : i32
    return %c0_i32, %c0_i32_0 : i32, i32
  }
  func.func @transform_8(%arg0: i32) -> (i32, i32) {
    %c0_i32 = arith.constant 0 : i32
    %c0_i32_0 = arith.constant 0 : i32
    %c0_i32_1 = arith.constant 0 : i32
    return %c0_i32, %c0_i32_0 : i32, i32
  }
  func.func @transform_9(%arg0: i32) -> (i32, i32) {
    %c0_i32 = arith.constant 0 : i32
    %c0_i32_0 = arith.constant 0 : i32
    %c0_i32_1 = arith.constant 0 : i32
    return %c0_i32, %c0_i32_0 : i32, i32
  }
  func.func @transform_10(%arg0: i32) -> (i32, i32) {
    %c0_i32 = arith.constant 0 : i32
    %c0_i32_0 = arith.constant 0 : i32
    %c0_i32_1 = arith.constant 0 : i32
    return %c0_i32, %c0_i32_0 : i32, i32
  }
  func.func @transform_11(%arg0: i32) -> (i32, i32) {
    %c0_i32 = arith.constant 0 : i32
    %c0_i32_0 = arith.constant 0 : i32
    %c0_i32_1 = arith.constant 0 : i32
    return %c0_i32, %c0_i32_0 : i32, i32
  }
  func.func @transform_12(%arg0: i32) -> (i32, i32) {
    %c0_i32 = arith.constant 0 : i32
    %c0_i32_0 = arith.constant 0 : i32
    %c0_i32_1 = arith.constant 0 : i32
    return %c0_i32, %c0_i32_0 : i32, i32
  }
  func.func @transform_13(%arg0: i32) -> (i32, i32) {
    %c0_i32 = arith.constant 0 : i32
    %c0_i32_0 = arith.constant 0 : i32
    %c0_i32_1 = arith.constant 0 : i32
    return %c0_i32, %c0_i32_0 : i32, i32
  }
  func.func @transform_14(%arg0: i32) -> (i32, i32) {
    %c0_i32 = arith.constant 0 : i32
    %c0_i32_0 = arith.constant 0 : i32
    %c0_i32_1 = arith.constant 0 : i32
    return %c0_i32, %c0_i32_0 : i32, i32
  }
  func.func @transform_15(%arg0: i32) -> (i32, i32) {
    %c0_i32 = arith.constant 0 : i32
    %c0_i32_0 = arith.constant 0 : i32
    return %arg0, %c0_i32 : i32, i32
  }
}

</mosaic_0001>

<llo_original>
// kernel: tpu_custom_call.1
$region0: #{tpu_custom_call.1}
  #allocation0 [shape = 'u32[]', space=smem, size = 0x4, offset = 0x4, fixed_abs, tag = 'smem constant byte address 0x4 - core index']
  #allocation1 [shape = 'u32[144,128]{1,0:T(1,128)}', space=vmem, size = 0x12000, scoped, tag = 'internal scratch']
  #allocation2 [shape = 'f32[8,24,128]{2,1,0:T(8,128)}', space=vmem, size = 0x18000, scoped, tag = 'scratch operand']
  %s0 = inlined_call_operand.hbm [shape: f32[16,16,128], index: 0, kind: input, shape index: {}]
  %s1 = inlined_call_operand.hbm [shape: bf16[384,128], index: 1, kind: input, shape index: {}]
  %s2 = inlined_call_operand.vmem [shape: f32[1,128], index: 2, kind: input, shape index: {}]
  %s3 = inlined_call_operand.hbm [shape: bf16[384,128], index: 3, kind: input, shape index: {}]
  %s4 = inlined_call_operand.vmem [shape: f32[1,128], index: 4, kind: input, shape index: {}]
  %s5 = inlined_call_operand.hbm [shape: bf16[128,128], index: 5, kind: input, shape index: {}]
  %s6 = inlined_call_operand.vmem [shape: f32[1,128], index: 6, kind: input, shape index: {}]
  %s7 = inlined_call_operand.hbm [shape: bf16[384,128], index: 7, kind: input, shape index: {}]
  %s8 = inlined_call_operand.vmem [shape: f32[1,128], index: 8, kind: input, shape index: {}]
  %s9 = inlined_call_operand.hbm [shape: bf16[384,128], index: 9, kind: input, shape index: {}]
  %s10 = inlined_call_operand.vmem [shape: f32[1,128], index: 10, kind: input, shape index: {}]
  %s11 = inlined_call_operand.hbm [shape: bf16[128,128], index: 11, kind: input, shape index: {}]
  %s12 = inlined_call_operand.vmem [shape: f32[1,128], index: 12, kind: input, shape index: {}]
  %s13 = inlined_call_operand.hbm [shape: bf16[128,128], index: 13, kind: input, shape index: {}]
  %s14 = inlined_call_operand.vmem [shape: f32[1,128], index: 14, kind: input, shape index: {}]
  %s15 = inlined_call_operand.hbm [shape: f32[16,128], index: 15, kind: output, shape index: {}]
  %s16 = sld [smem:[#allocation0]]
  $region125: #{tpu_custom_call.1} parent=0
    _
  %s18 = ssub.s32 1, %s16
  %s19 = scalar_select 0, %s18, %s16
  $region1: #{tpu_custom_call.1} parent=0
    #allocation3 [shape = 'u8[131072]{0}', space=vmem, size = 0x20000, scoped, tag = 'input window, operand 0']
    #allocation4 [shape = 's32[2]{0}', space=sflag, size = 0x8, scoped, tag = 'scoped memory for tpu_custom_call.1']
    #allocation5 [shape = 's32[2]{0}', space=sflag, size = 0x8, scoped, tag = 'scoped memory for tpu_custom_call.1']
    #allocation6 [shape = 'u8[98304]{0}', space=vmem, size = 0x18000, scoped, tag = 'input window, operand 1, single buffered']
    #allocation7 [shape = 's32[1]{0}', space=sflag, size = 0x4, scoped, tag = 'scoped memory for tpu_custom_call.1']
    #allocation8 [shape = 'u8[98304]{0}', space=vmem, size = 0x18000, scoped, tag = 'input window, operand 3, single buffered']
    #allocation9 [shape = 'u8[32768]{0}', space=vmem, size = 0x8000, scoped, tag = 'input window, operand 5, single buffered']
    #allocation10 [shape = 's32[1]{0}', space=sflag, size = 0x4, scoped, tag = 'scoped memory for tpu_custom_call.1']
    #allocation11 [shape = 'u8[98304]{0}', space=vmem, size = 0x18000, scoped, tag = 'input window, operand 7, single buffered']
    #allocation12 [shape = 'u8[98304]{0}', space=vmem, size = 0x18000, scoped, tag = 'input window, operand 9, single buffered']
    #allocation13 [shape = 's32[1]{0}', space=sflag, size = 0x4, scoped, tag = 'scoped memory for tpu_custom_call.1']
    #allocation14 [shape = 'u8[32768]{0}', space=vmem, size = 0x8000, scoped, tag = 'input window, operand 11, single buffered']
    #allocation15 [shape = 'u8[32768]{0}', space=vmem, size = 0x8000, scoped, tag = 'input window, operand 13, single buffered']
    #allocation16 [shape = 's32[1]{0}', space=sflag, size = 0x4, scoped, tag = 'scoped memory for tpu_custom_call.1']
    #allocation17 [shape = 'u8[8192]{0}', space=vmem, size = 0x2000, scoped, tag = 'output window, operand 0']
    %20 = vsyncpa [#allocation4], 0
    %s21 = scalar_lea.sflag [#allocation4], 1
    %22 = vsyncpa %s21, 0
    %23 = vsyncpa [#allocation7], 0
    %24 = vsyncpa [#allocation10], 0
    %25 = vsyncpa [#allocation13], 0
    %26 = vsyncpa [#allocation16], 0
    %27 = vsyncpa [#allocation5], 0
    %s28 = scalar_lea.sflag [#allocation5], 1
    %29 = vsyncpa %s28, 0
    loop: start=0, step=1, limit=4
    $region2: #{tpu_custom_call.1} parent=1 // loop_pre_header
      _
    $region3: #{tpu_custom_call.1} parent=1 // loop_header
      %s31 = sphi 0, %s35
      %p32 = scmp.ge.s32.totalorder %s31, 4
      %s41 = sphi 0, %s43
      %s44 = sphi 0, %s41
      %s45 = sphi 0, %s44
      %s61 = sphi 0, %s45
      %s65 = sphi 0, %s65
      %s67 = sphi 0, %s65
      %s68 = sphi 0, %s67
      %s82 = sphi 0, %s68
      %s86 = sphi 0, %s86
      %s88 = sphi 0, %s86
      %s89 = sphi 0, %s88
      %s103 = sphi 0, %s89
      %s107 = sphi 0, %s107
      %s109 = sphi 0, %s107
      %s110 = sphi 0, %s109
      %s124 = sphi 0, %s110
      %s128 = sphi 0, %s128
      %s130 = sphi 0, %s128
      %s131 = sphi 0, %s130
      %s145 = sphi 0, %s131
      %s149 = sphi 0, %s149
      %s151 = sphi 0, %s149
      %s152 = sphi 0, %s151
      %s166 = sphi 0, %s152
      %s170 = sphi 0, %s170
      %s172 = sphi 0, %s170
      %s173 = sphi 0, %s172
      %s187 = sphi 0, %s173
      %s191 = sphi 0, %s191
      %s193 = sphi 0, %s191
      %s194 = sphi 0, %s193
      %s208 = sphi 0, %s194
      %s212 = sphi 0, %s212
      %s214 = sphi 0, %s212
      %s215 = sphi 0, %s214
      %s229 = sphi 0, %s215
      %s233 = sphi 0, %s233
      %s235 = sphi 0, %s233
      %s236 = sphi 0, %s235
      %s250 = sphi 0, %s236
      %s254 = sphi 0, %s254
      %s256 = sphi 0, %s254
      %s257 = sphi 0, %s256
      %s271 = sphi 0, %s257
      %s275 = sphi 0, %s275
      %s277 = sphi 0, %s275
      %s278 = sphi 0, %s277
      %s292 = sphi 0, %s278
      %s296 = sphi 0, %s296
      %s298 = sphi 0, %s296
      %s299 = sphi 0, %s298
      %s313 = sphi 0, %s299
      %s317 = sphi 0, %s317
      %s319 = sphi 0, %s317
      %s320 = sphi 0, %s319
      %s334 = sphi 0, %s320
      %s338 = sphi 0, %s338
      %s340 = sphi 0, %s338
      %s341 = sphi 0, %s340
      %s355 = sphi 0, %s341
      %s361 = sphi 0, %s363
      %s364 = sphi 0, %s361
      %s365 = sphi 0, %s364
      %s381 = sphi 0, %s365
    $region4: #{tpu_custom_call.1} parent=1 // loop_header_branch
      %34 = sbr.rel (%p32) target = $region8
    $region5: #{tpu_custom_call.1} parent=1 // loop_body
      %s36 = ssub.s32 %s31, 1
      %s37 = ssub.s32 %s31, 2
      %s38 = sadd.s32 %s31, 1
      %s39 = ssub.s32 %s31, %s38
      %p40 = scmp.eq.s32.totalorder %s39, 0
      %s42 = sadd.s32 %s41, 1
      %s43 = scalar_select %p40, %s41, %s42
      %p46 = pneg %p40
      %p47 = scmp.eq.s32.totalorder %s31, 1
      %p48 = por %p46, %p47
      %p49 = scmp.ne.s32.totalorder %s41, %s44
      %p50 = scmp.eq.s32.totalorder %s31, 0
      %p51 = por %p49, %p50
      %p52 = scmp.ne.s32.totalorder %s41, %s44
      %p53 = scmp.eq.s32.totalorder %s36, 1
      %p54 = por %p52, %p53
      %p55 = scmp.ne.s32.totalorder %s44, %s45
      %p56 = scmp.eq.s32.totalorder %s36, 0
      %p57 = por %p55, %p56
      %p58 = scmp.ne.s32.totalorder %s44, %s45
      %p59 = scmp.eq.s32.totalorder %s37, 1
      %p60 = por %p58, %p59
      %p62 = scmp.ne.s32.totalorder %s45, %s61
      %p63 = scmp.eq.s32.totalorder %s37, 0
      %p64 = por %p62, %p63
      %s66 = sadd.s32 %s65, 1
      %p69 = scmp.eq.s32.totalorder %s31, 1
      %p70 = scmp.ne.s32.totalorder %s65, %s67
      %p71 = scmp.eq.s32.totalorder %s31, 0
      %p72 = por %p70, %p71
      %p73 = scmp.ne.s32.totalorder %s65, %s67
      %p74 = scmp.eq.s32.totalorder %s36, 1
      %p75 = por %p73, %p74
      %p76 = scmp.ne.s32.totalorder %s67, %s68
      %p77 = scmp.eq.s32.totalorder %s36, 0
      %p78 = por %p76, %p77
      %p79 = scmp.ne.s32.totalorder %s67, %s68
      %p80 = scmp.eq.s32.totalorder %s37, 1
      %p81 = por %p79, %p80
      %p83 = scmp.ne.s32.totalorder %s68, %s82
      %p84 = scmp.eq.s32.totalorder %s37, 0
      %p85 = por %p83, %p84
      %s87 = sadd.s32 %s86, 1
      %p90 = scmp.eq.s32.totalorder %s31, 1
      %p91 = scmp.ne.s32.totalorder %s86, %s88
      %p92 = scmp.eq.s32.totalorder %s31, 0
      %p93 = por %p91, %p92
      %p94 = scmp.ne.s32.totalorder %s86, %s88
      %p95 = scmp.eq.s32.totalorder %s36, 1
      %p96 = por %p94, %p95
      %p97 = scmp.ne.s32.totalorder %s88, %s89
      %p98 = scmp.eq.s32.totalorder %s36, 0
      %p99 = por %p97, %p98
      %p100 = scmp.ne.s32.totalorder %s88, %s89
      %p101 = scmp.eq.s32.totalorder %s37, 1
      %p102 = por %p100, %p101
      %p104 = scmp.ne.s32.totalorder %s89, %s103
      %p105 = scmp.eq.s32.totalorder %s37, 0
      %p106 = por %p104, %p105
      %s108 = sadd.s32 %s107, 1
      %p111 = scmp.eq.s32.totalorder %s31, 1
      %p112 = scmp.ne.s32.totalorder %s107, %s109
      %p113 = scmp.eq.s32.totalorder %s31, 0
      %p114 = por %p112, %p113
      %p115 = scmp.ne.s32.totalorder %s107, %s109
      %p116 = scmp.eq.s32.totalorder %s36, 1
      %p117 = por %p115, %p116
      %p118 = scmp.ne.s32.totalorder %s109, %s110
      %p119 = scmp.eq.s32.totalorder %s36, 0
      %p120 = por %p118, %p119
      %p121 = scmp.ne.s32.totalorder %s109, %s110
      %p122 = scmp.eq.s32.totalorder %s37, 1
      %p123 = por %p121, %p122
      %p125 = scmp.ne.s32.totalorder %s110, %s124
      %p126 = scmp.eq.s32.totalorder %s37, 0
      %p127 = por %p125, %p126
      %s129 = sadd.s32 %s128, 1
      %p132 = scmp.eq.s32.totalorder %s31, 1
      %p133 = scmp.ne.s32.totalorder %s128, %s130
      %p134 = scmp.eq.s32.totalorder %s31, 0
      %p135 = por %p133, %p134
      %p136 = scmp.ne.s32.totalorder %s128, %s130
      %p137 = scmp.eq.s32.totalorder %s36, 1
      %p138 = por %p136, %p137
      %p139 = scmp.ne.s32.totalorder %s130, %s131
      %p140 = scmp.eq.s32.totalorder %s36, 0
      %p141 = por %p139, %p140
      %p142 = scmp.ne.s32.totalorder %s130, %s131
      %p143 = scmp.eq.s32.totalorder %s37, 1
      %p144 = por %p142, %p143
      %p146 = scmp.ne.s32.totalorder %s131, %s145
      %p147 = scmp.eq.s32.totalorder %s37, 0
      %p148 = por %p146, %p147
      %s150 = sadd.s32 %s149, 1
      %p153 = scmp.eq.s32.totalorder %s31, 1
      %p154 = scmp.ne.s32.totalorder %s149, %s151
      %p155 = scmp.eq.s32.totalorder %s31, 0
      %p156 = por %p154, %p155
      %p157 = scmp.ne.s32.totalorder %s149, %s151
      %p158 = scmp.eq.s32.totalorder %s36, 1
      %p159 = por %p157, %p158
      %p160 = scmp.ne.s32.totalorder %s151, %s152
      %p161 = scmp.eq.s32.totalorder %s36, 0
      %p162 = por %p160, %p161
      %p163 = scmp.ne.s32.totalorder %s151, %s152
      %p164 = scmp.eq.s32.totalorder %s37, 1
      %p165 = por %p163, %p164
      %p167 = scmp.ne.s32.totalorder %s152, %s166
      %p168 = scmp.eq.s32.totalorder %s37, 0
      %p169 = por %p167, %p168
      %s171 = sadd.s32 %s170, 1
      %p174 = scmp.eq.s32.totalorder %s31, 1
      %p175 = scmp.ne.s32.totalorder %s170, %s172
      %p176 = scmp.eq.s32.totalorder %s31, 0
      %p177 = por %p175, %p176
      %p178 = scmp.ne.s32.totalorder %s170, %s172
      %p179 = scmp.eq.s32.totalorder %s36, 1
      %p180 = por %p178, %p179
      %p181 = scmp.ne.s32.totalorder %s172, %s173
      %p182 = scmp.eq.s32.totalorder %s36, 0
      %p183 = por %p181, %p182
      %p184 = scmp.ne.s32.totalorder %s172, %s173
      %p185 = scmp.eq.s32.totalorder %s37, 1
      %p186 = por %p184, %p185
      %p188 = scmp.ne.s32.totalorder %s173, %s187
      %p189 = scmp.eq.s32.totalorder %s37, 0
      %p190 = por %p188, %p189
      %s192 = sadd.s32 %s191, 1
      %p195 = scmp.eq.s32.totalorder %s31, 1
      %p196 = scmp.ne.s32.totalorder %s191, %s193
      %p197 = scmp.eq.s32.totalorder %s31, 0
      %p198 = por %p196, %p197
      %p199 = scmp.ne.s32.totalorder %s191, %s193
      %p200 = scmp.eq.s32.totalorder %s36, 1
      %p201 = por %p199, %p200
      %p202 = scmp.ne.s32.totalorder %s193, %s194
      %p203 = scmp.eq.s32.totalorder %s36, 0
      %p204 = por %p202, %p203
      %p205 = scmp.ne.s32.totalorder %s193, %s194
      %p206 = scmp.eq.s32.totalorder %s37, 1
      %p207 = por %p205, %p206
      %p209 = scmp.ne.s32.totalorder %s194, %s208
      %p210 = scmp.eq.s32.totalorder %s37, 0
      %p211 = por %p209, %p210
      %s213 = sadd.s32 %s212, 1
      %p216 = scmp.eq.s32.totalorder %s31, 1
      %p217 = scmp.ne.s32.totalorder %s212, %s214
      %p218 = scmp.eq.s32.totalorder %s31, 0
      %p219 = por %p217, %p218
      %p220 = scmp.ne.s32.totalorder %s212, %s214
      %p221 = scmp.eq.s32.totalorder %s36, 1
      %p222 = por %p220, %p221
      %p223 = scmp.ne.s32.totalorder %s214, %s215
      %p224 = scmp.eq.s32.totalorder %s36, 0
      %p225 = por %p223, %p224
      %p226 = scmp.ne.s32.totalorder %s214, %s215
      %p227 = scmp.eq.s32.totalorder %s37, 1
      %p228 = por %p226, %p227
      %p230 = scmp.ne.s32.totalorder %s215, %s229
      %p231 = scmp.eq.s32.totalorder %s37, 0
      %p232 = por %p230, %p231
      %s234 = sadd.s32 %s233, 1
      %p237 = scmp.eq.s32.totalorder %s31, 1
      %p238 = scmp.ne.s32.totalorder %s233, %s235
      %p239 = scmp.eq.s32.totalorder %s31, 0
      %p240 = por %p238, %p239
      %p241 = scmp.ne.s32.totalorder %s233, %s235
      %p242 = scmp.eq.s32.totalorder %s36, 1
      %p243 = por %p241, %p242
      %p244 = scmp.ne.s32.totalorder %s235, %s236
      %p245 = scmp.eq.s32.totalorder %s36, 0
      %p246 = por %p244, %p245
      %p247 = scmp.ne.s32.totalorder %s235, %s236
      %p248 = scmp.eq.s32.totalorder %s37, 1
      %p249 = por %p247, %p248
      %p251 = scmp.ne.s32.totalorder %s236, %s250
      %p252 = scmp.eq.s32.totalorder %s37, 0
      %p253 = por %p251, %p252
      %s255 = sadd.s32 %s254, 1
      %p258 = scmp.eq.s32.totalorder %s31, 1
      %p259 = scmp.ne.s32.totalorder %s254, %s256
      %p260 = scmp.eq.s32.totalorder %s31, 0
      %p261 = por %p259, %p260
      %p262 = scmp.ne.s32.totalorder %s254, %s256
      %p263 = scmp.eq.s32.totalorder %s36, 1
      %p264 = por %p262, %p263
      %p265 = scmp.ne.s32.totalorder %s256, %s257
      %p266 = scmp.eq.s32.totalorder %s36, 0
      %p267 = por %p265, %p266
      %p268 = scmp.ne.s32.totalorder %s256, %s257
      %p269 = scmp.eq.s32.totalorder %s37, 1
      %p270 = por %p268, %p269
      %p272 = scmp.ne.s32.totalorder %s257, %s271
      %p273 = scmp.eq.s32.totalorder %s37, 0
      %p274 = por %p272, %p273
      %s276 = sadd.s32 %s275, 1
      %p279 = scmp.eq.s32.totalorder %s31, 1
      %p280 = scmp.ne.s32.totalorder %s275, %s277
      %p281 = scmp.eq.s32.totalorder %s31, 0
      %p282 = por %p280, %p281
      %p283 = scmp.ne.s32.totalorder %s275, %s277
      %p284 = scmp.eq.s32.totalorder %s36, 1
      %p285 = por %p283, %p284
      %p286 = scmp.ne.s32.totalorder %s277, %s278
      %p287 = scmp.eq.s32.totalorder %s36, 0
      %p288 = por %p286, %p287
      %p289 = scmp.ne.s32.totalorder %s277, %s278
      %p290 = scmp.eq.s32.totalorder %s37, 1
      %p291 = por %p289, %p290
      %p293 = scmp.ne.s32.totalorder %s278, %s292
      %p294 = scmp.eq.s32.totalorder %s37, 0
      %p295 = por %p293, %p294
      %s297 = sadd.s32 %s296, 1
      %p300 = scmp.eq.s32.totalorder %s31, 1
      %p301 = scmp.ne.s32.totalorder %s296, %s298
      %p302 = scmp.eq.s32.totalorder %s31, 0
      %p303 = por %p301, %p302
      %p304 = scmp.ne.s32.totalorder %s296, %s298
      %p305 = scmp.eq.s32.totalorder %s36, 1
      %p306 = por %p304, %p305
      %p307 = scmp.ne.s32.totalorder %s298, %s299
      %p308 = scmp.eq.s32.totalorder %s36, 0
      %p309 = por %p307, %p308
      %p310 = scmp.ne.s32.totalorder %s298, %s299
      %p311 = scmp.eq.s32.totalorder %s37, 1
      %p312 = por %p310, %p311
      %p314 = scmp.ne.s32.totalorder %s299, %s313
      %p315 = scmp.eq.s32.totalorder %s37, 0
      %p316 = por %p314, %p315
      %s318 = sadd.s32 %s317, 1
      %p321 = scmp.eq.s32.totalorder %s31, 1
      %p322 = scmp.ne.s32.totalorder %s317, %s319
      %p323 = scmp.eq.s32.totalorder %s31, 0
      %p324 = por %p322, %p323
      %p325 = scmp.ne.s32.totalorder %s317, %s319
      %p326 = scmp.eq.s32.totalorder %s36, 1
      %p327 = por %p325, %p326
      %p328 = scmp.ne.s32.totalorder %s319, %s320
      %p329 = scmp.eq.s32.totalorder %s36, 0
      %p330 = por %p328, %p329
      %p331 = scmp.ne.s32.totalorder %s319, %s320
      %p332 = scmp.eq.s32.totalorder %s37, 1
      %p333 = por %p331, %p332
      %p335 = scmp.ne.s32.totalorder %s320, %s334
      %p336 = scmp.eq.s32.totalorder %s37, 0
      %p337 = por %p335, %p336
      %s339 = sadd.s32 %s338, 1
      %p342 = scmp.eq.s32.totalorder %s31, 1
      %p343 = scmp.ne.s32.totalorder %s338, %s340
      %p344 = scmp.eq.s32.totalorder %s31, 0
      %p345 = por %p343, %p344
      %p346 = scmp.ne.s32.totalorder %s338, %s340
      %p347 = scmp.eq.s32.totalorder %s36, 1
      %p348 = por %p346, %p347
      %p349 = scmp.ne.s32.totalorder %s340, %s341
      %p350 = scmp.eq.s32.totalorder %s36, 0
      %p351 = por %p349, %p350
      %p352 = scmp.ne.s32.totalorder %s340, %s341
      %p353 = scmp.eq.s32.totalorder %s37, 1
      %p354 = por %p352, %p353
      %p356 = scmp.ne.s32.totalorder %s341, %s355
      %p357 = scmp.eq.s32.totalorder %s37, 0
      %p358 = por %p356, %p357
      %s359 = ssub.s32 %s31, %s38
      %p360 = scmp.eq.s32.totalorder %s359, 0
      %s362 = sadd.s32 %s361, 1
      %s363 = scalar_select %p360, %s361, %s362
      %p366 = pneg %p360
      %p367 = scmp.eq.s32.totalorder %s31, 1
      %p368 = por %p366, %p367
      %p369 = scmp.ne.s32.totalorder %s361, %s364
      %p370 = scmp.eq.s32.totalorder %s31, 0
      %p371 = por %p369, %p370
      %p372 = scmp.ne.s32.totalorder %s361, %s364
      %p373 = scmp.eq.s32.totalorder %s36, 1
      %p374 = por %p372, %p373
      %p375 = scmp.ne.s32.totalorder %s364, %s365
      %p376 = scmp.eq.s32.totalorder %s36, 0
      %p377 = por %p375, %p376
      %p378 = scmp.ne.s32.totalorder %s364, %s365
      %p379 = scmp.eq.s32.totalorder %s37, 1
      %p380 = por %p378, %p379
      %p382 = scmp.ne.s32.totalorder %s365, %s381
      %p383 = scmp.eq.s32.totalorder %s37, 0
      %p384 = por %p382, %p383
      %p385 = scmp.le.s32.totalorder 1, %s31
      %p386 = scmp.lt.s32.totalorder %s31, 3
      %p387 = pnand %p385, %p386
      %p388 = pneg %p387
      // Predicated region
      $region9: #{tpu_custom_call.1} parent=5 // pred_check
        _
      $region10: #{tpu_custom_call.1} parent=5 // pred_check_branch
        %390 = sbr.rel (%p387) target = $region12
      $region11: #{tpu_custom_call.1} parent=5 // pred_region
        %s391 = ssub.s32 %s31, 1
        // Predicated region
        $region13: #{tpu_custom_call.1} parent=11 // pred_check
          %p392 = pneg %p78
        $region14: #{tpu_custom_call.1} parent=11 // pred_check_branch
          %394 = sbr.rel (%p392) target = $region16
        $region15: #{tpu_custom_call.1} parent=11 // pred_region
          %s396 = ssub.s32 3072, 3072
          %397 = vsyncadd [#allocation7], %s396
          %s398 = sshll.u32 [#allocation6], 4
          %s399 = int_to_ptr.vmem [resolvable:$true] %s398
          %404 = dma.hbm_to_vmem [thread:$0]  %s1, 3072, %s399, [#allocation7], 64, 64, 4
        $region16: #{tpu_custom_call.1} parent=11 // pred_fallthru
          _
        // Predicated region
        $region17: #{tpu_custom_call.1} parent=11 // pred_check
          %p405 = pneg %p99
        $region18: #{tpu_custom_call.1} parent=11 // pred_check_branch
          %407 = sbr.rel (%p405) target = $region20
        $region19: #{tpu_custom_call.1} parent=11 // pred_region
          _
        $region20: #{tpu_custom_call.1} parent=11 // pred_fallthru
          _
        // Predicated region
        $region21: #{tpu_custom_call.1} parent=11 // pred_check
          %p408 = pneg %p120
        $region22: #{tpu_custom_call.1} parent=11 // pred_check_branch
          %410 = sbr.rel (%p408) target = $region24
        $region23: #{tpu_custom_call.1} parent=11 // pred_region
          %s412 = ssub.s32 3072, 3072
          %413 = vsyncadd [#allocation7], %s412
          %s414 = sshll.u32 [#allocation8], 4
          %s415 = int_to_ptr.vmem [resolvable:$true] %s414
          %420 = dma.hbm_to_vmem [thread:$0]  %s3, 3072, %s415, [#allocation7], 64, 64, 4
        $region24: #{tpu_custom_call.1} parent=11 // pred_fallthru
          _
        // Predicated region
        $region25: #{tpu_custom_call.1} parent=11 // pred_check
          %p421 = pneg %p141
        $region26: #{tpu_custom_call.1} parent=11 // pred_check_branch
          %423 = sbr.rel (%p421) target = $region28
        $region27: #{tpu_custom_call.1} parent=11 // pred_region
          _
        $region28: #{tpu_custom_call.1} parent=11 // pred_fallthru
          _
        // Predicated region
        $region29: #{tpu_custom_call.1} parent=11 // pred_check
          %p424 = pneg %p162
        $region30: #{tpu_custom_call.1} parent=11 // pred_check_branch
          %426 = sbr.rel (%p424) target = $region32
        $region31: #{tpu_custom_call.1} parent=11 // pred_region
          %s428 = ssub.s32 1024, 1024
          %429 = vsyncadd [#allocation10], %s428
          %s430 = sshll.u32 [#allocation9], 4
          %s431 = int_to_ptr.vmem [resolvable:$true] %s430
          %436 = dma.hbm_to_vmem [thread:$0]  %s5, 1024, %s431, [#allocation10], 64, 64, 4
        $region32: #{tpu_custom_call.1} parent=11 // pred_fallthru
          _
        // Predicated region
        $region33: #{tpu_custom_call.1} parent=11 // pred_check
          %p437 = pneg %p183
        $region34: #{tpu_custom_call.1} parent=11 // pred_check_branch
          %439 = sbr.rel (%p437) target = $region36
        $region35: #{tpu_custom_call.1} parent=11 // pred_region
          _
        $region36: #{tpu_custom_call.1} parent=11 // pred_fallthru
          _
        // Predicated region
        $region37: #{tpu_custom_call.1} parent=11 // pred_check
          %p440 = pneg %p204
        $region38: #{tpu_custom_call.1} parent=11 // pred_check_branch
          %442 = sbr.rel (%p440) target = $region40
        $region39: #{tpu_custom_call.1} parent=11 // pred_region
          %s444 = ssub.s32 3072, 3072
          %445 = vsyncadd [#allocation10], %s444
          %s446 = sshll.u32 [#allocation11], 4
          %s447 = int_to_ptr.vmem [resolvable:$true] %s446
          %452 = dma.hbm_to_vmem [thread:$0]  %s7, 3072, %s447, [#allocation10], 64, 64, 4
        $region40: #{tpu_custom_call.1} parent=11 // pred_fallthru
          _
        // Predicated region
        $region41: #{tpu_custom_call.1} parent=11 // pred_check
          %p453 = pneg %p225
        $region42: #{tpu_custom_call.1} parent=11 // pred_check_branch
          %455 = sbr.rel (%p453) target = $region44
        $region43: #{tpu_custom_call.1} parent=11 // pred_region
          _
        $region44: #{tpu_custom_call.1} parent=11 // pred_fallthru
          _
        // Predicated region
        $region45: #{tpu_custom_call.1} parent=11 // pred_check
          %p456 = pneg %p246
        $region46: #{tpu_custom_call.1} parent=11 // pred_check_branch
          %458 = sbr.rel (%p456) target = $region48
        $region47: #{tpu_custom_call.1} parent=11 // pred_region
          %s460 = ssub.s32 3072, 3072
          %461 = vsyncadd [#allocation13], %s460
          %s462 = sshll.u32 [#allocation12], 4
          %s463 = int_to_ptr.vmem [resolvable:$true] %s462
          %468 = dma.hbm_to_vmem [thread:$0]  %s9, 3072, %s463, [#allocation13], 64, 64, 4
        $region48: #{tpu_custom_call.1} parent=11 // pred_fallthru
          _
        // Predicated region
        $region49: #{tpu_custom_call.1} parent=11 // pred_check
          %p469 = pneg %p267
        $region50: #{tpu_custom_call.1} parent=11 // pred_check_branch
          %471 = sbr.rel (%p469) target = $region52
        $region51: #{tpu_custom_call.1} parent=11 // pred_region
          _
        $region52: #{tpu_custom_call.1} parent=11 // pred_fallthru
          _
        // Predicated region
        $region53: #{tpu_custom_call.1} parent=11 // pred_check
          %p472 = pneg %p288
        $region54: #{tpu_custom_call.1} parent=11 // pred_check_branch
          %474 = sbr.rel (%p472) target = $region56
        $region55: #{tpu_custom_call.1} parent=11 // pred_region
          %s476 = ssub.s32 1024, 1024
          %477 = vsyncadd [#allocation13], %s476
          %s478 = sshll.u32 [#allocation14], 4
          %s479 = int_to_ptr.vmem [resolvable:$true] %s478
          %484 = dma.hbm_to_vmem [thread:$0]  %s11, 1024, %s479, [#allocation13], 64, 64, 4
        $region56: #{tpu_custom_call.1} parent=11 // pred_fallthru
          _
        // Predicated region
        $region57: #{tpu_custom_call.1} parent=11 // pred_check
          %p485 = pneg %p309
        $region58: #{tpu_custom_call.1} parent=11 // pred_check_branch
          %487 = sbr.rel (%p485) target = $region60
        $region59: #{tpu_custom_call.1} parent=11 // pred_region
          _
        $region60: #{tpu_custom_call.1} parent=11 // pred_fallthru
          _
        // Predicated region
        $region61: #{tpu_custom_call.1} parent=11 // pred_check
          %p488 = pneg %p330
        $region62: #{tpu_custom_call.1} parent=11 // pred_check_branch
          %490 = sbr.rel (%p488) target = $region64
        $region63: #{tpu_custom_call.1} parent=11 // pred_region
          %s492 = ssub.s32 1024, 1024
          %493 = vsyncadd [#allocation16], %s492
          %s494 = sshll.u32 [#allocation15], 4
          %s495 = int_to_ptr.vmem [resolvable:$true] %s494
          %500 = dma.hbm_to_vmem [thread:$0]  %s13, 1024, %s495, [#allocation16], 64, 64, 4
        $region64: #{tpu_custom_call.1} parent=11 // pred_fallthru
          _
        // Predicated region
        $region65: #{tpu_custom_call.1} parent=11 // pred_check
          %p501 = pneg %p351
        $region66: #{tpu_custom_call.1} parent=11 // pred_check_branch
          %503 = sbr.rel (%p501) target = $region68
        $region67: #{tpu_custom_call.1} parent=11 // pred_region
          _
        $region68: #{tpu_custom_call.1} parent=11 // pred_fallthru
          _
      $region12: #{tpu_custom_call.1} parent=5 // pred_fallthru
        _
      %p504 = scmp.lt.s32.totalorder %s31, 2
      // Predicated region
      $region69: #{tpu_custom_call.1} parent=5 // pred_check
        %p505 = pneg %p504
      $region70: #{tpu_custom_call.1} parent=5 // pred_check_branch
        %507 = sbr.rel (%p505) target = $region72
      $region71: #{tpu_custom_call.1} parent=5 // pred_region
        // Predicated region
        $region73: #{tpu_custom_call.1} parent=71 // pred_check
          %p508 = pneg %p51
        $region74: #{tpu_custom_call.1} parent=71 // pred_check_branch
          %510 = sbr.rel (%p508) target = $region76
        $region75: #{tpu_custom_call.1} parent=71 // pred_region
          %s511 = sand.u32 %s41, 1
          %s512 = scalar_lea.sflag [#allocation4], %s511
          %s513 = sand.u32 %s41, 1
          %s514 = smul.addr %s513, 128
          %s515 = scalar_lea.vmem [#allocation3], %s514
          %s516 = smul.u32 8, %s31
          %s518 = ssub.s32 2048, 2048
          %519 = vsyncadd %s512, %s518
          %s520 = smul.addr %s516, 2
          %s521 = smul.addr %s520, 128
          %s522 = scalar_lea.hbm %s0, %s521
          %s523 = sshll.u32 %s515, 4
          %s524 = int_to_ptr.vmem [resolvable:$true] %s523
          %529 = dma.hbm_to_vmem [thread:$0]  %s522, 2048, %s524, %s512, 128, 128, 8
        $region76: #{tpu_custom_call.1} parent=71 // pred_fallthru
          _
      $region72: #{tpu_custom_call.1} parent=5 // pred_fallthru
        _
      %p530 = scmp.le.s32.totalorder 1, %s31
      %p531 = scmp.lt.s32.totalorder %s31, 3
      %p532 = pnand %p530, %p531
      %p533 = pneg %p532
      // Predicated region
      $region77: #{tpu_custom_call.1} parent=5 // pred_check
        _
      $region78: #{tpu_custom_call.1} parent=5 // pred_check_branch
        %535 = sbr.rel (%p532) target = $region80
      $region79: #{tpu_custom_call.1} parent=5 // pred_region
        %s536 = ssub.s32 %s31, 1
        %s537 = sand.u32 %s44, 1
        %s538 = scalar_lea.sflag [#allocation4], %s537
        %s539 = sand.u32 %s44, 1
        %s540 = smul.addr %s539, 128
        %s541 = scalar_lea.vmem [#allocation3], %s540
        // Predicated region
        $region81: #{tpu_custom_call.1} parent=79 // pred_check
          %p542 = pneg %p57
        $region82: #{tpu_custom_call.1} parent=79 // pred_check_branch
          %544 = sbr.rel (%p542) target = $region84
        $region83: #{tpu_custom_call.1} parent=79 // pred_region
          %545 = dma.done %s538, 2048
        $region84: #{tpu_custom_call.1} parent=79 // pred_fallthru
          _
        // Predicated region
        $region85: #{tpu_custom_call.1} parent=79 // pred_check
          %p546 = pneg %p78
        $region86: #{tpu_custom_call.1} parent=79 // pred_check_branch
          %548 = sbr.rel (%p546) target = $region88
        $region87: #{tpu_custom_call.1} parent=79 // pred_region
          %549 = dma.done [#allocation7], 3072
        $region88: #{tpu_custom_call.1} parent=79 // pred_fallthru
          _
        // Predicated region
        $region89: #{tpu_custom_call.1} parent=79 // pred_check
          %p550 = pneg %p120
        $region90: #{tpu_custom_call.1} parent=79 // pred_check_branch
          %552 = sbr.rel (%p550) target = $region92
        $region91: #{tpu_custom_call.1} parent=79 // pred_region
          %553 = dma.done [#allocation7], 3072
        $region92: #{tpu_custom_call.1} parent=79 // pred_fallthru
          _
        // Predicated region
        $region93: #{tpu_custom_call.1} parent=79 // pred_check
          %p554 = pneg %p162
        $region94: #{tpu_custom_call.1} parent=79 // pred_check_branch
          %556 = sbr.rel (%p554) target = $region96
        $region95: #{tpu_custom_call.1} parent=79 // pred_region
          %557 = dma.done [#allocation10], 1024
        $region96: #{tpu_custom_call.1} parent=79 // pred_fallthru
          _
        // Predicated region
        $region97: #{tpu_custom_call.1} parent=79 // pred_check
          %p558 = pneg %p204
        $region98: #{tpu_custom_call.1} parent=79 // pred_check_branch
          %560 = sbr.rel (%p558) target = $region100
        $region99: #{tpu_custom_call.1} parent=79 // pred_region
          %561 = dma.done [#allocation10], 3072
        $region100: #{tpu_custom_call.1} parent=79 // pred_fallthru
          _
        // Predicated region
        $region101: #{tpu_custom_call.1} parent=79 // pred_check
          %p562 = pneg %p246
        $region102: #{tpu_custom_call.1} parent=79 // pred_check_branch
          %564 = sbr.rel (%p562) target = $region104
        $region103: #{tpu_custom_call.1} parent=79 // pred_region
          %565 = dma.done [#allocation13], 3072
        $region104: #{tpu_custom_call.1} parent=79 // pred_fallthru
          _
        // Predicated region
        $region105: #{tpu_custom_call.1} parent=79 // pred_check
          %p566 = pneg %p288
        $region106: #{tpu_custom_call.1} parent=79 // pred_check_branch
          %568 = sbr.rel (%p566) target = $region108
        $region107: #{tpu_custom_call.1} parent=79 // pred_region
          %569 = dma.done [#allocation13], 1024
        $region108: #{tpu_custom_call.1} parent=79 // pred_fallthru
          _
        // Predicated region
        $region109: #{tpu_custom_call.1} parent=79 // pred_check
          %p570 = pneg %p330
        $region110: #{tpu_custom_call.1} parent=79 // pred_check_branch
          %572 = sbr.rel (%p570) target = $region112
        $region111: #{tpu_custom_call.1} parent=79 // pred_region
          %573 = dma.done [#allocation16], 1024
        $region112: #{tpu_custom_call.1} parent=79 // pred_fallthru
          _
        %s574 = sand.u32 %s44, 1
        %s575 = scalar_lea.sflag [#allocation4], %s574
        %s576 = sand.u32 %s44, 1
        %s577 = smul.addr %s576, 128
        %s578 = scalar_lea.vmem [#allocation3], %s577
        %p579 = pneg %p57
        %p580 = pneg %p54
        %p581 = pneg %p78
        %p582 = pneg %p75
        %p583 = pneg %p99
        %p584 = pneg %p96
        %p585 = pneg %p120
        %p586 = pneg %p117
        %p587 = pneg %p141
        %p588 = pneg %p138
        %p589 = pneg %p162
        %p590 = pneg %p159
        %p591 = pneg %p183
        %p592 = pneg %p180
        %p593 = pneg %p204
        %p594 = pneg %p201
        %p595 = pneg %p225
        %p596 = pneg %p222
        %p597 = pneg %p246
        %p598 = pneg %p243
        %p599 = pneg %p267
        %p600 = pneg %p264
        %p601 = pneg %p288
        %p602 = pneg %p285
        %p603 = pneg %p309
        %p604 = pneg %p306
        %p605 = pneg %p330
        %p606 = pneg %p327
        %p607 = pneg %p351
        %p608 = pneg %p348
        %p609 = pneg %p377
        %p610 = pneg %p374
        %s611 = sand.u32 %s364, 1
        %s612 = scalar_lea.sflag [#allocation5], %s611
        %s613 = sand.u32 %s364, 1
        %s614 = smul.addr %s613, 8
        %s615 = scalar_lea.vmem [#allocation17], %s614
        %s616 = smul.u32 8, %s36
        %618 = vst [vmem:[#allocation2] sm:$0xff] 0.0
        %619 = vst [vmem:[#allocation2 + $0x18] sm:$0xff] 0.0
        %620 = vst [vmem:[#allocation2 + $0x30] sm:$0xff] 0.0
        %621 = vst [vmem:[#allocation2 + $0x48] sm:$0xff] 0.0
        %622 = vst [vmem:[#allocation2 + $0x60] sm:$0xff] 0.0
        %623 = vst [vmem:[#allocation2 + $0x78] sm:$0xff] 0.0
        %624 = vst [vmem:[#allocation2 + $0x90] sm:$0xff] 0.0
        %625 = vst [vmem:[#allocation2 + $0xa8] sm:$0xff] 0.0
        %v626 = vld [vmem:[%s541] sm:$0xff]
        %v627 = vld [vmem:[%s541 + $0x8] sm:$0xff]
        %v628 = vld [vmem:[%s541 + $0x10] sm:$0xff]
        %v629 = vld [vmem:[%s541 + $0x18] sm:$0xff]
        %v630 = vld [vmem:[%s541 + $0x20] sm:$0xff]
        %v631 = vld [vmem:[%s541 + $0x28] sm:$0xff]
        %v632 = vld [vmem:[%s541 + $0x30] sm:$0xff]
        %v633 = vld [vmem:[%s541 + $0x38] sm:$0xff]
        %v634 = vld [vmem:[%s541 + $0x40] sm:$0xff]
        %v635 = vld [vmem:[%s541 + $0x48] sm:$0xff]
        %v636 = vld [vmem:[%s541 + $0x50] sm:$0xff]
        %v637 = vld [vmem:[%s541 + $0x58] sm:$0xff]
        %v638 = vld [vmem:[%s541 + $0x60] sm:$0xff]
        %v639 = vld [vmem:[%s541 + $0x68] sm:$0xff]
        %v640 = vld [vmem:[%s541 + $0x70] sm:$0xff]
        %v641 = vld [vmem:[%s541 + $0x78] sm:$0xff]
        %v642 = vpack.c.bf16 %v627, %v626
        %v643 = vpack.c.bf16 %v629, %v628
        %v644 = vpack.c.bf16 %v631, %v630
        %v645 = vpack.c.bf16 %v633, %v632
        %v646 = vpack.c.bf16 %v635, %v634
        %v647 = vpack.c.bf16 %v637, %v636
        %v648 = vpack.c.bf16 %v639, %v638
        %v649 = vpack.c.bf16 %v641, %v640
        %v650 = vld [vmem:[#allocation9] sm:$0xf]
        %v651 = vld [vmem:[#allocation9 + $0x4] sm:$0xf]
        %v652 = vld [vmem:[#allocation9 + $0x8] sm:$0xf]
        %v653 = vld [vmem:[#allocation9 + $0xc] sm:$0xf]
        %v654 = vld [vmem:[#allocation9 + $0x10] sm:$0xf]
        %v655 = vld [vmem:[#allocation9 + $0x14] sm:$0xf]
        %v656 = vld [vmem:[#allocation9 + $0x18] sm:$0xf]
        %v657 = vld [vmem:[#allocation9 + $0x1c] sm:$0xf]
        %v658 = vld [vmem:[#allocation9 + $0x20] sm:$0xf]
        %v659 = vld [vmem:[#allocation9 + $0x24] sm:$0xf]
        %v660 = vld [vmem:[#allocation9 + $0x28] sm:$0xf]
        %v661 = vld [vmem:[#allocation9 + $0x2c] sm:$0xf]
        %v662 = vld [vmem:[#allocation9 + $0x30] sm:$0xf]
        %v663 = vld [vmem:[#allocation9 + $0x34] sm:$0xf]
        %v664 = vld [vmem:[#allocation9 + $0x38] sm:$0xf]
        %v665 = vld [vmem:[#allocation9 + $0x3c] sm:$0xf]
        %v666 = vld [vmem:[%s6] sm:$0x1]
        %v668 = vlaneseq
        %v669 = vshrl.u32 %v668, 7
        %v670 = vsub.s32 0, %v669
        %v671 = vrot.slane %v666, %v670
        %v689 = vunpack.c.l.b16 %v650
        %v690 = vunpack.c.l.b16 %v651
        %v691 = vunpack.c.l.b16 %v652
        %v692 = vunpack.c.l.b16 %v653
        %v693 = vunpack.c.l.b16 %v654
        %v694 = vunpack.c.l.b16 %v655
        %v695 = vunpack.c.l.b16 %v656
        %v696 = vunpack.c.l.b16 %v657
        %v697 = vunpack.c.l.b16 %v658
        %v698 = vunpack.c.l.b16 %v659
        %v699 = vunpack.c.l.b16 %v660
        %v700 = vunpack.c.l.b16 %v661
        %v701 = vunpack.c.l.b16 %v662
        %v702 = vunpack.c.l.b16 %v663
        %v703 = vunpack.c.l.b16 %v664
        %v704 = vunpack.c.l.b16 %v665
        %v705 = vpack.c.b16 %v690, %v689
        %v706 = vpack.c.b16 %v692, %v691
        %v707 = vpack.c.b16 %v694, %v693
        %v708 = vpack.c.b16 %v696, %v695
        %v709 = vpack.c.b16 %v698, %v697
        %v710 = vpack.c.b16 %v700, %v699
        %v711 = vpack.c.b16 %v702, %v701
        %v712 = vpack.c.b16 %v704, %v703
        %721 = vmatprep.subr.bf16.mxu0 0
        %722 = vmatpush1.bf16.msra.mxu0 %v705
        %723 = vmatprep.subr.bf16.mxu0 0
        %724 = vmatpush1.bf16.msra.mxu0 %v706
        %725 = vmatprep.subr.bf16.mxu0 0
        %726 = vmatpush1.bf16.msra.mxu0 %v707
        %727 = vmatprep.subr.bf16.mxu0 0
        %728 = vmatpush1.bf16.msra.mxu0 %v708
        %729 = vmatprep.subr.bf16.mxu0 0
        %730 = vmatpush1.bf16.msra.mxu0 %v709
        %731 = vmatprep.subr.bf16.mxu0 0
        %732 = vmatpush1.bf16.msra.mxu0 %v710
        %733 = vmatprep.subr.bf16.mxu0 0
        %734 = vmatpush1.bf16.msra.mxu0 %v711
        %735 = vmatprep.subr.bf16.mxu0 0
        %736 = vmatpush1.bf16.msra.mxu0 %v712
        %737 = vmatprep.subr.bf16.mxu0 0
        %738 = vmatpush1.bf16.msra.mxu0 0
        %739 = vmatprep.subr.bf16.mxu0 0
        %740 = vmatpush1.bf16.msra.mxu0 0
        %741 = vmatprep.subr.bf16.mxu0 0
        %742 = vmatpush1.bf16.msra.mxu0 0
        %743 = vmatprep.subr.bf16.mxu0 0
        %744 = vmatpush1.bf16.msra.mxu0 0
        %745 = vmatprep.subr.bf16.mxu0 0
        %746 = vmatpush1.bf16.msra.mxu0 0
        %747 = vmatprep.subr.bf16.mxu0 0
        %748 = vmatpush1.bf16.msra.mxu0 0
        %749 = vmatprep.subr.bf16.mxu0 0
        %750 = vmatpush1.bf16.msra.mxu0 0
        %751 = vmatprep.subr.bf16.mxu0 0
        %752 = vmatpush1.bf16.msra.mxu0 0
        %753 = vmatprep.mubr.bf16.mxu0 0
        %754 = vmatmul.mubr.bf16.gmra.mrb[0].mxu0 %v642
        %v755 = vpop.f32.mrb[0].mxu0
        %v756 = vadd.f32 %v671, %v755
        %v757 = vpop.f32.mrb[0].mxu0
        %v758 = vpop.f32.mrb[0].mxu0
        %v759 = vadd.f32 %v671, %v758
        %v760 = vpop.f32.mrb[0].mxu0
        %761 = vmatprep.mubr.bf16.mxu0 0
        %762 = vmatmul.mubr.bf16.gmra.mrb[0].mxu0 %v643
        %v763 = vpop.f32.mrb[0].mxu0
        %v764 = vadd.f32 %v671, %v763
        %v765 = vpop.f32.mrb[0].mxu0
        %v766 = vpop.f32.mrb[0].mxu0
        %v767 = vadd.f32 %v671, %v766
        %v768 = vpop.f32.mrb[0].mxu0
        %769 = vmatprep.mubr.bf16.mxu0 0
        %770 = vmatmul.mubr.bf16.gmra.mrb[0].mxu0 %v644
        %v771 = vpop.f32.mrb[0].mxu0
        %v772 = vadd.f32 %v671, %v771
        %v773 = vpop.f32.mrb[0].mxu0
        %v774 = vpop.f32.mrb[0].mxu0
        %v775 = vadd.f32 %v671, %v774
        %v776 = vpop.f32.mrb[0].mxu0
        %777 = vmatprep.mubr.bf16.mxu0 0
        %778 = vmatmul.mubr.bf16.gmra.mrb[0].mxu0 %v645
        %v779 = vpop.f32.mrb[0].mxu0
        %v780 = vadd.f32 %v671, %v779
        %v781 = vpop.f32.mrb[0].mxu0
        %v782 = vpop.f32.mrb[0].mxu0
        %v783 = vadd.f32 %v671, %v782
        %v784 = vpop.f32.mrb[0].mxu0
        %785 = vmatprep.mubr.bf16.mxu0 0
        %786 = vmatmul.mubr.bf16.gmra.mrb[0].mxu0 %v646
        %v787 = vpop.f32.mrb[0].mxu0
        %v788 = vadd.f32 %v671, %v787
        %v789 = vpop.f32.mrb[0].mxu0
        %v790 = vpop.f32.mrb[0].mxu0
        %v791 = vadd.f32 %v671, %v790
        %v792 = vpop.f32.mrb[0].mxu0
        %793 = vmatprep.mubr.bf16.mxu0 0
        %794 = vmatmul.mubr.bf16.gmra.mrb[0].mxu0 %v647
        %v795 = vpop.f32.mrb[0].mxu0
        %v796 = vadd.f32 %v671, %v795
        %v797 = vpop.f32.mrb[0].mxu0
        %v798 = vpop.f32.mrb[0].mxu0
        %v799 = vadd.f32 %v671, %v798
        %v800 = vpop.f32.mrb[0].mxu0
        %801 = vmatprep.mubr.bf16.mxu0 0
        %802 = vmatmul.mubr.bf16.gmra.mrb[0].mxu0 %v648
        %v803 = vpop.f32.mrb[0].mxu0
        %v804 = vadd.f32 %v671, %v803
        %v805 = vpop.f32.mrb[0].mxu0
        %v806 = vpop.f32.mrb[0].mxu0
        %v807 = vadd.f32 %v671, %v806
        %v808 = vpop.f32.mrb[0].mxu0
        %809 = vmatprep.mubr.bf16.mxu0 0
        %810 = vmatmul.mubr.bf16.gmra.mrb[0].mxu0 %v649
        %v811 = vpop.f32.mrb[0].mxu0
        %v812 = vadd.f32 %v671, %v811
        %v813 = vpop.f32.mrb[0].mxu0
        %v814 = vpop.f32.mrb[0].mxu0
        %v815 = vadd.f32 %v671, %v814
        %v816 = vpop.f32.mrb[0].mxu0
        %817 = vdwg.mxu0
        %818 = vst [vmem:[#allocation2 + $0x8] sm:$0xff] %v626
        %819 = vst [vmem:[#allocation2 + $0x10] sm:$0xff] %v627
        %820 = vst [vmem:[#allocation2 + $0x20] sm:$0xff] %v628
        %821 = vst [vmem:[#allocation2 + $0x28] sm:$0xff] %v629
        %822 = vst [vmem:[#allocation2 + $0x38] sm:$0xff] %v630
        %823 = vst [vmem:[#allocation2 + $0x40] sm:$0xff] %v631
        %824 = vst [vmem:[#allocation2 + $0x50] sm:$0xff] %v632
        %825 = vst [vmem:[#allocation2 + $0x58] sm:$0xff] %v633
        %826 = vst [vmem:[#allocation2 + $0x68] sm:$0xff] %v634
        %827 = vst [vmem:[#allocation2 + $0x70] sm:$0xff] %v635
        %828 = vst [vmem:[#allocation2 + $0x80] sm:$0xff] %v636
        %829 = vst [vmem:[#allocation2 + $0x88] sm:$0xff] %v637
        %830 = vst [vmem:[#allocation2 + $0x98] sm:$0xff] %v638
        %831 = vst [vmem:[#allocation2 + $0xa0] sm:$0xff] %v639
        %832 = vst [vmem:[#allocation2 + $0xb0] sm:$0xff] %v640
        %833 = vst [vmem:[#allocation2 + $0xb8] sm:$0xff] %v641
        %v834 = vld [vmem:[#allocation2 + $0x6] sm:$0xff]
        %v835 = vld [vmem:[#allocation2 + $0xe] sm:$0xff]
        %v836 = vld [vmem:[#allocation2 + $0x1e] sm:$0xff]
        %v837 = vld [vmem:[#allocation2 + $0x26] sm:$0xff]
        %v838 = vld [vmem:[#allocation2 + $0x36] sm:$0xff]
        %v839 = vld [vmem:[#allocation2 + $0x3e] sm:$0xff]
        %v840 = vld [vmem:[#allocation2 + $0x4e] sm:$0xff]
        %v841 = vld [vmem:[#allocation2 + $0x56] sm:$0xff]
        %v842 = vld [vmem:[#allocation2 + $0x66] sm:$0xff]
        %v843 = vld [vmem:[#allocation2 + $0x6e] sm:$0xff]
        %v844 = vld [vmem:[#allocation2 + $0x7e] sm:$0xff]
        %v845 = vld [vmem:[#allocation2 + $0x86] sm:$0xff]
        %v846 = vld [vmem:[#allocation2 + $0x96] sm:$0xff]
        %v847 = vld [vmem:[#allocation2 + $0x9e] sm:$0xff]
        %v848 = vld [vmem:[#allocation2 + $0xae] sm:$0xff]
        %v849 = vld [vmem:[#allocation2 + $0xb6] sm:$0xff]
        %v850 = vld [vmem:[#allocation2 + $0x7] sm:$0xff]
        %v851 = vld [vmem:[#allocation2 + $0xf] sm:$0xff]
        %v852 = vld [vmem:[#allocation2 + $0x1f] sm:$0xff]
        %v853 = vld [vmem:[#allocation2 + $0x27] sm:$0xff]
        %v854 = vld [vmem:[#allocation2 + $0x37] sm:$0xff]
        %v855 = vld [vmem:[#allocation2 + $0x3f] sm:$0xff]
        %v856 = vld [vmem:[#allocation2 + $0x4f] sm:$0xff]
        %v857 = vld [vmem:[#allocation2 + $0x57] sm:$0xff]
        %v858 = vld [vmem:[#allocation2 + $0x67] sm:$0xff]
        %v859 = vld [vmem:[#allocation2 + $0x6f] sm:$0xff]
        %v860 = vld [vmem:[#allocation2 + $0x7f] sm:$0xff]
        %v861 = vld [vmem:[#allocation2 + $0x87] sm:$0xff]
        %v862 = vld [vmem:[#allocation2 + $0x97] sm:$0xff]
        %v863 = vld [vmem:[#allocation2 + $0x9f] sm:$0xff]
        %v864 = vld [vmem:[#allocation2 + $0xaf] sm:$0xff]
        %v865 = vld [vmem:[#allocation2 + $0xb7] sm:$0xff]
        %v866 = vld [vmem:[#allocation2 + $0x8] sm:$0xff]
        %v867 = vld [vmem:[#allocation2 + $0x10] sm:$0xff]
        %v868 = vld [vmem:[#allocation2 + $0x20] sm:$0xff]
        %v869 = vld [vmem:[#allocation2 + $0x28] sm:$0xff]
        %v870 = vld [vmem:[#allocation2 + $0x38] sm:$0xff]
        %v871 = vld [vmem:[#allocation2 + $0x40] sm:$0xff]
        %v872 = vld [vmem:[#allocation2 + $0x50] sm:$0xff]
        %v873 = vld [vmem:[#allocation2 + $0x58] sm:$0xff]
        %v874 = vld [vmem:[#allocation2 + $0x68] sm:$0xff]
        %v875 = vld [vmem:[#allocation2 + $0x70] sm:$0xff]
        %v876 = vld [vmem:[#allocation2 + $0x80] sm:$0xff]
        %v877 = vld [vmem:[#allocation2 + $0x88] sm:$0xff]
        %v878 = vld [vmem:[#allocation2 + $0x98] sm:$0xff]
        %v879 = vld [vmem:[#allocation2 + $0xa0] sm:$0xff]
        %v880 = vld [vmem:[#allocation2 + $0xb0] sm:$0xff]
        %v881 = vld [vmem:[#allocation2 + $0xb8] sm:$0xff]
        %v882 = vpack.c.bf16 %v835, %v834
        %v883 = vpack.c.bf16 %v851, %v850
        %v884 = vpack.c.bf16 %v867, %v866
        %v885 = vpack.c.bf16 %v837, %v836
        %v886 = vpack.c.bf16 %v853, %v852
        %v887 = vpack.c.bf16 %v869, %v868
        %v888 = vpack.c.bf16 %v839, %v838
        %v889 = vpack.c.bf16 %v855, %v854
        %v890 = vpack.c.bf16 %v871, %v870
        %v891 = vpack.c.bf16 %v841, %v840
        %v892 = vpack.c.bf16 %v857, %v856
        %v893 = vpack.c.bf16 %v873, %v872
        %v894 = vpack.c.bf16 %v843, %v842
        %v895 = vpack.c.bf16 %v859, %v858
        %v896 = vpack.c.bf16 %v875, %v874
        %v897 = vpack.c.bf16 %v845, %v844
        %v898 = vpack.c.bf16 %v861, %v860
        %v899 = vpack.c.bf16 %v877, %v876
        %v900 = vpack.c.bf16 %v847, %v846
        %v901 = vpack.c.bf16 %v863, %v862
        %v902 = vpack.c.bf16 %v879, %v878
        %v903 = vpack.c.bf16 %v849, %v848
        %v904 = vpack.c.bf16 %v865, %v864
        %v905 = vpack.c.bf16 %v881, %v880
        %v906 = vld [vmem:[#allocation6] sm:$0xf]
        %v907 = vld [vmem:[#allocation6 + $0x4] sm:$0xf]
        %v908 = vld [vmem:[#allocation6 + $0x8] sm:$0xf]
        %v909 = vld [vmem:[#allocation6 + $0xc] sm:$0xf]
        %v910 = vld [vmem:[#allocation6 + $0x10] sm:$0xf]
        %v911 = vld [vmem:[#allocation6 + $0x14] sm:$0xf]
        %v912 = vld [vmem:[#allocation6 + $0x18] sm:$0xf]
        %v913 = vld [vmem:[#allocation6 + $0x1c] sm:$0xf]
        %v914 = vld [vmem:[#allocation6 + $0x20] sm:$0xf]
        %v915 = vld [vmem:[#allocation6 + $0x24] sm:$0xf]
        %v916 = vld [vmem:[#allocation6 + $0x28] sm:$0xf]
        %v917 = vld [vmem:[#allocation6 + $0x2c] sm:$0xf]
        %v918 = vld [vmem:[#allocation6 + $0x30] sm:$0xf]
        %v919 = vld [vmem:[#allocation6 + $0x34] sm:$0xf]
        %v920 = vld [vmem:[#allocation6 + $0x38] sm:$0xf]
        %v921 = vld [vmem:[#allocation6 + $0x3c] sm:$0xf]
        %v922 = vld [vmem:[#allocation6 + $0x40] sm:$0xf]
        %v923 = vld [vmem:[#allocation6 + $0x44] sm:$0xf]
        %v924 = vld [vmem:[#allocation6 + $0x48] sm:$0xf]
        %v925 = vld [vmem:[#allocation6 + $0x4c] sm:$0xf]
        %v926 = vld [vmem:[#allocation6 + $0x50] sm:$0xf]
        %v927 = vld [vmem:[#allocation6 + $0x54] sm:$0xf]
        %v928 = vld [vmem:[#allocation6 + $0x58] sm:$0xf]
        %v929 = vld [vmem:[#allocation6 + $0x5c] sm:$0xf]
        %v930 = vld [vmem:[#allocation6 + $0x60] sm:$0xf]
        %v931 = vld [vmem:[#allocation6 + $0x64] sm:$0xf]
        %v932 = vld [vmem:[#allocation6 + $0x68] sm:$0xf]
        %v933 = vld [vmem:[#allocation6 + $0x6c] sm:$0xf]
        %v934 = vld [vmem:[#allocation6 + $0x70] sm:$0xf]
        %v935 = vld [vmem:[#allocation6 + $0x74] sm:$0xf]
        %v936 = vld [vmem:[#allocation6 + $0x78] sm:$0xf]
        %v937 = vld [vmem:[#allocation6 + $0x7c] sm:$0xf]
        %v938 = vld [vmem:[#allocation6 + $0x80] sm:$0xf]
        %v939 = vld [vmem:[#allocation6 + $0x84] sm:$0xf]
        %v940 = vld [vmem:[#allocation6 + $0x88] sm:$0xf]
        %v941 = vld [vmem:[#allocation6 + $0x8c] sm:$0xf]
        %v942 = vld [vmem:[#allocation6 + $0x90] sm:$0xf]
        %v943 = vld [vmem:[#allocation6 + $0x94] sm:$0xf]
        %v944 = vld [vmem:[#allocation6 + $0x98] sm:$0xf]
        %v945 = vld [vmem:[#allocation6 + $0x9c] sm:$0xf]
        %v946 = vld [vmem:[#allocation6 + $0xa0] sm:$0xf]
        %v947 = vld [vmem:[#allocation6 + $0xa4] sm:$0xf]
        %v948 = vld [vmem:[#allocation6 + $0xa8] sm:$0xf]
        %v949 = vld [vmem:[#allocation6 + $0xac] sm:$0xf]
        %v950 = vld [vmem:[#allocation6 + $0xb0] sm:$0xf]
        %v951 = vld [vmem:[#allocation6 + $0xb4] sm:$0xf]
        %v952 = vld [vmem:[#allocation6 + $0xb8] sm:$0xf]
        %v953 = vld [vmem:[#allocation6 + $0xbc] sm:$0xf]
        %v954 = vld [vmem:[%s2] sm:$0x1]
        %v956 = vlaneseq
        %v957 = vshrl.u32 %v956, 7
        %v958 = vsub.s32 0, %v957
        %v959 = vrot.slane %v954, %v958
        %v1009 = vunpack.c.l.b16 %v906
        %v1010 = vunpack.c.l.b16 %v907
        %v1011 = vunpack.c.l.b16 %v908
        %v1012 = vunpack.c.l.b16 %v909
        %v1013 = vunpack.c.l.b16 %v910
        %v1014 = vunpack.c.l.b16 %v911
        %v1015 = vunpack.c.l.b16 %v912
        %v1016 = vunpack.c.l.b16 %v913
        %v1017 = vunpack.c.l.b16 %v914
        %v1018 = vunpack.c.l.b16 %v915
        %v1019 = vunpack.c.l.b16 %v916
        %v1020 = vunpack.c.l.b16 %v917
        %v1021 = vunpack.c.l.b16 %v918
        %v1022 = vunpack.c.l.b16 %v919
        %v1023 = vunpack.c.l.b16 %v920
        %v1024 = vunpack.c.l.b16 %v921
        %v1025 = vunpack.c.l.b16 %v922
        %v1026 = vunpack.c.l.b16 %v923
        %v1027 = vunpack.c.l.b16 %v924
        %v1028 = vunpack.c.l.b16 %v925
        %v1029 = vunpack.c.l.b16 %v926
        %v1030 = vunpack.c.l.b16 %v927
        %v1031 = vunpack.c.l.b16 %v928
        %v1032 = vunpack.c.l.b16 %v929
        %v1033 = vunpack.c.l.b16 %v930
        %v1034 = vunpack.c.l.b16 %v931
        %v1035 = vunpack.c.l.b16 %v932
        %v1036 = vunpack.c.l.b16 %v933
        %v1037 = vunpack.c.l.b16 %v934
        %v1038 = vunpack.c.l.b16 %v935
        %v1039 = vunpack.c.l.b16 %v936
        %v1040 = vunpack.c.l.b16 %v937
        %v1041 = vunpack.c.l.b16 %v938
        %v1042 = vunpack.c.l.b16 %v939
        %v1043 = vunpack.c.l.b16 %v940
        %v1044 = vunpack.c.l.b16 %v941
        %v1045 = vunpack.c.l.b16 %v942
        %v1046 = vunpack.c.l.b16 %v943
        %v1047 = vunpack.c.l.b16 %v944
        %v1048 = vunpack.c.l.b16 %v945
        %v1049 = vunpack.c.l.b16 %v946
        %v1050 = vunpack.c.l.b16 %v947
        %v1051 = vunpack.c.l.b16 %v948
        %v1052 = vunpack.c.l.b16 %v949
        %v1053 = vunpack.c.l.b16 %v950
        %v1054 = vunpack.c.l.b16 %v951
        %v1055 = vunpack.c.l.b16 %v952
        %v1056 = vunpack.c.l.b16 %v953
        %v1057 = vpack.c.b16 %v1010, %v1009
        %v1058 = vpack.c.b16 %v1012, %v1011
        %v1059 = vpack.c.b16 %v1014, %v1013
        %v1060 = vpack.c.b16 %v1016, %v1015
        %v1061 = vpack.c.b16 %v1018, %v1017
        %v1062 = vpack.c.b16 %v1020, %v1019
        %v1063 = vpack.c.b16 %v1022, %v1021
        %v1064 = vpack.c.b16 %v1024, %v1023
        %v1065 = vpack.c.b16 %v1026, %v1025
        %v1066 = vpack.c.b16 %v1028, %v1027
        %v1067 = vpack.c.b16 %v1030, %v1029
        %v1068 = vpack.c.b16 %v1032, %v1031
        %v1069 = vpack.c.b16 %v1034, %v1033
        %v1070 = vpack.c.b16 %v1036, %v1035
        %v1071 = vpack.c.b16 %v1038, %v1037
        %v1072 = vpack.c.b16 %v1040, %v1039
        %v1073 = vpack.c.b16 %v1042, %v1041
        %v1074 = vpack.c.b16 %v1044, %v1043
        %v1075 = vpack.c.b16 %v1046, %v1045
        %v1076 = vpack.c.b16 %v1048, %v1047
        %v1077 = vpack.c.b16 %v1050, %v1049
        %v1078 = vpack.c.b16 %v1052, %v1051
        %v1079 = vpack.c.b16 %v1054, %v1053
        %v1080 = vpack.c.b16 %v1056, %v1055
        %1105 = vmatprep.subr.bf16.mxu0 0
        %1106 = vmatpush1.bf16.msra.mxu0 %v1057
        %1107 = vmatprep.subr.bf16.mxu0 0
        %1108 = vmatpush1.bf16.msra.mxu0 %v1058
        %1109 = vmatprep.subr.bf16.mxu0 0
        %1110 = vmatpush1.bf16.msra.mxu0 %v1059
        %1111 = vmatprep.subr.bf16.mxu0 0
        %1112 = vmatpush1.bf16.msra.mxu0 %v1060
        %1113 = vmatprep.subr.bf16.mxu0 0
        %1114 = vmatpush1.bf16.msra.mxu0 %v1061
        %1115 = vmatprep.subr.bf16.mxu0 0
        %1116 = vmatpush1.bf16.msra.mxu0 %v1062
        %1117 = vmatprep.subr.bf16.mxu0 0
        %1118 = vmatpush1.bf16.msra.mxu0 %v1063
        %1119 = vmatprep.subr.bf16.mxu0 0
        %1120 = vmatpush1.bf16.msra.mxu0 %v1064
        %1121 = vmatprep.subr.bf16.mxu0 0
        %1122 = vmatpush1.bf16.msra.mxu0 %v1065
        %1123 = vmatprep.subr.bf16.mxu0 0
        %1124 = vmatpush1.bf16.msra.mxu0 %v1066
        %1125 = vmatprep.subr.bf16.mxu0 0
        %1126 = vmatpush1.bf16.msra.mxu0 %v1067
        %1127 = vmatprep.subr.bf16.mxu0 0
        %1128 = vmatpush1.bf16.msra.mxu0 %v1068
        %1129 = vmatprep.subr.bf16.mxu0 0
        %1130 = vmatpush1.bf16.msra.mxu0 %v1069
        %1131 = vmatprep.subr.bf16.mxu0 0
        %1132 = vmatpush1.bf16.msra.mxu0 %v1070
        %1133 = vmatprep.subr.bf16.mxu0 0
        %1134 = vmatpush1.bf16.msra.mxu0 %v1071
        %1135 = vmatprep.subr.bf16.mxu0 0
        %1136 = vmatpush1.bf16.msra.mxu0 %v1072
        %1137 = vmatprep.mubr.bf16.mxu0 %v883
        %1138 = vmatmul.mubr.bf16.gmra.mrb[0].mxu0 %v882
        %v1139 = vpop.f32.mrb[0].mxu0
        %v1140 = vadd.f32 %v959, %v1139
        %v1141 = vpop.f32.mrb[0].mxu0
        %v1142 = vpop.f32.mrb[0].mxu0
        %v1143 = vadd.f32 %v959, %v1142
        %v1144 = vpop.f32.mrb[0].mxu0
        %1145 = vmatprep.mubr.bf16.mxu0 %v886
        %1146 = vmatmul.mubr.bf16.gmra.mrb[0].mxu0 %v885
        %v1147 = vpop.f32.mrb[0].mxu0
        %v1148 = vadd.f32 %v959, %v1147
        %v1149 = vpop.f32.mrb[0].mxu0
        %v1150 = vpop.f32.mrb[0].mxu0
        %v1151 = vadd.f32 %v959, %v1150
        %v1152 = vpop.f32.mrb[0].mxu0
        %1153 = vmatprep.mubr.bf16.mxu0 %v889
        %1154 = vmatmul.mubr.bf16.gmra.mrb[0].mxu0 %v888
        %v1155 = vpop.f32.mrb[0].mxu0
        %v1156 = vadd.f32 %v959, %v1155
        %v1157 = vpop.f32.mrb[0].mxu0
        %v1158 = vpop.f32.mrb[0].mxu0
        %v1159 = vadd.f32 %v959, %v1158
        %v1160 = vpop.f32.mrb[0].mxu0
        %1161 = vmatprep.mubr.bf16.mxu0 %v892
        %1162 = vmatmul.mubr.bf16.gmra.mrb[0].mxu0 %v891
        %v1163 = vpop.f32.mrb[0].mxu0
        %v1164 = vadd.f32 %v959, %v1163
        %v1165 = vpop.f32.mrb[0].mxu0
        %v1166 = vpop.f32.mrb[0].mxu0
        %v1167 = vadd.f32 %v959, %v1166
        %v1168 = vpop.f32.mrb[0].mxu0
        %1169 = vmatprep.mubr.bf16.mxu0 %v895
        %1170 = vmatmul.mubr.bf16.gmra.mrb[0].mxu0 %v894
        %v1171 = vpop.f32.mrb[0].mxu0
        %v1172 = vadd.f32 %v959, %v1171
        %v1173 = vpop.f32.mrb[0].mxu0
        %v1174 = vpop.f32.mrb[0].mxu0
        %v1175 = vadd.f32 %v959, %v1174
        %v1176 = vpop.f32.mrb[0].mxu0
        %1177 = vmatprep.mubr.bf16.mxu0 %v898
        %1178 = vmatmul.mubr.bf16.gmra.mrb[0].mxu0 %v897
        %v1179 = vpop.f32.mrb[0].mxu0
        %v1180 = vadd.f32 %v959, %v1179
        %v1181 = vpop.f32.mrb[0].mxu0
        %v1182 = vpop.f32.mrb[0].mxu0
        %v1183 = vadd.f32 %v959, %v1182
        %v1184 = vpop.f32.mrb[0].mxu0
        %1185 = vmatprep.mubr.bf16.mxu0 %v901
        %1186 = vmatmul.mubr.bf16.gmra.mrb[0].mxu0 %v900
        %v1187 = vpop.f32.mrb[0].mxu0
        %v1188 = vadd.f32 %v959, %v1187
        %v1189 = vpop.f32.mrb[0].mxu0
        %v1190 = vpop.f32.mrb[0].mxu0
        %v1191 = vadd.f32 %v959, %v1190
        %v1192 = vpop.f32.mrb[0].mxu0
        %1193 = vmatprep.mubr.bf16.mxu0 %v904
        %1194 = vmatmul.mubr.bf16.gmra.mrb[0].mxu0 %v903
        %v1195 = vpop.f32.mrb[0].mxu0
        %v1196 = vadd.f32 %v959, %v1195
        %v1197 = vpop.f32.mrb[0].mxu0
        %v1198 = vpop.f32.mrb[0].mxu0
        %v1199 = vadd.f32 %v959, %v1198
        %v1200 = vpop.f32.mrb[0].mxu0
        %1201 = vdwg.mxu0
        %1202 = vmatprep.subr.bf16.mxu0 0
        %1203 = vmatpush1.bf16.msra.mxu0 %v1073
        %1204 = vmatprep.subr.bf16.mxu0 0
        %1205 = vmatpush1.bf16.msra.mxu0 %v1074
        %1206 = vmatprep.subr.bf16.mxu0 0
        %1207 = vmatpush1.bf16.msra.mxu0 %v1075
        %1208 = vmatprep.subr.bf16.mxu0 0
        %1209 = vmatpush1.bf16.msra.mxu0 %v1076
        %1210 = vmatprep.subr.bf16.mxu0 0
        %1211 = vmatpush1.bf16.msra.mxu0 %v1077
        %1212 = vmatprep.subr.bf16.mxu0 0
        %1213 = vmatpush1.bf16.msra.mxu0 %v1078
        %1214 = vmatprep.subr.bf16.mxu0 0
        %1215 = vmatpush1.bf16.msra.mxu0 %v1079
        %1216 = vmatprep.subr.bf16.mxu0 0
        %1217 = vmatpush1.bf16.msra.mxu0 %v1080
        %1218 = vmatprep.subr.bf16.mxu0 0
        %1219 = vmatpush1.bf16.msra.mxu0 0
        %1220 = vmatprep.subr.bf16.mxu0 0
        %1221 = vmatpush1.bf16.msra.mxu0 0
        %1222 = vmatprep.subr.bf16.mxu0 0
        %1223 = vmatpush1.bf16.msra.mxu0 0
        %1224 = vmatprep.subr.bf16.mxu0 0
        %1225 = vmatpush1.bf16.msra.mxu0 0
        %1226 = vmatprep.subr.bf16.mxu0 0
        %1227 = vmatpush1.bf16.msra.mxu0 0
        %1228 = vmatprep.subr.bf16.mxu0 0
        %1229 = vmatpush1.bf16.msra.mxu0 0
        %1230 = vmatprep.subr.bf16.mxu0 0
        %1231 = vmatpush1.bf16.msra.mxu0 0
        %1232 = vmatprep.subr.bf16.mxu0 0
        %1233 = vmatpush1.bf16.msra.mxu0 0
        %1234 = vmatprep.mubr.bf16.mxu0 0
        %1235 = vmatmul.mubr.bf16.gmra.mrb[0].mxu0 %v884
        %v1236 = vpop.f32.mrb[0].mxu0
        %v1237 = vadd.f32 %v1140, %v1236
        %v1238 = vpop.f32.mrb[0].mxu0
        %v1239 = vpop.f32.mrb[0].mxu0
        %v1240 = vadd.f32 %v1143, %v1239
        %v1241 = vpop.f32.mrb[0].mxu0
        %1242 = vmatprep.mubr.bf16.mxu0 0
        %1243 = vmatmul.mubr.bf16.gmra.mrb[0].mxu0 %v887
        %v1244 = vpop.f32.mrb[0].mxu0
        %v1245 = vadd.f32 %v1148, %v1244
        %v1246 = vpop.f32.mrb[0].mxu0
        %v1247 = vpop.f32.mrb[0].mxu0
        %v1248 = vadd.f32 %v1151, %v1247
        %v1249 = vpop.f32.mrb[0].mxu0
        %1250 = vmatprep.mubr.bf16.mxu0 0
        %1251 = vmatmul.mubr.bf16.gmra.mrb[0].mxu0 %v890
        %v1252 = vpop.f32.mrb[0].mxu0
        %v1253 = vadd.f32 %v1156, %v1252
        %v1254 = vpop.f32.mrb[0].mxu0
        %v1255 = vpop.f32.mrb[0].mxu0
        %v1256 = vadd.f32 %v1159, %v1255
        %v1257 = vpop.f32.mrb[0].mxu0
        %1258 = vmatprep.mubr.bf16.mxu0 0
        %1259 = vmatmul.mubr.bf16.gmra.mrb[0].mxu0 %v893
        %v1260 = vpop.f32.mrb[0].mxu0
        %v1261 = vadd.f32 %v1164, %v1260
        %v1262 = vpop.f32.mrb[0].mxu0
        %v1263 = vpop.f32.mrb[0].mxu0
        %v1264 = vadd.f32 %v1167, %v1263
        %v1265 = vpop.f32.mrb[0].mxu0
        %1266 = vmatprep.mubr.bf16.mxu0 0
        %1267 = vmatmul.mubr.bf16.gmra.mrb[0].mxu0 %v896
        %v1268 = vpop.f32.mrb[0].mxu0
        %v1269 = vadd.f32 %v1172, %v1268
        %v1270 = vpop.f32.mrb[0].mxu0
        %v1271 = vpop.f32.mrb[0].mxu0
        %v1272 = vadd.f32 %v1175, %v1271
        %v1273 = vpop.f32.mrb[0].mxu0
        %1274 = vmatprep.mubr.bf16.mxu0 0
        %1275 = vmatmul.mubr.bf16.gmra.mrb[0].mxu0 %v899
        %v1276 = vpop.f32.mrb[0].mxu0
        %v1277 = vadd.f32 %v1180, %v1276
        %v1278 = vpop.f32.mrb[0].mxu0
        %v1279 = vpop.f32.mrb[0].mxu0
        %v1280 = vadd.f32 %v1183, %v1279
        %v1281 = vpop.f32.mrb[0].mxu0
        %1282 = vmatprep.mubr.bf16.mxu0 0
        %1283 = vmatmul.mubr.bf16.gmra.mrb[0].mxu0 %v902
        %v1284 = vpop.f32.mrb[0].mxu0
        %v1285 = vadd.f32 %v1188, %v1284
        %v1286 = vpop.f32.mrb[0].mxu0
        %v1287 = vpop.f32.mrb[0].mxu0
        %v1288 = vadd.f32 %v1191, %v1287
        %v1289 = vpop.f32.mrb[0].mxu0
        %1290 = vmatprep.mubr.bf16.mxu0 0
        %1291 = vmatmul.mubr.bf16.gmra.mrb[0].mxu0 %v905
        %v1292 = vpop.f32.mrb[0].mxu0
        %v1293 = vadd.f32 %v1196, %v1292
        %v1294 = vpop.f32.mrb[0].mxu0
        %v1295 = vpop.f32.mrb[0].mxu0
        %v1296 = vadd.f32 %v1199, %v1295
        %v1297 = vpop.f32.mrb[0].mxu0
        %1298 = vdwg.mxu0
        %v1299 = vmax.f32 %v1237, 0.0
        %v1300 = vmax.f32 %v1240, 0.0
        %v1301 = vmax.f32 %v1245, 0.0
        %v1302 = vmax.f32 %v1248, 0.0
        %v1303 = vmax.f32 %v1253, 0.0
        %v1304 = vmax.f32 %v1256, 0.0
        %v1305 = vmax.f32 %v1261, 0.0
        %v1306 = vmax.f32 %v1264, 0.0
        %v1307 = vmax.f32 %v1269, 0.0
        %v1308 = vmax.f32 %v1272, 0.0
        %v1309 = vmax.f32 %v1277, 0.0
        %v1310 = vmax.f32 %v1280, 0.0
        %v1311 = vmax.f32 %v1285, 0.0
        %v1312 = vmax.f32 %v1288, 0.0
        %v1313 = vmax.f32 %v1293, 0.0
        %v1314 = vmax.f32 %v1296, 0.0
        %1315 = vst [vmem:[#allocation2 + $0x8] sm:$0xff] %v1299
        %1316 = vst [vmem:[#allocation2 + $0x10] sm:$0xff] %v1300
        %1317 = vst [vmem:[#allocation2 + $0x20] sm:$0xff] %v1301
        %1318 = vst [vmem:[#allocation2 + $0x28] sm:$0xff] %v1302
        %1319 = vst [vmem:[#allocation2 + $0x38] sm:$0xff] %v1303
        %1320 = vst [vmem:[#allocation2 + $0x40] sm:$0xff] %v1304
        %1321 = vst [vmem:[#allocation2 + $0x50] sm:$0xff] %v1305
        %1322 = vst [vmem:[#allocation2 + $0x58] sm:$0xff] %v1306
        %1323 = vst [vmem:[#allocation2 + $0x68] sm:$0xff] %v1307
        %1324 = vst [vmem:[#allocation2 + $0x70] sm:$0xff] %v1308
        %1325 = vst [vmem:[#allocation2 + $0x80] sm:$0xff] %v1309
        %1326 = vst [vmem:[#allocation2 + $0x88] sm:$0xff] %v1310
        %1327 = vst [vmem:[#allocation2 + $0x98] sm:$0xff] %v1311
        %1328 = vst [vmem:[#allocation2 + $0xa0] sm:$0xff] %v1312
        %1329 = vst [vmem:[#allocation2 + $0xb0] sm:$0xff] %v1313
        %1330 = vst [vmem:[#allocation2 + $0xb8] sm:$0xff] %v1314
        %v1331 = vld [vmem:[#allocation2 + $0x6] sm:$0xff]
        %v1332 = vld [vmem:[#allocation2 + $0xe] sm:$0xff]
        %v1333 = vld [vmem:[#allocation2 + $0x1e] sm:$0xff]
        %v1334 = vld [vmem:[#allocation2 + $0x26] sm:$0xff]
        %v1335 = vld [vmem:[#allocation2 + $0x36] sm:$0xff]
        %v1336 = vld [vmem:[#allocation2 + $0x3e] sm:$0xff]
        %v1337 = vld [vmem:[#allocation2 + $0x4e] sm:$0xff]
        %v1338 = vld [vmem:[#allocation2 + $0x56] sm:$0xff]
        %v1339 = vld [vmem:[#allocation2 + $0x66] sm:$0xff]
        %v1340 = vld [vmem:[#allocation2 + $0x6e] sm:$0xff]
        %v1341 = vld [vmem:[#allocation2 + $0x7e] sm:$0xff]
        %v1342 = vld [vmem:[#allocation2 + $0x86] sm:$0xff]
        %v1343 = vld [vmem:[#allocation2 + $0x96] sm:$0xff]
        %v1344 = vld [vmem:[#allocation2 + $0x9e] sm:$0xff]
        %v1345 = vld [vmem:[#allocation2 + $0xae] sm:$0xff]
        %v1346 = vld [vmem:[#allocation2 + $0xb6] sm:$0xff]
        %v1347 = vld [vmem:[#allocation2 + $0x7] sm:$0xff]
        %v1348 = vld [vmem:[#allocation2 + $0xf] sm:$0xff]
        %v1349 = vld [vmem:[#allocation2 + $0x1f] sm:$0xff]
        %v1350 = vld [vmem:[#allocation2 + $0x27] sm:$0xff]
        %v1351 = vld [vmem:[#allocation2 + $0x37] sm:$0xff]
        %v1352 = vld [vmem:[#allocation2 + $0x3f] sm:$0xff]
        %v1353 = vld [vmem:[#allocation2 + $0x4f] sm:$0xff]
        %v1354 = vld [vmem:[#allocation2 + $0x57] sm:$0xff]
        %v1355 = vld [vmem:[#allocation2 + $0x67] sm:$0xff]
        %v1356 = vld [vmem:[#allocation2 + $0x6f] sm:$0xff]
        %v1357 = vld [vmem:[#allocation2 + $0x7f] sm:$0xff]
        %v1358 = vld [vmem:[#allocation2 + $0x87] sm:$0xff]
        %v1359 = vld [vmem:[#allocation2 + $0x97] sm:$0xff]
        %v1360 = vld [vmem:[#allocation2 + $0x9f] sm:$0xff]
        %v1361 = vld [vmem:[#allocation2 + $0xaf] sm:$0xff]
        %v1362 = vld [vmem:[#allocation2 + $0xb7] sm:$0xff]
        %v1363 = vld [vmem:[#allocation2 + $0x8] sm:$0xff]
        %v1364 = vld [vmem:[#allocation2 + $0x10] sm:$0xff]
        %v1365 = vld [vmem:[#allocation2 + $0x20] sm:$0xff]
        %v1366 = vld [vmem:[#allocation2 + $0x28] sm:$0xff]
        %v1367 = vld [vmem:[#allocation2 + $0x38] sm:$0xff]
        %v1368 = vld [vmem:[#allocation2 + $0x40] sm:$0xff]
        %v1369 = vld [vmem:[#allocation2 + $0x50] sm:$0xff]
        %v1370 = vld [vmem:[#allocation2 + $0x58] sm:$0xff]
        %v1371 = vld [vmem:[#allocation2 + $0x68] sm:$0xff]
        %v1372 = vld [vmem:[#allocation2 + $0x70] sm:$0xff]
        %v1373 = vld [vmem:[#allocation2 + $0x80] sm:$0xff]
        %v1374 = vld [vmem:[#allocation2 + $0x88] sm:$0xff]
        %v1375 = vld [vmem:[#allocation2 + $0x98] sm:$0xff]
        %v1376 = vld [vmem:[#allocation2 + $0xa0] sm:$0xff]
        %v1377 = vld [vmem:[#allocation2 + $0xb0] sm:$0xff]
        %v1378 = vld [vmem:[#allocation2 + $0xb8] sm:$0xff]
        %v1379 = vpack.c.bf16 %v1332, %v1331
        %v1380 = vpack.c.bf16 %v1348, %v1347
        %v1381 = vpack.c.bf16 %v1364, %v1363
        %v1382 = vpack.c.bf16 %v1334, %v1333
        %v1383 = vpack.c.bf16 %v1350, %v1349
        %v1384 = vpack.c.bf16 %v1366, %v1365
        %v1385 = vpack.c.bf16 %v1336, %v1335
        %v1386 = vpack.c.bf16 %v1352, %v1351
        %v1387 = vpack.c.bf16 %v1368, %v1367
        %v1388 = vpack.c.bf16 %v1338, %v1337
        %v1389 = vpack.c.bf16 %v1354, %v1353
        %v1390 = vpack.c.bf16 %v1370, %v1369
        %v1391 = vpack.c.bf16 %v1340, %v1339
        %v1392 = vpack.c.bf16 %v1356, %v1355
        %v1393 = vpack.c.bf16 %v1372, %v1371
        %v1394 = vpack.c.bf16 %v1342, %v1341
        %v1395 = vpack.c.bf16 %v1358, %v1357
        %v1396 = vpack.c.bf16 %v1374, %v1373
        %v1397 = vpack.c.bf16 %v1344, %v1343
        %v1398 = vpack.c.bf16 %v1360, %v1359
        %v1399 = vpack.c.bf16 %v1376, %v1375
        %v1400 = vpack.c.bf16 %v1346, %v1345
        %v1401 = vpack.c.bf16 %v1362, %v1361
        %v1402 = vpack.c.bf16 %v1378, %v1377
        %v1403 = vld [vmem:[#allocation8] sm:$0xf]
        %v1404 = vld [vmem:[#allocation8 + $0x4] sm:$0xf]
        %v1405 = vld [vmem:[#allocation8 + $0x8] sm:$0xf]
        %v1406 = vld [vmem:[#allocation8 + $0xc] sm:$0xf]
        %v1407 = vld [vmem:[#allocation8 + $0x10] sm:$0xf]
        %v1408 = vld [vmem:[#allocation8 + $0x14] sm:$0xf]
        %v1409 = vld [vmem:[#allocation8 + $0x18] sm:$0xf]
        %v1410 = vld [vmem:[#allocation8 + $0x1c] sm:$0xf]
        %v1411 = vld [vmem:[#allocation8 + $0x20] sm:$0xf]
        %v1412 = vld [vmem:[#allocation8 + $0x24] sm:$0xf]
        %v1413 = vld [vmem:[#allocation8 + $0x28] sm:$0xf]
        %v1414 = vld [vmem:[#allocation8 + $0x2c] sm:$0xf]
        %v1415 = vld [vmem:[#allocation8 + $0x30] sm:$0xf]
        %v1416 = vld [vmem:[#allocation8 + $0x34] sm:$0xf]
        %v1417 = vld [vmem:[#allocation8 + $0x38] sm:$0xf]
        %v1418 = vld [vmem:[#allocation8 + $0x3c] sm:$0xf]
        %v1419 = vld [vmem:[#allocation8 + $0x40] sm:$0xf]
        %v1420 = vld [vmem:[#allocation8 + $0x44] sm:$0xf]
        %v1421 = vld [vmem:[#allocation8 + $0x48] sm:$0xf]
        %v1422 = vld [vmem:[#allocation8 + $0x4c] sm:$0xf]
        %v1423 = vld [vmem:[#allocation8 + $0x50] sm:$0xf]
        %v1424 = vld [vmem:[#allocation8 + $0x54] sm:$0xf]
        %v1425 = vld [vmem:[#allocation8 + $0x58] sm:$0xf]
        %v1426 = vld [vmem:[#allocation8 + $0x5c] sm:$0xf]
        %v1427 = vld [vmem:[#allocation8 + $0x60] sm:$0xf]
        %v1428 = vld [vmem:[#allocation8 + $0x64] sm:$0xf]
        %v1429 = vld [vmem:[#allocation8 + $0x68] sm:$0xf]
        %v1430 = vld [vmem:[#allocation8 + $0x6c] sm:$0xf]
        %v1431 = vld [vmem:[#allocation8 + $0x70] sm:$0xf]
        %v1432 = vld [vmem:[#allocation8 + $0x74] sm:$0xf]
        %v1433 = vld [vmem:[#allocation8 + $0x78] sm:$0xf]
        %v1434 = vld [vmem:[#allocation8 + $0x7c] sm:$0xf]
        %v1435 = vld [vmem:[#allocation8 + $0x80] sm:$0xf]
        %v1436 = vld [vmem:[#allocation8 + $0x84] sm:$0xf]
        %v1437 = vld [vmem:[#allocation8 + $0x88] sm:$0xf]
        %v1438 = vld [vmem:[#allocation8 + $0x8c] sm:$0xf]
        %v1439 = vld [vmem:[#allocation8 + $0x90] sm:$0xf]
        %v1440 = vld [vmem:[#allocation8 + $0x94] sm:$0xf]
        %v1441 = vld [vmem:[#allocation8 + $0x98] sm:$0xf]
        %v1442 = vld [vmem:[#allocation8 + $0x9c] sm:$0xf]
        %v1443 = vld [vmem:[#allocation8 + $0xa0] sm:$0xf]
        %v1444 = vld [vmem:[#allocation8 + $0xa4] sm:$0xf]
        %v1445 = vld [vmem:[#allocation8 + $0xa8] sm:$0xf]
        %v1446 = vld [vmem:[#allocation8 + $0xac] sm:$0xf]
        %v1447 = vld [vmem:[#allocation8 + $0xb0] sm:$0xf]
        %v1448 = vld [vmem:[#allocation8 + $0xb4] sm:$0xf]
        %v1449 = vld [vmem:[#allocation8 + $0xb8] sm:$0xf]
        %v1450 = vld [vmem:[#allocation8 + $0xbc] sm:$0xf]
        %v1451 = vld [vmem:[%s4] sm:$0x1]
        %v1453 = vlaneseq
        %v1454 = vshrl.u32 %v1453, 7
        %v1455 = vsub.s32 0, %v1454
        %v1456 = vrot.slane %v1451, %v1455
        %v1506 = vunpack.c.l.b16 %v1403
        %v1507 = vunpack.c.l.b16 %v1404
        %v1508 = vunpack.c.l.b16 %v1405
        %v1509 = vunpack.c.l.b16 %v1406
        %v1510 = vunpack.c.l.b16 %v1407
        %v1511 = vunpack.c.l.b16 %v1408
        %v1512 = vunpack.c.l.b16 %v1409
        %v1513 = vunpack.c.l.b16 %v1410
        %v1514 = vunpack.c.l.b16 %v1411
        %v1515 = vunpack.c.l.b16 %v1412
        %v1516 = vunpack.c.l.b16 %v1413
        %v1517 = vunpack.c.l.b16 %v1414
        %v1518 = vunpack.c.l.b16 %v1415
        %v1519 = vunpack.c.l.b16 %v1416
        %v1520 = vunpack.c.l.b16 %v1417
        %v1521 = vunpack.c.l.b16 %v1418
        %v1522 = vunpack.c.l.b16 %v1419
        %v1523 = vunpack.c.l.b16 %v1420
        %v1524 = vunpack.c.l.b16 %v1421
        %v1525 = vunpack.c.l.b16 %v1422
        %v1526 = vunpack.c.l.b16 %v1423
        %v1527 = vunpack.c.l.b16 %v1424
        %v1528 = vunpack.c.l.b16 %v1425
        %v1529 = vunpack.c.l.b16 %v1426
        %v1530 = vunpack.c.l.b16 %v1427
        %v1531 = vunpack.c.l.b16 %v1428
        %v1532 = vunpack.c.l.b16 %v1429
        %v1533 = vunpack.c.l.b16 %v1430
        %v1534 = vunpack.c.l.b16 %v1431
        %v1535 = vunpack.c.l.b16 %v1432
        %v1536 = vunpack.c.l.b16 %v1433
        %v1537 = vunpack.c.l.b16 %v1434
        %v1538 = vunpack.c.l.b16 %v1435
        %v1539 = vunpack.c.l.b16 %v1436
        %v1540 = vunpack.c.l.b16 %v1437
        %v1541 = vunpack.c.l.b16 %v1438
        %v1542 = vunpack.c.l.b16 %v1439
        %v1543 = vunpack.c.l.b16 %v1440
        %v1544 = vunpack.c.l.b16 %v1441
        %v1545 = vunpack.c.l.b16 %v1442
        %v1546 = vunpack.c.l.b16 %v1443
        %v1547 = vunpack.c.l.b16 %v1444
        %v1548 = vunpack.c.l.b16 %v1445
        %v1549 = vunpack.c.l.b16 %v1446
        %v1550 = vunpack.c.l.b16 %v1447
        %v1551 = vunpack.c.l.b16 %v1448
        %v1552 = vunpack.c.l.b16 %v1449
        %v1553 = vunpack.c.l.b16 %v1450
        %v1554 = vpack.c.b16 %v1507, %v1506
        %v1555 = vpack.c.b16 %v1509, %v1508
        %v1556 = vpack.c.b16 %v1511, %v1510
        %v1557 = vpack.c.b16 %v1513, %v1512
        %v1558 = vpack.c.b16 %v1515, %v1514
        %v1559 = vpack.c.b16 %v1517, %v1516
        %v1560 = vpack.c.b16 %v1519, %v1518
        %v1561 = vpack.c.b16 %v1521, %v1520
        %v1562 = vpack.c.b16 %v1523, %v1522
        %v1563 = vpack.c.b16 %v1525, %v1524
        %v1564 = vpack.c.b16 %v1527, %v1526
        %v1565 = vpack.c.b16 %v1529, %v1528
        %v1566 = vpack.c.b16 %v1531, %v1530
        %v1567 = vpack.c.b16 %v1533, %v1532
        %v1568 = vpack.c.b16 %v1535, %v1534
        %v1569 = vpack.c.b16 %v1537, %v1536
        %v1570 = vpack.c.b16 %v1539, %v1538
        %v1571 = vpack.c.b16 %v1541, %v1540
        %v1572 = vpack.c.b16 %v1543, %v1542
        %v1573 = vpack.c.b16 %v1545, %v1544
        %v1574 = vpack.c.b16 %v1547, %v1546
        %v1575 = vpack.c.b16 %v1549, %v1548
        %v1576 = vpack.c.b16 %v1551, %v1550
        %v1577 = vpack.c.b16 %v1553, %v1552
        %1602 = vmatprep.subr.bf16.mxu0 0
        %1603 = vmatpush1.bf16.msra.mxu0 %v1554
        %1604 = vmatprep.subr.bf16.mxu0 0
        %1605 = vmatpush1.bf16.msra.mxu0 %v1555
        %1606 = vmatprep.subr.bf16.mxu0 0
        %1607 = vmatpush1.bf16.msra.mxu0 %v1556
        %1608 = vmatprep.subr.bf16.mxu0 0
        %1609 = vmatpush1.bf16.msra.mxu0 %v1557
        %1610 = vmatprep.subr.bf16.mxu0 0
        %1611 = vmatpush1.bf16.msra.mxu0 %v1558
        %1612 = vmatprep.subr.bf16.mxu0 0
        %1613 = vmatpush1.bf16.msra.mxu0 %v1559
        %1614 = vmatprep.subr.bf16.mxu0 0
        %1615 = vmatpush1.bf16.msra.mxu0 %v1560
        %1616 = vmatprep.subr.bf16.mxu0 0
        %1617 = vmatpush1.bf16.msra.mxu0 %v1561
        %1618 = vmatprep.subr.bf16.mxu0 0
        %1619 = vmatpush1.bf16.msra.mxu0 %v1562
        %1620 = vmatprep.subr.bf16.mxu0 0
        %1621 = vmatpush1.bf16.msra.mxu0 %v1563
        %1622 = vmatprep.subr.bf16.mxu0 0
        %1623 = vmatpush1.bf16.msra.mxu0 %v1564
        %1624 = vmatprep.subr.bf16.mxu0 0
        %1625 = vmatpush1.bf16.msra.mxu0 %v1565
        %1626 = vmatprep.subr.bf16.mxu0 0
        %1627 = vmatpush1.bf16.msra.mxu0 %v1566
        %1628 = vmatprep.subr.bf16.mxu0 0
        %1629 = vmatpush1.bf16.msra.mxu0 %v1567
        %1630 = vmatprep.subr.bf16.mxu0 0
        %1631 = vmatpush1.bf16.msra.mxu0 %v1568
        %1632 = vmatprep.subr.bf16.mxu0 0
        %1633 = vmatpush1.bf16.msra.mxu0 %v1569
        %1634 = vmatprep.mubr.bf16.mxu0 %v1380
        %1635 = vmatmul.mubr.bf16.gmra.mrb[0].mxu0 %v1379
        %v1636 = vpop.f32.mrb[0].mxu0
        %v1637 = vadd.f32 %v1456, %v1636
        %v1638 = vpop.f32.mrb[0].mxu0
        %v1639 = vpop.f32.mrb[0].mxu0
        %v1640 = vadd.f32 %v1456, %v1639
        %v1641 = vpop.f32.mrb[0].mxu0
        %1642 = vmatprep.mubr.bf16.mxu0 %v1383
        %1643 = vmatmul.mubr.bf16.gmra.mrb[0].mxu0 %v1382
        %v1644 = vpop.f32.mrb[0].mxu0
        %v1645 = vadd.f32 %v1456, %v1644
        %v1646 = vpop.f32.mrb[0].mxu0
        %v1647 = vpop.f32.mrb[0].mxu0
        %v1648 = vadd.f32 %v1456, %v1647
        %v1649 = vpop.f32.mrb[0].mxu0
        %1650 = vmatprep.mubr.bf16.mxu0 %v1386
        %1651 = vmatmul.mubr.bf16.gmra.mrb[0].mxu0 %v1385
        %v1652 = vpop.f32.mrb[0].mxu0
        %v1653 = vadd.f32 %v1456, %v1652
        %v1654 = vpop.f32.mrb[0].mxu0
        %v1655 = vpop.f32.mrb[0].mxu0
        %v1656 = vadd.f32 %v1456, %v1655
        %v1657 = vpop.f32.mrb[0].mxu0
        %1658 = vmatprep.mubr.bf16.mxu0 %v1389
        %1659 = vmatmul.mubr.bf16.gmra.mrb[0].mxu0 %v1388
        %v1660 = vpop.f32.mrb[0].mxu0
        %v1661 = vadd.f32 %v1456, %v1660
        %v1662 = vpop.f32.mrb[0].mxu0
        %v1663 = vpop.f32.mrb[0].mxu0
        %v1664 = vadd.f32 %v1456, %v1663
        %v1665 = vpop.f32.mrb[0].mxu0
        %1666 = vmatprep.mubr.bf16.mxu0 %v1392
        %1667 = vmatmul.mubr.bf16.gmra.mrb[0].mxu0 %v1391
        %v1668 = vpop.f32.mrb[0].mxu0
        %v1669 = vadd.f32 %v1456, %v1668
        %v1670 = vpop.f32.mrb[0].mxu0
        %v1671 = vpop.f32.mrb[0].mxu0
        %v1672 = vadd.f32 %v1456, %v1671
        %v1673 = vpop.f32.mrb[0].mxu0
        %1674 = vmatprep.mubr.bf16.mxu0 %v1395
        %1675 = vmatmul.mubr.bf16.gmra.mrb[0].mxu0 %v1394
        %v1676 = vpop.f32.mrb[0].mxu0
        %v1677 = vadd.f32 %v1456, %v1676
        %v1678 = vpop.f32.mrb[0].mxu0
        %v1679 = vpop.f32.mrb[0].mxu0
        %v1680 = vadd.f32 %v1456, %v1679
        %v1681 = vpop.f32.mrb[0].mxu0
        %1682 = vmatprep.mubr.bf16.mxu0 %v1398
        %1683 = vmatmul.mubr.bf16.gmra.mrb[0].mxu0 %v1397
        %v1684 = vpop.f32.mrb[0].mxu0
        %v1685 = vadd.f32 %v1456, %v1684
        %v1686 = vpop.f32.mrb[0].mxu0
        %v1687 = vpop.f32.mrb[0].mxu0
        %v1688 = vadd.f32 %v1456, %v1687
        %v1689 = vpop.f32.mrb[0].mxu0
        %1690 = vmatprep.mubr.bf16.mxu0 %v1401
        %1691 = vmatmul.mubr.bf16.gmra.mrb[0].mxu0 %v1400
        %v1692 = vpop.f32.mrb[0].mxu0
        %v1693 = vadd.f32 %v1456, %v1692
        %v1694 = vpop.f32.mrb[0].mxu0
        %v1695 = vpop.f32.mrb[0].mxu0
        %v1696 = vadd.f32 %v1456, %v1695
        %v1697 = vpop.f32.mrb[0].mxu0
        %1698 = vdwg.mxu0
        %1699 = vmatprep.subr.bf16.mxu0 0
        %1700 = vmatpush1.bf16.msra.mxu0 %v1570
        %1701 = vmatprep.subr.bf16.mxu0 0
        %1702 = vmatpush1.bf16.msra.mxu0 %v1571
        %1703 = vmatprep.subr.bf16.mxu0 0
        %1704 = vmatpush1.bf16.msra.mxu0 %v1572
        %1705 = vmatprep.subr.bf16.mxu0 0
        %1706 = vmatpush1.bf16.msra.mxu0 %v1573
        %1707 = vmatprep.subr.bf16.mxu0 0
        %1708 = vmatpush1.bf16.msra.mxu0 %v1574
        %1709 = vmatprep.subr.bf16.mxu0 0
        %1710 = vmatpush1.bf16.msra.mxu0 %v1575
        %1711 = vmatprep.subr.bf16.mxu0 0
        %1712 = vmatpush1.bf16.msra.mxu0 %v1576
        %1713 = vmatprep.subr.bf16.mxu0 0
        %1714 = vmatpush1.bf16.msra.mxu0 %v1577
        %1715 = vmatprep.subr.bf16.mxu0 0
        %1716 = vmatpush1.bf16.msra.mxu0 0
        %1717 = vmatprep.subr.bf16.mxu0 0
        %1718 = vmatpush1.bf16.msra.mxu0 0
        %1719 = vmatprep.subr.bf16.mxu0 0
        %1720 = vmatpush1.bf16.msra.mxu0 0
        %1721 = vmatprep.subr.bf16.mxu0 0
        %1722 = vmatpush1.bf16.msra.mxu0 0
        %1723 = vmatprep.subr.bf16.mxu0 0
        %1724 = vmatpush1.bf16.msra.mxu0 0
        %1725 = vmatprep.subr.bf16.mxu0 0
        %1726 = vmatpush1.bf16.msra.mxu0 0
        %1727 = vmatprep.subr.bf16.mxu0 0
        %1728 = vmatpush1.bf16.msra.mxu0 0
        %1729 = vmatprep.subr.bf16.mxu0 0
        %1730 = vmatpush1.bf16.msra.mxu0 0
        %1731 = vmatprep.mubr.bf16.mxu0 0
        %1732 = vmatmul.mubr.bf16.gmra.mrb[0].mxu0 %v1381
        %v1733 = vpop.f32.mrb[0].mxu0
        %v1734 = vadd.f32 %v1637, %v1733
        %v1735 = vpop.f32.mrb[0].mxu0
        %v1736 = vpop.f32.mrb[0].mxu0
        %v1737 = vadd.f32 %v1640, %v1736
        %v1738 = vpop.f32.mrb[0].mxu0
        %1739 = vmatprep.mubr.bf16.mxu0 0
        %1740 = vmatmul.mubr.bf16.gmra.mrb[0].mxu0 %v1384
        %v1741 = vpop.f32.mrb[0].mxu0
        %v1742 = vadd.f32 %v1645, %v1741
        %v1743 = vpop.f32.mrb[0].mxu0
        %v1744 = vpop.f32.mrb[0].mxu0
        %v1745 = vadd.f32 %v1648, %v1744
        %v1746 = vpop.f32.mrb[0].mxu0
        %1747 = vmatprep.mubr.bf16.mxu0 0
        %1748 = vmatmul.mubr.bf16.gmra.mrb[0].mxu0 %v1387
        %v1749 = vpop.f32.mrb[0].mxu0
        %v1750 = vadd.f32 %v1653, %v1749
        %v1751 = vpop.f32.mrb[0].mxu0
        %v1752 = vpop.f32.mrb[0].mxu0
        %v1753 = vadd.f32 %v1656, %v1752
        %v1754 = vpop.f32.mrb[0].mxu0
        %1755 = vmatprep.mubr.bf16.mxu0 0
        %1756 = vmatmul.mubr.bf16.gmra.mrb[0].mxu0 %v1390
        %v1757 = vpop.f32.mrb[0].mxu0
        %v1758 = vadd.f32 %v1661, %v1757
        %v1759 = vpop.f32.mrb[0].mxu0
        %v1760 = vpop.f32.mrb[0].mxu0
        %v1761 = vadd.f32 %v1664, %v1760
        %v1762 = vpop.f32.mrb[0].mxu0
        %1763 = vmatprep.mubr.bf16.mxu0 0
        %1764 = vmatmul.mubr.bf16.gmra.mrb[0].mxu0 %v1393
        %v1765 = vpop.f32.mrb[0].mxu0
        %v1766 = vadd.f32 %v1669, %v1765
        %v1767 = vpop.f32.mrb[0].mxu0
        %v1768 = vpop.f32.mrb[0].mxu0
        %v1769 = vadd.f32 %v1672, %v1768
        %v1770 = vpop.f32.mrb[0].mxu0
        %1771 = vmatprep.mubr.bf16.mxu0 0
        %1772 = vmatmul.mubr.bf16.gmra.mrb[0].mxu0 %v1396
        %v1773 = vpop.f32.mrb[0].mxu0
        %v1774 = vadd.f32 %v1677, %v1773
        %v1775 = vpop.f32.mrb[0].mxu0
        %v1776 = vpop.f32.mrb[0].mxu0
        %v1777 = vadd.f32 %v1680, %v1776
        %v1778 = vpop.f32.mrb[0].mxu0
        %1779 = vmatprep.mubr.bf16.mxu0 0
        %1780 = vmatmul.mubr.bf16.gmra.mrb[0].mxu0 %v1399
        %v1781 = vpop.f32.mrb[0].mxu0
        %v1782 = vadd.f32 %v1685, %v1781
        %v1783 = vpop.f32.mrb[0].mxu0
        %v1784 = vpop.f32.mrb[0].mxu0
        %v1785 = vadd.f32 %v1688, %v1784
        %v1786 = vpop.f32.mrb[0].mxu0
        %1787 = vmatprep.mubr.bf16.mxu0 0
        %1788 = vmatmul.mubr.bf16.gmra.mrb[0].mxu0 %v1402
        %v1789 = vpop.f32.mrb[0].mxu0
        %v1790 = vadd.f32 %v1693, %v1789
        %v1791 = vpop.f32.mrb[0].mxu0
        %v1792 = vpop.f32.mrb[0].mxu0
        %v1793 = vadd.f32 %v1696, %v1792
        %v1794 = vpop.f32.mrb[0].mxu0
        %1795 = vdwg.mxu0
        %v1796 = vmax.f32 %v1734, 0.0
        %v1797 = vmax.f32 %v1737, 0.0
        %v1798 = vmax.f32 %v1742, 0.0
        %v1799 = vmax.f32 %v1745, 0.0
        %v1800 = vmax.f32 %v1750, 0.0
        %v1801 = vmax.f32 %v1753, 0.0
        %v1802 = vmax.f32 %v1758, 0.0
        %v1803 = vmax.f32 %v1761, 0.0
        %v1804 = vmax.f32 %v1766, 0.0
        %v1805 = vmax.f32 %v1769, 0.0
        %v1806 = vmax.f32 %v1774, 0.0
        %v1807 = vmax.f32 %v1777, 0.0
        %v1808 = vmax.f32 %v1782, 0.0
        %v1809 = vmax.f32 %v1785, 0.0
        %v1810 = vmax.f32 %v1790, 0.0
        %v1811 = vmax.f32 %v1793, 0.0
        %v1812 = vadd.f32 %v1796, %v756
        %v1813 = vadd.f32 %v1797, %v759
        %v1814 = vadd.f32 %v1798, %v764
        %v1815 = vadd.f32 %v1799, %v767
        %v1816 = vadd.f32 %v1800, %v772
        %v1817 = vadd.f32 %v1801, %v775
        %v1818 = vadd.f32 %v1802, %v780
        %v1819 = vadd.f32 %v1803, %v783
        %v1820 = vadd.f32 %v1804, %v788
        %v1821 = vadd.f32 %v1805, %v791
        %v1822 = vadd.f32 %v1806, %v796
        %v1823 = vadd.f32 %v1807, %v799
        %v1824 = vadd.f32 %v1808, %v804
        %v1825 = vadd.f32 %v1809, %v807
        %v1826 = vadd.f32 %v1810, %v812
        %v1827 = vadd.f32 %v1811, %v815
        %v1828 = vmax.f32 %v1812, 0.0
        %v1829 = vmax.f32 %v1813, 0.0
        %v1830 = vmax.f32 %v1814, 0.0
        %v1831 = vmax.f32 %v1815, 0.0
        %v1832 = vmax.f32 %v1816, 0.0
        %v1833 = vmax.f32 %v1817, 0.0
        %v1834 = vmax.f32 %v1818, 0.0
        %v1835 = vmax.f32 %v1819, 0.0
        %v1836 = vmax.f32 %v1820, 0.0
        %v1837 = vmax.f32 %v1821, 0.0
        %v1838 = vmax.f32 %v1822, 0.0
        %v1839 = vmax.f32 %v1823, 0.0
        %v1840 = vmax.f32 %v1824, 0.0
        %v1841 = vmax.f32 %v1825, 0.0
        %v1842 = vmax.f32 %v1826, 0.0
        %v1843 = vmax.f32 %v1827, 0.0
        %v1844 = vpack.c.bf16 %v1829, %v1828
        %v1845 = vpack.c.bf16 %v1831, %v1830
        %v1846 = vpack.c.bf16 %v1833, %v1832
        %v1847 = vpack.c.bf16 %v1835, %v1834
        %v1848 = vpack.c.bf16 %v1837, %v1836
        %v1849 = vpack.c.bf16 %v1839, %v1838
        %v1850 = vpack.c.bf16 %v1841, %v1840
        %v1851 = vpack.c.bf16 %v1843, %v1842
        %v1852 = vld [vmem:[#allocation14] sm:$0xf]
        %v1853 = vld [vmem:[#allocation14 + $0x4] sm:$0xf]
        %v1854 = vld [vmem:[#allocation14 + $0x8] sm:$0xf]
        %v1855 = vld [vmem:[#allocation14 + $0xc] sm:$0xf]
        %v1856 = vld [vmem:[#allocation14 + $0x10] sm:$0xf]
        %v1857 = vld [vmem:[#allocation14 + $0x14] sm:$0xf]
        %v1858 = vld [vmem:[#allocation14 + $0x18] sm:$0xf]
        %v1859 = vld [vmem:[#allocation14 + $0x1c] sm:$0xf]
        %v1860 = vld [vmem:[#allocation14 + $0x20] sm:$0xf]
        %v1861 = vld [vmem:[#allocation14 + $0x24] sm:$0xf]
        %v1862 = vld [vmem:[#allocation14 + $0x28] sm:$0xf]
        %v1863 = vld [vmem:[#allocation14 + $0x2c] sm:$0xf]
        %v1864 = vld [vmem:[#allocation14 + $0x30] sm:$0xf]
        %v1865 = vld [vmem:[#allocation14 + $0x34] sm:$0xf]
        %v1866 = vld [vmem:[#allocation14 + $0x38] sm:$0xf]
        %v1867 = vld [vmem:[#allocation14 + $0x3c] sm:$0xf]
        %v1868 = vld [vmem:[%s12] sm:$0x1]
        %v1870 = vlaneseq
        %v1871 = vshrl.u32 %v1870, 7
        %v1872 = vsub.s32 0, %v1871
        %v1873 = vrot.slane %v1868, %v1872
        %v1891 = vunpack.c.l.b16 %v1852
        %v1892 = vunpack.c.l.b16 %v1853
        %v1893 = vunpack.c.l.b16 %v1854
        %v1894 = vunpack.c.l.b16 %v1855
        %v1895 = vunpack.c.l.b16 %v1856
        %v1896 = vunpack.c.l.b16 %v1857
        %v1897 = vunpack.c.l.b16 %v1858
        %v1898 = vunpack.c.l.b16 %v1859
        %v1899 = vunpack.c.l.b16 %v1860
        %v1900 = vunpack.c.l.b16 %v1861
        %v1901 = vunpack.c.l.b16 %v1862
        %v1902 = vunpack.c.l.b16 %v1863
        %v1903 = vunpack.c.l.b16 %v1864
        %v1904 = vunpack.c.l.b16 %v1865
        %v1905 = vunpack.c.l.b16 %v1866
        %v1906 = vunpack.c.l.b16 %v1867
        %v1907 = vpack.c.b16 %v1892, %v1891
        %v1908 = vpack.c.b16 %v1894, %v1893
        %v1909 = vpack.c.b16 %v1896, %v1895
        %v1910 = vpack.c.b16 %v1898, %v1897
        %v1911 = vpack.c.b16 %v1900, %v1899
        %v1912 = vpack.c.b16 %v1902, %v1901
        %v1913 = vpack.c.b16 %v1904, %v1903
        %v1914 = vpack.c.b16 %v1906, %v1905
        %1923 = vmatprep.subr.bf16.mxu0 0
        %1924 = vmatpush1.bf16.msra.mxu0 %v1907
        %1925 = vmatprep.subr.bf16.mxu0 0
        %1926 = vmatpush1.bf16.msra.mxu0 %v1908
        %1927 = vmatprep.subr.bf16.mxu0 0
        %1928 = vmatpush1.bf16.msra.mxu0 %v1909
        %1929 = vmatprep.subr.bf16.mxu0 0
        %1930 = vmatpush1.bf16.msra.mxu0 %v1910
        %1931 = vmatprep.subr.bf16.mxu0 0
        %1932 = vmatpush1.bf16.msra.mxu0 %v1911
        %1933 = vmatprep.subr.bf16.mxu0 0
        %1934 = vmatpush1.bf16.msra.mxu0 %v1912
        %1935 = vmatprep.subr.bf16.mxu0 0
        %1936 = vmatpush1.bf16.msra.mxu0 %v1913
        %1937 = vmatprep.subr.bf16.mxu0 0
        %1938 = vmatpush1.bf16.msra.mxu0 %v1914
        %1939 = vmatprep.subr.bf16.mxu0 0
        %1940 = vmatpush1.bf16.msra.mxu0 0
        %1941 = vmatprep.subr.bf16.mxu0 0
        %1942 = vmatpush1.bf16.msra.mxu0 0
        %1943 = vmatprep.subr.bf16.mxu0 0
        %1944 = vmatpush1.bf16.msra.mxu0 0
        %1945 = vmatprep.subr.bf16.mxu0 0
        %1946 = vmatpush1.bf16.msra.mxu0 0
        %1947 = vmatprep.subr.bf16.mxu0 0
        %1948 = vmatpush1.bf16.msra.mxu0 0
        %1949 = vmatprep.subr.bf16.mxu0 0
        %1950 = vmatpush1.bf16.msra.mxu0 0
        %1951 = vmatprep.subr.bf16.mxu0 0
        %1952 = vmatpush1.bf16.msra.mxu0 0
        %1953 = vmatprep.subr.bf16.mxu0 0
        %1954 = vmatpush1.bf16.msra.mxu0 0
        %1955 = vmatprep.mubr.bf16.mxu0 0
        %1956 = vmatmul.mubr.bf16.gmra.mrb[0].mxu0 %v1844
        %v1957 = vpop.f32.mrb[0].mxu0
        %v1958 = vadd.f32 %v1873, %v1957
        %v1959 = vpop.f32.mrb[0].mxu0
        %v1960 = vpop.f32.mrb[0].mxu0
        %v1961 = vadd.f32 %v1873, %v1960
        %v1962 = vpop.f32.mrb[0].mxu0
        %1963 = vmatprep.mubr.bf16.mxu0 0
        %1964 = vmatmul.mubr.bf16.gmra.mrb[0].mxu0 %v1845
        %v1965 = vpop.f32.mrb[0].mxu0
        %v1966 = vadd.f32 %v1873, %v1965
        %v1967 = vpop.f32.mrb[0].mxu0
        %v1968 = vpop.f32.mrb[0].mxu0
        %v1969 = vadd.f32 %v1873, %v1968
        %v1970 = vpop.f32.mrb[0].mxu0
        %1971 = vmatprep.mubr.bf16.mxu0 0
        %1972 = vmatmul.mubr.bf16.gmra.mrb[0].mxu0 %v1846
        %v1973 = vpop.f32.mrb[0].mxu0
        %v1974 = vadd.f32 %v1873, %v1973
        %v1975 = vpop.f32.mrb[0].mxu0
        %v1976 = vpop.f32.mrb[0].mxu0
        %v1977 = vadd.f32 %v1873, %v1976
        %v1978 = vpop.f32.mrb[0].mxu0
        %1979 = vmatprep.mubr.bf16.mxu0 0
        %1980 = vmatmul.mubr.bf16.gmra.mrb[0].mxu0 %v1847
        %v1981 = vpop.f32.mrb[0].mxu0
        %v1982 = vadd.f32 %v1873, %v1981
        %v1983 = vpop.f32.mrb[0].mxu0
        %v1984 = vpop.f32.mrb[0].mxu0
        %v1985 = vadd.f32 %v1873, %v1984
        %v1986 = vpop.f32.mrb[0].mxu0
        %1987 = vmatprep.mubr.bf16.mxu0 0
        %1988 = vmatmul.mubr.bf16.gmra.mrb[0].mxu0 %v1848
        %v1989 = vpop.f32.mrb[0].mxu0
        %v1990 = vadd.f32 %v1873, %v1989
        %v1991 = vpop.f32.mrb[0].mxu0
        %v1992 = vpop.f32.mrb[0].mxu0
        %v1993 = vadd.f32 %v1873, %v1992
        %v1994 = vpop.f32.mrb[0].mxu0
        %1995 = vmatprep.mubr.bf16.mxu0 0
        %1996 = vmatmul.mubr.bf16.gmra.mrb[0].mxu0 %v1849
        %v1997 = vpop.f32.mrb[0].mxu0
        %v1998 = vadd.f32 %v1873, %v1997
        %v1999 = vpop.f32.mrb[0].mxu0
        %v2000 = vpop.f32.mrb[0].mxu0
        %v2001 = vadd.f32 %v1873, %v2000
        %v2002 = vpop.f32.mrb[0].mxu0
        %2003 = vmatprep.mubr.bf16.mxu0 0
        %2004 = vmatmul.mubr.bf16.gmra.mrb[0].mxu0 %v1850
        %v2005 = vpop.f32.mrb[0].mxu0
        %v2006 = vadd.f32 %v1873, %v2005
        %v2007 = vpop.f32.mrb[0].mxu0
        %v2008 = vpop.f32.mrb[0].mxu0
        %v2009 = vadd.f32 %v1873, %v2008
        %v2010 = vpop.f32.mrb[0].mxu0
        %2011 = vmatprep.mubr.bf16.mxu0 0
        %2012 = vmatmul.mubr.bf16.gmra.mrb[0].mxu0 %v1851
        %v2013 = vpop.f32.mrb[0].mxu0
        %v2014 = vadd.f32 %v1873, %v2013
        %v2015 = vpop.f32.mrb[0].mxu0
        %v2016 = vpop.f32.mrb[0].mxu0
        %v2017 = vadd.f32 %v1873, %v2016
        %v2018 = vpop.f32.mrb[0].mxu0
        %2019 = vdwg.mxu0
        %2020 = vst [vmem:[#allocation2 + $0x8] sm:$0xff] %v1828
        %2021 = vst [vmem:[#allocation2 + $0x10] sm:$0xff] %v1829
        %2022 = vst [vmem:[#allocation2 + $0x20] sm:$0xff] %v1830
        %2023 = vst [vmem:[#allocation2 + $0x28] sm:$0xff] %v1831
        %2024 = vst [vmem:[#allocation2 + $0x38] sm:$0xff] %v1832
        %2025 = vst [vmem:[#allocation2 + $0x40] sm:$0xff] %v1833
        %2026 = vst [vmem:[#allocation2 + $0x50] sm:$0xff] %v1834
        %2027 = vst [vmem:[#allocation2 + $0x58] sm:$0xff] %v1835
        %2028 = vst [vmem:[#allocation2 + $0x68] sm:$0xff] %v1836
        %2029 = vst [vmem:[#allocation2 + $0x70] sm:$0xff] %v1837
        %2030 = vst [vmem:[#allocation2 + $0x80] sm:$0xff] %v1838
        %2031 = vst [vmem:[#allocation2 + $0x88] sm:$0xff] %v1839
        %2032 = vst [vmem:[#allocation2 + $0x98] sm:$0xff] %v1840
        %2033 = vst [vmem:[#allocation2 + $0xa0] sm:$0xff] %v1841
        %2034 = vst [vmem:[#allocation2 + $0xb0] sm:$0xff] %v1842
        %2035 = vst [vmem:[#allocation2 + $0xb8] sm:$0xff] %v1843
        %v2036 = vld [vmem:[#allocation2 + $0x4] sm:$0xff]
        %v2037 = vld [vmem:[#allocation2 + $0xc] sm:$0xff]
        %v2038 = vld [vmem:[#allocation2 + $0x1c] sm:$0xff]
        %v2039 = vld [vmem:[#allocation2 + $0x24] sm:$0xff]
        %v2040 = vld [vmem:[#allocation2 + $0x34] sm:$0xff]
        %v2041 = vld [vmem:[#allocation2 + $0x3c] sm:$0xff]
        %v2042 = vld [vmem:[#allocation2 + $0x4c] sm:$0xff]
        %v2043 = vld [vmem:[#allocation2 + $0x54] sm:$0xff]
        %v2044 = vld [vmem:[#allocation2 + $0x64] sm:$0xff]
        %v2045 = vld [vmem:[#allocation2 + $0x6c] sm:$0xff]
        %v2046 = vld [vmem:[#allocation2 + $0x7c] sm:$0xff]
        %v2047 = vld [vmem:[#allocation2 + $0x84] sm:$0xff]
        %v2048 = vld [vmem:[#allocation2 + $0x94] sm:$0xff]
        %v2049 = vld [vmem:[#allocation2 + $0x9c] sm:$0xff]
        %v2050 = vld [vmem:[#allocation2 + $0xac] sm:$0xff]
        %v2051 = vld [vmem:[#allocation2 + $0xb4] sm:$0xff]
        %v2052 = vld [vmem:[#allocation2 + $0x6] sm:$0xff]
        %v2053 = vld [vmem:[#allocation2 + $0xe] sm:$0xff]
        %v2054 = vld [vmem:[#allocation2 + $0x1e] sm:$0xff]
        %v2055 = vld [vmem:[#allocation2 + $0x26] sm:$0xff]
        %v2056 = vld [vmem:[#allocation2 + $0x36] sm:$0xff]
        %v2057 = vld [vmem:[#allocation2 + $0x3e] sm:$0xff]
        %v2058 = vld [vmem:[#allocation2 + $0x4e] sm:$0xff]
        %v2059 = vld [vmem:[#allocation2 + $0x56] sm:$0xff]
        %v2060 = vld [vmem:[#allocation2 + $0x66] sm:$0xff]
        %v2061 = vld [vmem:[#allocation2 + $0x6e] sm:$0xff]
        %v2062 = vld [vmem:[#allocation2 + $0x7e] sm:$0xff]
        %v2063 = vld [vmem:[#allocation2 + $0x86] sm:$0xff]
        %v2064 = vld [vmem:[#allocation2 + $0x96] sm:$0xff]
        %v2065 = vld [vmem:[#allocation2 + $0x9e] sm:$0xff]
        %v2066 = vld [vmem:[#allocation2 + $0xae] sm:$0xff]
        %v2067 = vld [vmem:[#allocation2 + $0xb6] sm:$0xff]
        %v2068 = vld [vmem:[#allocation2 + $0x8] sm:$0xff]
        %v2069 = vld [vmem:[#allocation2 + $0x10] sm:$0xff]
        %v2070 = vld [vmem:[#allocation2 + $0x20] sm:$0xff]
        %v2071 = vld [vmem:[#allocation2 + $0x28] sm:$0xff]
        %v2072 = vld [vmem:[#allocation2 + $0x38] sm:$0xff]
        %v2073 = vld [vmem:[#allocation2 + $0x40] sm:$0xff]
        %v2074 = vld [vmem:[#allocation2 + $0x50] sm:$0xff]
        %v2075 = vld [vmem:[#allocation2 + $0x58] sm:$0xff]
        %v2076 = vld [vmem:[#allocation2 + $0x68] sm:$0xff]
        %v2077 = vld [vmem:[#allocation2 + $0x70] sm:$0xff]
        %v2078 = vld [vmem:[#allocation2 + $0x80] sm:$0xff]
        %v2079 = vld [vmem:[#allocation2 + $0x88] sm:$0xff]
        %v2080 = vld [vmem:[#allocation2 + $0x98] sm:$0xff]
        %v2081 = vld [vmem:[#allocation2 + $0xa0] sm:$0xff]
        %v2082 = vld [vmem:[#allocation2 + $0xb0] sm:$0xff]
        %v2083 = vld [vmem:[#allocation2 + $0xb8] sm:$0xff]
        %v2084 = vpack.c.bf16 %v2037, %v2036
        %v2085 = vpack.c.bf16 %v2053, %v2052
        %v2086 = vpack.c.bf16 %v2069, %v2068
        %v2087 = vpack.c.bf16 %v2039, %v2038
        %v2088 = vpack.c.bf16 %v2055, %v2054
        %v2089 = vpack.c.bf16 %v2071, %v2070
        %v2090 = vpack.c.bf16 %v2041, %v2040
        %v2091 = vpack.c.bf16 %v2057, %v2056
        %v2092 = vpack.c.bf16 %v2073, %v2072
        %v2093 = vpack.c.bf16 %v2043, %v2042
        %v2094 = vpack.c.bf16 %v2059, %v2058
        %v2095 = vpack.c.bf16 %v2075, %v2074
        %v2096 = vpack.c.bf16 %v2045, %v2044
        %v2097 = vpack.c.bf16 %v2061, %v2060
        %v2098 = vpack.c.bf16 %v2077, %v2076
        %v2099 = vpack.c.bf16 %v2047, %v2046
        %v2100 = vpack.c.bf16 %v2063, %v2062
        %v2101 = vpack.c.bf16 %v2079, %v2078
        %v2102 = vpack.c.bf16 %v2049, %v2048
        %v2103 = vpack.c.bf16 %v2065, %v2064
        %v2104 = vpack.c.bf16 %v2081, %v2080
        %v2105 = vpack.c.bf16 %v2051, %v2050
        %v2106 = vpack.c.bf16 %v2067, %v2066
        %v2107 = vpack.c.bf16 %v2083, %v2082
        %v2108 = vld [vmem:[#allocation11] sm:$0xf]
        %v2109 = vld [vmem:[#allocation11 + $0x4] sm:$0xf]
        %v2110 = vld [vmem:[#allocation11 + $0x8] sm:$0xf]
        %v2111 = vld [vmem:[#allocation11 + $0xc] sm:$0xf]
        %v2112 = vld [vmem:[#allocation11 + $0x10] sm:$0xf]
        %v2113 = vld [vmem:[#allocation11 + $0x14] sm:$0xf]
        %v2114 = vld [vmem:[#allocation11 + $0x18] sm:$0xf]
        %v2115 = vld [vmem:[#allocation11 + $0x1c] sm:$0xf]
        %v2116 = vld [vmem:[#allocation11 + $0x20] sm:$0xf]
        %v2117 = vld [vmem:[#allocation11 + $0x24] sm:$0xf]
        %v2118 = vld [vmem:[#allocation11 + $0x28] sm:$0xf]
        %v2119 = vld [vmem:[#allocation11 + $0x2c] sm:$0xf]
        %v2120 = vld [vmem:[#allocation11 + $0x30] sm:$0xf]
        %v2121 = vld [vmem:[#allocation11 + $0x34] sm:$0xf]
        %v2122 = vld [vmem:[#allocation11 + $0x38] sm:$0xf]
        %v2123 = vld [vmem:[#allocation11 + $0x3c] sm:$0xf]
        %v2124 = vld [vmem:[#allocation11 + $0x40] sm:$0xf]
        %v2125 = vld [vmem:[#allocation11 + $0x44] sm:$0xf]
        %v2126 = vld [vmem:[#allocation11 + $0x48] sm:$0xf]
        %v2127 = vld [vmem:[#allocation11 + $0x4c] sm:$0xf]
        %v2128 = vld [vmem:[#allocation11 + $0x50] sm:$0xf]
        %v2129 = vld [vmem:[#allocation11 + $0x54] sm:$0xf]
        %v2130 = vld [vmem:[#allocation11 + $0x58] sm:$0xf]
        %v2131 = vld [vmem:[#allocation11 + $0x5c] sm:$0xf]
        %v2132 = vld [vmem:[#allocation11 + $0x60] sm:$0xf]
        %v2133 = vld [vmem:[#allocation11 + $0x64] sm:$0xf]
        %v2134 = vld [vmem:[#allocation11 + $0x68] sm:$0xf]
        %v2135 = vld [vmem:[#allocation11 + $0x6c] sm:$0xf]
        %v2136 = vld [vmem:[#allocation11 + $0x70] sm:$0xf]
        %v2137 = vld [vmem:[#allocation11 + $0x74] sm:$0xf]
        %v2138 = vld [vmem:[#allocation11 + $0x78] sm:$0xf]
        %v2139 = vld [vmem:[#allocation11 + $0x7c] sm:$0xf]
        %v2140 = vld [vmem:[#allocation11 + $0x80] sm:$0xf]
        %v2141 = vld [vmem:[#allocation11 + $0x84] sm:$0xf]
        %v2142 = vld [vmem:[#allocation11 + $0x88] sm:$0xf]
        %v2143 = vld [vmem:[#allocation11 + $0x8c] sm:$0xf]
        %v2144 = vld [vmem:[#allocation11 + $0x90] sm:$0xf]
        %v2145 = vld [vmem:[#allocation11 + $0x94] sm:$0xf]
        %v2146 = vld [vmem:[#allocation11 + $0x98] sm:$0xf]
        %v2147 = vld [vmem:[#allocation11 + $0x9c] sm:$0xf]
        %v2148 = vld [vmem:[#allocation11 + $0xa0] sm:$0xf]
        %v2149 = vld [vmem:[#allocation11 + $0xa4] sm:$0xf]
        %v2150 = vld [vmem:[#allocation11 + $0xa8] sm:$0xf]
        %v2151 = vld [vmem:[#allocation11 + $0xac] sm:$0xf]
        %v2152 = vld [vmem:[#allocation11 + $0xb0] sm:$0xf]
        %v2153 = vld [vmem:[#allocation11 + $0xb4] sm:$0xf]
        %v2154 = vld [vmem:[#allocation11 + $0xb8] sm:$0xf]
        %v2155 = vld [vmem:[#allocation11 + $0xbc] sm:$0xf]
        %v2156 = vld [vmem:[%s8] sm:$0x1]
        %v2158 = vlaneseq
        %v2159 = vshrl.u32 %v2158, 7
        %v2160 = vsub.s32 0, %v2159
        %v2161 = vrot.slane %v2156, %v2160
        %v2211 = vunpack.c.l.b16 %v2108
        %v2212 = vunpack.c.l.b16 %v2109
        %v2213 = vunpack.c.l.b16 %v2110
        %v2214 = vunpack.c.l.b16 %v2111
        %v2215 = vunpack.c.l.b16 %v2112
        %v2216 = vunpack.c.l.b16 %v2113
        %v2217 = vunpack.c.l.b16 %v2114
        %v2218 = vunpack.c.l.b16 %v2115
        %v2219 = vunpack.c.l.b16 %v2116
        %v2220 = vunpack.c.l.b16 %v2117
        %v2221 = vunpack.c.l.b16 %v2118
        %v2222 = vunpack.c.l.b16 %v2119
        %v2223 = vunpack.c.l.b16 %v2120
        %v2224 = vunpack.c.l.b16 %v2121
        %v2225 = vunpack.c.l.b16 %v2122
        %v2226 = vunpack.c.l.b16 %v2123
        %v2227 = vunpack.c.l.b16 %v2124
        %v2228 = vunpack.c.l.b16 %v2125
        %v2229 = vunpack.c.l.b16 %v2126
        %v2230 = vunpack.c.l.b16 %v2127
        %v2231 = vunpack.c.l.b16 %v2128
        %v2232 = vunpack.c.l.b16 %v2129
        %v2233 = vunpack.c.l.b16 %v2130
        %v2234 = vunpack.c.l.b16 %v2131
        %v2235 = vunpack.c.l.b16 %v2132
        %v2236 = vunpack.c.l.b16 %v2133
        %v2237 = vunpack.c.l.b16 %v2134
        %v2238 = vunpack.c.l.b16 %v2135
        %v2239 = vunpack.c.l.b16 %v2136
        %v2240 = vunpack.c.l.b16 %v2137
        %v2241 = vunpack.c.l.b16 %v2138
        %v2242 = vunpack.c.l.b16 %v2139
        %v2243 = vunpack.c.l.b16 %v2140
        %v2244 = vunpack.c.l.b16 %v2141
        %v2245 = vunpack.c.l.b16 %v2142
        %v2246 = vunpack.c.l.b16 %v2143
        %v2247 = vunpack.c.l.b16 %v2144
        %v2248 = vunpack.c.l.b16 %v2145
        %v2249 = vunpack.c.l.b16 %v2146
        %v2250 = vunpack.c.l.b16 %v2147
        %v2251 = vunpack.c.l.b16 %v2148
        %v2252 = vunpack.c.l.b16 %v2149
        %v2253 = vunpack.c.l.b16 %v2150
        %v2254 = vunpack.c.l.b16 %v2151
        %v2255 = vunpack.c.l.b16 %v2152
        %v2256 = vunpack.c.l.b16 %v2153
        %v2257 = vunpack.c.l.b16 %v2154
        %v2258 = vunpack.c.l.b16 %v2155
        %v2259 = vpack.c.b16 %v2212, %v2211
        %v2260 = vpack.c.b16 %v2214, %v2213
        %v2261 = vpack.c.b16 %v2216, %v2215
        %v2262 = vpack.c.b16 %v2218, %v2217
        %v2263 = vpack.c.b16 %v2220, %v2219
        %v2264 = vpack.c.b16 %v2222, %v2221
        %v2265 = vpack.c.b16 %v2224, %v2223
        %v2266 = vpack.c.b16 %v2226, %v2225
        %v2267 = vpack.c.b16 %v2228, %v2227
        %v2268 = vpack.c.b16 %v2230, %v2229
        %v2269 = vpack.c.b16 %v2232, %v2231
        %v2270 = vpack.c.b16 %v2234, %v2233
        %v2271 = vpack.c.b16 %v2236, %v2235
        %v2272 = vpack.c.b16 %v2238, %v2237
        %v2273 = vpack.c.b16 %v2240, %v2239
        %v2274 = vpack.c.b16 %v2242, %v2241
        %v2275 = vpack.c.b16 %v2244, %v2243
        %v2276 = vpack.c.b16 %v2246, %v2245
        %v2277 = vpack.c.b16 %v2248, %v2247
        %v2278 = vpack.c.b16 %v2250, %v2249
        %v2279 = vpack.c.b16 %v2252, %v2251
        %v2280 = vpack.c.b16 %v2254, %v2253
        %v2281 = vpack.c.b16 %v2256, %v2255
        %v2282 = vpack.c.b16 %v2258, %v2257
        %2307 = vmatprep.subr.bf16.mxu0 0
        %2308 = vmatpush1.bf16.msra.mxu0 %v2259
        %2309 = vmatprep.subr.bf16.mxu0 0
        %2310 = vmatpush1.bf16.msra.mxu0 %v2260
        %2311 = vmatprep.subr.bf16.mxu0 0
        %2312 = vmatpush1.bf16.msra.mxu0 %v2261
        %2313 = vmatprep.subr.bf16.mxu0 0
        %2314 = vmatpush1.bf16.msra.mxu0 %v2262
        %2315 = vmatprep.subr.bf16.mxu0 0
        %2316 = vmatpush1.bf16.msra.mxu0 %v2263
        %2317 = vmatprep.subr.bf16.mxu0 0
        %2318 = vmatpush1.bf16.msra.mxu0 %v2264
        %2319 = vmatprep.subr.bf16.mxu0 0
        %2320 = vmatpush1.bf16.msra.mxu0 %v2265
        %2321 = vmatprep.subr.bf16.mxu0 0
        %2322 = vmatpush1.bf16.msra.mxu0 %v2266
        %2323 = vmatprep.subr.bf16.mxu0 0
        %2324 = vmatpush1.bf16.msra.mxu0 %v2267
        %2325 = vmatprep.subr.bf16.mxu0 0
        %2326 = vmatpush1.bf16.msra.mxu0 %v2268
        %2327 = vmatprep.subr.bf16.mxu0 0
        %2328 = vmatpush1.bf16.msra.mxu0 %v2269
        %2329 = vmatprep.subr.bf16.mxu0 0
        %2330 = vmatpush1.bf16.msra.mxu0 %v2270
        %2331 = vmatprep.subr.bf16.mxu0 0
        %2332 = vmatpush1.bf16.msra.mxu0 %v2271
        %2333 = vmatprep.subr.bf16.mxu0 0
        %2334 = vmatpush1.bf16.msra.mxu0 %v2272
        %2335 = vmatprep.subr.bf16.mxu0 0
        %2336 = vmatpush1.bf16.msra.mxu0 %v2273
        %2337 = vmatprep.subr.bf16.mxu0 0
        %2338 = vmatpush1.bf16.msra.mxu0 %v2274
        %2339 = vmatprep.mubr.bf16.mxu0 %v2085
        %2340 = vmatmul.mubr.bf16.gmra.mrb[0].mxu0 %v2084
        %v2341 = vpop.f32.mrb[0].mxu0
        %v2342 = vadd.f32 %v2161, %v2341
        %v2343 = vpop.f32.mrb[0].mxu0
        %v2344 = vpop.f32.mrb[0].mxu0
        %v2345 = vadd.f32 %v2161, %v2344
        %v2346 = vpop.f32.mrb[0].mxu0
        %2347 = vmatprep.mubr.bf16.mxu0 %v2088
        %2348 = vmatmul.mubr.bf16.gmra.mrb[0].mxu0 %v2087
        %v2349 = vpop.f32.mrb[0].mxu0
        %v2350 = vadd.f32 %v2161, %v2349
        %v2351 = vpop.f32.mrb[0].mxu0
        %v2352 = vpop.f32.mrb[0].mxu0
        %v2353 = vadd.f32 %v2161, %v2352
        %v2354 = vpop.f32.mrb[0].mxu0
        %2355 = vmatprep.mubr.bf16.mxu0 %v2091
        %2356 = vmatmul.mubr.bf16.gmra.mrb[0].mxu0 %v2090
        %v2357 = vpop.f32.mrb[0].mxu0
        %v2358 = vadd.f32 %v2161, %v2357
        %v2359 = vpop.f32.mrb[0].mxu0
        %v2360 = vpop.f32.mrb[0].mxu0
        %v2361 = vadd.f32 %v2161, %v2360
        %v2362 = vpop.f32.mrb[0].mxu0
        %2363 = vmatprep.mubr.bf16.mxu0 %v2094
        %2364 = vmatmul.mubr.bf16.gmra.mrb[0].mxu0 %v2093
        %v2365 = vpop.f32.mrb[0].mxu0
        %v2366 = vadd.f32 %v2161, %v2365
        %v2367 = vpop.f32.mrb[0].mxu0
        %v2368 = vpop.f32.mrb[0].mxu0
        %v2369 = vadd.f32 %v2161, %v2368
        %v2370 = vpop.f32.mrb[0].mxu0
        %2371 = vmatprep.mubr.bf16.mxu0 %v2097
        %2372 = vmatmul.mubr.bf16.gmra.mrb[0].mxu0 %v2096
        %v2373 = vpop.f32.mrb[0].mxu0
        %v2374 = vadd.f32 %v2161, %v2373
        %v2375 = vpop.f32.mrb[0].mxu0
        %v2376 = vpop.f32.mrb[0].mxu0
        %v2377 = vadd.f32 %v2161, %v2376
        %v2378 = vpop.f32.mrb[0].mxu0
        %2379 = vmatprep.mubr.bf16.mxu0 %v2100
        %2380 = vmatmul.mubr.bf16.gmra.mrb[0].mxu0 %v2099
        %v2381 = vpop.f32.mrb[0].mxu0
        %v2382 = vadd.f32 %v2161, %v2381
        %v2383 = vpop.f32.mrb[0].mxu0
        %v2384 = vpop.f32.mrb[0].mxu0
        %v2385 = vadd.f32 %v2161, %v2384
        %v2386 = vpop.f32.mrb[0].mxu0
        %2387 = vmatprep.mubr.bf16.mxu0 %v2103
        %2388 = vmatmul.mubr.bf16.gmra.mrb[0].mxu0 %v2102
        %v2389 = vpop.f32.mrb[0].mxu0
        %v2390 = vadd.f32 %v2161, %v2389
        %v2391 = vpop.f32.mrb[0].mxu0
        %v2392 = vpop.f32.mrb[0].mxu0
        %v2393 = vadd.f32 %v2161, %v2392
        %v2394 = vpop.f32.mrb[0].mxu0
        %2395 = vmatprep.mubr.bf16.mxu0 %v2106
        %2396 = vmatmul.mubr.bf16.gmra.mrb[0].mxu0 %v2105
        %v2397 = vpop.f32.mrb[0].mxu0
        %v2398 = vadd.f32 %v2161, %v2397
        %v2399 = vpop.f32.mrb[0].mxu0
        %v2400 = vpop.f32.mrb[0].mxu0
        %v2401 = vadd.f32 %v2161, %v2400
        %v2402 = vpop.f32.mrb[0].mxu0
        %2403 = vdwg.mxu0
        %2404 = vmatprep.subr.bf16.mxu0 0
        %2405 = vmatpush1.bf16.msra.mxu0 %v2275
        %2406 = vmatprep.subr.bf16.mxu0 0
        %2407 = vmatpush1.bf16.msra.mxu0 %v2276
        %2408 = vmatprep.subr.bf16.mxu0 0
        %2409 = vmatpush1.bf16.msra.mxu0 %v2277
        %2410 = vmatprep.subr.bf16.mxu0 0
        %2411 = vmatpush1.bf16.msra.mxu0 %v2278
        %2412 = vmatprep.subr.bf16.mxu0 0
        %2413 = vmatpush1.bf16.msra.mxu0 %v2279
        %2414 = vmatprep.subr.bf16.mxu0 0
        %2415 = vmatpush1.bf16.msra.mxu0 %v2280
        %2416 = vmatprep.subr.bf16.mxu0 0
        %2417 = vmatpush1.bf16.msra.mxu0 %v2281
        %2418 = vmatprep.subr.bf16.mxu0 0
        %2419 = vmatpush1.bf16.msra.mxu0 %v2282
        %2420 = vmatprep.subr.bf16.mxu0 0
        %2421 = vmatpush1.bf16.msra.mxu0 0
        %2422 = vmatprep.subr.bf16.mxu0 0
        %2423 = vmatpush1.bf16.msra.mxu0 0
        %2424 = vmatprep.subr.bf16.mxu0 0
        %2425 = vmatpush1.bf16.msra.mxu0 0
        %2426 = vmatprep.subr.bf16.mxu0 0
        %2427 = vmatpush1.bf16.msra.mxu0 0
        %2428 = vmatprep.subr.bf16.mxu0 0
        %2429 = vmatpush1.bf16.msra.mxu0 0
        %2430 = vmatprep.subr.bf16.mxu0 0
        %2431 = vmatpush1.bf16.msra.mxu0 0
        %2432 = vmatprep.subr.bf16.mxu0 0
        %2433 = vmatpush1.bf16.msra.mxu0 0
        %2434 = vmatprep.subr.bf16.mxu0 0
        %2435 = vmatpush1.bf16.msra.mxu0 0
        %2436 = vmatprep.mubr.bf16.mxu0 0
        %2437 = vmatmul.mubr.bf16.gmra.mrb[0].mxu0 %v2086
        %v2438 = vpop.f32.mrb[0].mxu0
        %v2439 = vadd.f32 %v2342, %v2438
        %v2440 = vpop.f32.mrb[0].mxu0
        %v2441 = vpop.f32.mrb[0].mxu0
        %v2442 = vadd.f32 %v2345, %v2441
        %v2443 = vpop.f32.mrb[0].mxu0
        %2444 = vmatprep.mubr.bf16.mxu0 0
        %2445 = vmatmul.mubr.bf16.gmra.mrb[0].mxu0 %v2089
        %v2446 = vpop.f32.mrb[0].mxu0
        %v2447 = vadd.f32 %v2350, %v2446
        %v2448 = vpop.f32.mrb[0].mxu0
        %v2449 = vpop.f32.mrb[0].mxu0
        %v2450 = vadd.f32 %v2353, %v2449
        %v2451 = vpop.f32.mrb[0].mxu0
        %2452 = vmatprep.mubr.bf16.mxu0 0
        %2453 = vmatmul.mubr.bf16.gmra.mrb[0].mxu0 %v2092
        %v2454 = vpop.f32.mrb[0].mxu0
        %v2455 = vadd.f32 %v2358, %v2454
        %v2456 = vpop.f32.mrb[0].mxu0
        %v2457 = vpop.f32.mrb[0].mxu0
        %v2458 = vadd.f32 %v2361, %v2457
        %v2459 = vpop.f32.mrb[0].mxu0
        %2460 = vmatprep.mubr.bf16.mxu0 0
        %2461 = vmatmul.mubr.bf16.gmra.mrb[0].mxu0 %v2095
        %v2462 = vpop.f32.mrb[0].mxu0
        %v2463 = vadd.f32 %v2366, %v2462
        %v2464 = vpop.f32.mrb[0].mxu0
        %v2465 = vpop.f32.mrb[0].mxu0
        %v2466 = vadd.f32 %v2369, %v2465
        %v2467 = vpop.f32.mrb[0].mxu0
        %2468 = vmatprep.mubr.bf16.mxu0 0
        %2469 = vmatmul.mubr.bf16.gmra.mrb[0].mxu0 %v2098
        %v2470 = vpop.f32.mrb[0].mxu0
        %v2471 = vadd.f32 %v2374, %v2470
        %v2472 = vpop.f32.mrb[0].mxu0
        %v2473 = vpop.f32.mrb[0].mxu0
        %v2474 = vadd.f32 %v2377, %v2473
        %v2475 = vpop.f32.mrb[0].mxu0
        %2476 = vmatprep.mubr.bf16.mxu0 0
        %2477 = vmatmul.mubr.bf16.gmra.mrb[0].mxu0 %v2101
        %v2478 = vpop.f32.mrb[0].mxu0
        %v2479 = vadd.f32 %v2382, %v2478
        %v2480 = vpop.f32.mrb[0].mxu0
        %v2481 = vpop.f32.mrb[0].mxu0
        %v2482 = vadd.f32 %v2385, %v2481
        %v2483 = vpop.f32.mrb[0].mxu0
        %2484 = vmatprep.mubr.bf16.mxu0 0
        %2485 = vmatmul.mubr.bf16.gmra.mrb[0].mxu0 %v2104
        %v2486 = vpop.f32.mrb[0].mxu0
        %v2487 = vadd.f32 %v2390, %v2486
        %v2488 = vpop.f32.mrb[0].mxu0
        %v2489 = vpop.f32.mrb[0].mxu0
        %v2490 = vadd.f32 %v2393, %v2489
        %v2491 = vpop.f32.mrb[0].mxu0
        %2492 = vmatprep.mubr.bf16.mxu0 0
        %2493 = vmatmul.mubr.bf16.gmra.mrb[0].mxu0 %v2107
        %v2494 = vpop.f32.mrb[0].mxu0
        %v2495 = vadd.f32 %v2398, %v2494
        %v2496 = vpop.f32.mrb[0].mxu0
        %v2497 = vpop.f32.mrb[0].mxu0
        %v2498 = vadd.f32 %v2401, %v2497
        %v2499 = vpop.f32.mrb[0].mxu0
        %2500 = vdwg.mxu0
        %v2501 = vmax.f32 %v2439, 0.0
        %v2502 = vmax.f32 %v2442, 0.0
        %v2503 = vmax.f32 %v2447, 0.0
        %v2504 = vmax.f32 %v2450, 0.0
        %v2505 = vmax.f32 %v2455, 0.0
        %v2506 = vmax.f32 %v2458, 0.0
        %v2507 = vmax.f32 %v2463, 0.0
        %v2508 = vmax.f32 %v2466, 0.0
        %v2509 = vmax.f32 %v2471, 0.0
        %v2510 = vmax.f32 %v2474, 0.0
        %v2511 = vmax.f32 %v2479, 0.0
        %v2512 = vmax.f32 %v2482, 0.0
        %v2513 = vmax.f32 %v2487, 0.0
        %v2514 = vmax.f32 %v2490, 0.0
        %v2515 = vmax.f32 %v2495, 0.0
        %v2516 = vmax.f32 %v2498, 0.0
        %2517 = vst [vmem:[#allocation2 + $0x8] sm:$0xff] %v2501
        %2518 = vst [vmem:[#allocation2 + $0x10] sm:$0xff] %v2502
        %2519 = vst [vmem:[#allocation2 + $0x20] sm:$0xff] %v2503
        %2520 = vst [vmem:[#allocation2 + $0x28] sm:$0xff] %v2504
        %2521 = vst [vmem:[#allocation2 + $0x38] sm:$0xff] %v2505
        %2522 = vst [vmem:[#allocation2 + $0x40] sm:$0xff] %v2506
        %2523 = vst [vmem:[#allocation2 + $0x50] sm:$0xff] %v2507
        %2524 = vst [vmem:[#allocation2 + $0x58] sm:$0xff] %v2508
        %2525 = vst [vmem:[#allocation2 + $0x68] sm:$0xff] %v2509
        %2526 = vst [vmem:[#allocation2 + $0x70] sm:$0xff] %v2510
        %2527 = vst [vmem:[#allocation2 + $0x80] sm:$0xff] %v2511
        %2528 = vst [vmem:[#allocation2 + $0x88] sm:$0xff] %v2512
        %2529 = vst [vmem:[#allocation2 + $0x98] sm:$0xff] %v2513
        %2530 = vst [vmem:[#allocation2 + $0xa0] sm:$0xff] %v2514
        %2531 = vst [vmem:[#allocation2 + $0xb0] sm:$0xff] %v2515
        %2532 = vst [vmem:[#allocation2 + $0xb8] sm:$0xff] %v2516
        %v2533 = vld [vmem:[#allocation2 + $0x4] sm:$0xff]
        %v2534 = vld [vmem:[#allocation2 + $0xc] sm:$0xff]
        %v2535 = vld [vmem:[#allocation2 + $0x1c] sm:$0xff]
        %v2536 = vld [vmem:[#allocation2 + $0x24] sm:$0xff]
        %v2537 = vld [vmem:[#allocation2 + $0x34] sm:$0xff]
        %v2538 = vld [vmem:[#allocation2 + $0x3c] sm:$0xff]
        %v2539 = vld [vmem:[#allocation2 + $0x4c] sm:$0xff]
        %v2540 = vld [vmem:[#allocation2 + $0x54] sm:$0xff]
        %v2541 = vld [vmem:[#allocation2 + $0x64] sm:$0xff]
        %v2542 = vld [vmem:[#allocation2 + $0x6c] sm:$0xff]
        %v2543 = vld [vmem:[#allocation2 + $0x7c] sm:$0xff]
        %v2544 = vld [vmem:[#allocation2 + $0x84] sm:$0xff]
        %v2545 = vld [vmem:[#allocation2 + $0x94] sm:$0xff]
        %v2546 = vld [vmem:[#allocation2 + $0x9c] sm:$0xff]
        %v2547 = vld [vmem:[#allocation2 + $0xac] sm:$0xff]
        %v2548 = vld [vmem:[#allocation2 + $0xb4] sm:$0xff]
        %v2549 = vld [vmem:[#allocation2 + $0x6] sm:$0xff]
        %v2550 = vld [vmem:[#allocation2 + $0xe] sm:$0xff]
        %v2551 = vld [vmem:[#allocation2 + $0x1e] sm:$0xff]
        %v2552 = vld [vmem:[#allocation2 + $0x26] sm:$0xff]
        %v2553 = vld [vmem:[#allocation2 + $0x36] sm:$0xff]
        %v2554 = vld [vmem:[#allocation2 + $0x3e] sm:$0xff]
        %v2555 = vld [vmem:[#allocation2 + $0x4e] sm:$0xff]
        %v2556 = vld [vmem:[#allocation2 + $0x56] sm:$0xff]
        %v2557 = vld [vmem:[#allocation2 + $0x66] sm:$0xff]
        %v2558 = vld [vmem:[#allocation2 + $0x6e] sm:$0xff]
        %v2559 = vld [vmem:[#allocation2 + $0x7e] sm:$0xff]
        %v2560 = vld [vmem:[#allocation2 + $0x86] sm:$0xff]
        %v2561 = vld [vmem:[#allocation2 + $0x96] sm:$0xff]
        %v2562 = vld [vmem:[#allocation2 + $0x9e] sm:$0xff]
        %v2563 = vld [vmem:[#allocation2 + $0xae] sm:$0xff]
        %v2564 = vld [vmem:[#allocation2 + $0xb6] sm:$0xff]
        %v2565 = vld [vmem:[#allocation2 + $0x8] sm:$0xff]
        %v2566 = vld [vmem:[#allocation2 + $0x10] sm:$0xff]
        %v2567 = vld [vmem:[#allocation2 + $0x20] sm:$0xff]
        %v2568 = vld [vmem:[#allocation2 + $0x28] sm:$0xff]
        %v2569 = vld [vmem:[#allocation2 + $0x38] sm:$0xff]
        %v2570 = vld [vmem:[#allocation2 + $0x40] sm:$0xff]
        %v2571 = vld [vmem:[#allocation2 + $0x50] sm:$0xff]
        %v2572 = vld [vmem:[#allocation2 + $0x58] sm:$0xff]
        %v2573 = vld [vmem:[#allocation2 + $0x68] sm:$0xff]
        %v2574 = vld [vmem:[#allocation2 + $0x70] sm:$0xff]
        %v2575 = vld [vmem:[#allocation2 + $0x80] sm:$0xff]
        %v2576 = vld [vmem:[#allocation2 + $0x88] sm:$0xff]
        %v2577 = vld [vmem:[#allocation2 + $0x98] sm:$0xff]
        %v2578 = vld [vmem:[#allocation2 + $0xa0] sm:$0xff]
        %v2579 = vld [vmem:[#allocation2 + $0xb0] sm:$0xff]
        %v2580 = vld [vmem:[#allocation2 + $0xb8] sm:$0xff]
        %v2581 = vpack.c.bf16 %v2534, %v2533
        %v2582 = vpack.c.bf16 %v2550, %v2549
        %v2583 = vpack.c.bf16 %v2566, %v2565
        %v2584 = vpack.c.bf16 %v2536, %v2535
        %v2585 = vpack.c.bf16 %v2552, %v2551
        %v2586 = vpack.c.bf16 %v2568, %v2567
        %v2587 = vpack.c.bf16 %v2538, %v2537
        %v2588 = vpack.c.bf16 %v2554, %v2553
        %v2589 = vpack.c.bf16 %v2570, %v2569
        %v2590 = vpack.c.bf16 %v2540, %v2539
        %v2591 = vpack.c.bf16 %v2556, %v2555
        %v2592 = vpack.c.bf16 %v2572, %v2571
        %v2593 = vpack.c.bf16 %v2542, %v2541
        %v2594 = vpack.c.bf16 %v2558, %v2557
        %v2595 = vpack.c.bf16 %v2574, %v2573
        %v2596 = vpack.c.bf16 %v2544, %v2543
        %v2597 = vpack.c.bf16 %v2560, %v2559
        %v2598 = vpack.c.bf16 %v2576, %v2575
        %v2599 = vpack.c.bf16 %v2546, %v2545
        %v2600 = vpack.c.bf16 %v2562, %v2561
        %v2601 = vpack.c.bf16 %v2578, %v2577
        %v2602 = vpack.c.bf16 %v2548, %v2547
        %v2603 = vpack.c.bf16 %v2564, %v2563
        %v2604 = vpack.c.bf16 %v2580, %v2579
        %v2605 = vld [vmem:[#allocation12] sm:$0xf]
        %v2606 = vld [vmem:[#allocation12 + $0x4] sm:$0xf]
        %v2607 = vld [vmem:[#allocation12 + $0x8] sm:$0xf]
        %v2608 = vld [vmem:[#allocation12 + $0xc] sm:$0xf]
        %v2609 = vld [vmem:[#allocation12 + $0x10] sm:$0xf]
        %v2610 = vld [vmem:[#allocation12 + $0x14] sm:$0xf]
        %v2611 = vld [vmem:[#allocation12 + $0x18] sm:$0xf]
        %v2612 = vld [vmem:[#allocation12 + $0x1c] sm:$0xf]
        %v2613 = vld [vmem:[#allocation12 + $0x20] sm:$0xf]
        %v2614 = vld [vmem:[#allocation12 + $0x24] sm:$0xf]
        %v2615 = vld [vmem:[#allocation12 + $0x28] sm:$0xf]
        %v2616 = vld [vmem:[#allocation12 + $0x2c] sm:$0xf]
        %v2617 = vld [vmem:[#allocation12 + $0x30] sm:$0xf]
        %v2618 = vld [vmem:[#allocation12 + $0x34] sm:$0xf]
        %v2619 = vld [vmem:[#allocation12 + $0x38] sm:$0xf]
        %v2620 = vld [vmem:[#allocation12 + $0x3c] sm:$0xf]
        %v2621 = vld [vmem:[#allocation12 + $0x40] sm:$0xf]
        %v2622 = vld [vmem:[#allocation12 + $0x44] sm:$0xf]
        %v2623 = vld [vmem:[#allocation12 + $0x48] sm:$0xf]
        %v2624 = vld [vmem:[#allocation12 + $0x4c] sm:$0xf]
        %v2625 = vld [vmem:[#allocation12 + $0x50] sm:$0xf]
        %v2626 = vld [vmem:[#allocation12 + $0x54] sm:$0xf]
        %v2627 = vld [vmem:[#allocation12 + $0x58] sm:$0xf]
        %v2628 = vld [vmem:[#allocation12 + $0x5c] sm:$0xf]
        %v2629 = vld [vmem:[#allocation12 + $0x60] sm:$0xf]
        %v2630 = vld [vmem:[#allocation12 + $0x64] sm:$0xf]
        %v2631 = vld [vmem:[#allocation12 + $0x68] sm:$0xf]
        %v2632 = vld [vmem:[#allocation12 + $0x6c] sm:$0xf]
        %v2633 = vld [vmem:[#allocation12 + $0x70] sm:$0xf]
        %v2634 = vld [vmem:[#allocation12 + $0x74] sm:$0xf]
        %v2635 = vld [vmem:[#allocation12 + $0x78] sm:$0xf]
        %v2636 = vld [vmem:[#allocation12 + $0x7c] sm:$0xf]
        %v2637 = vld [vmem:[#allocation12 + $0x80] sm:$0xf]
        %v2638 = vld [vmem:[#allocation12 + $0x84] sm:$0xf]
        %v2639 = vld [vmem:[#allocation12 + $0x88] sm:$0xf]
        %v2640 = vld [vmem:[#allocation12 + $0x8c] sm:$0xf]
        %v2641 = vld [vmem:[#allocation12 + $0x90] sm:$0xf]
        %v2642 = vld [vmem:[#allocation12 + $0x94] sm:$0xf]
        %v2643 = vld [vmem:[#allocation12 + $0x98] sm:$0xf]
        %v2644 = vld [vmem:[#allocation12 + $0x9c] sm:$0xf]
        %v2645 = vld [vmem:[#allocation12 + $0xa0] sm:$0xf]
        %v2646 = vld [vmem:[#allocation12 + $0xa4] sm:$0xf]
        %v2647 = vld [vmem:[#allocation12 + $0xa8] sm:$0xf]
        %v2648 = vld [vmem:[#allocation12 + $0xac] sm:$0xf]
        %v2649 = vld [vmem:[#allocation12 + $0xb0] sm:$0xf]
        %v2650 = vld [vmem:[#allocation12 + $0xb4] sm:$0xf]
        %v2651 = vld [vmem:[#allocation12 + $0xb8] sm:$0xf]
        %v2652 = vld [vmem:[#allocation12 + $0xbc] sm:$0xf]
        %v2653 = vld [vmem:[%s10] sm:$0x1]
        %v2655 = vlaneseq
        %v2656 = vshrl.u32 %v2655, 7
        %v2657 = vsub.s32 0, %v2656
        %v2658 = vrot.slane %v2653, %v2657
        %v2708 = vunpack.c.l.b16 %v2605
        %v2709 = vunpack.c.l.b16 %v2606
        %v2710 = vunpack.c.l.b16 %v2607
        %v2711 = vunpack.c.l.b16 %v2608
        %v2712 = vunpack.c.l.b16 %v2609
        %v2713 = vunpack.c.l.b16 %v2610
        %v2714 = vunpack.c.l.b16 %v2611
        %v2715 = vunpack.c.l.b16 %v2612
        %v2716 = vunpack.c.l.b16 %v2613
        %v2717 = vunpack.c.l.b16 %v2614
        %v2718 = vunpack.c.l.b16 %v2615
        %v2719 = vunpack.c.l.b16 %v2616
        %v2720 = vunpack.c.l.b16 %v2617
        %v2721 = vunpack.c.l.b16 %v2618
        %v2722 = vunpack.c.l.b16 %v2619
        %v2723 = vunpack.c.l.b16 %v2620
        %v2724 = vunpack.c.l.b16 %v2621
        %v2725 = vunpack.c.l.b16 %v2622
        %v2726 = vunpack.c.l.b16 %v2623
        %v2727 = vunpack.c.l.b16 %v2624
        %v2728 = vunpack.c.l.b16 %v2625
        %v2729 = vunpack.c.l.b16 %v2626
        %v2730 = vunpack.c.l.b16 %v2627
        %v2731 = vunpack.c.l.b16 %v2628
        %v2732 = vunpack.c.l.b16 %v2629
        %v2733 = vunpack.c.l.b16 %v2630
        %v2734 = vunpack.c.l.b16 %v2631
        %v2735 = vunpack.c.l.b16 %v2632
        %v2736 = vunpack.c.l.b16 %v2633
        %v2737 = vunpack.c.l.b16 %v2634
        %v2738 = vunpack.c.l.b16 %v2635
        %v2739 = vunpack.c.l.b16 %v2636
        %v2740 = vunpack.c.l.b16 %v2637
        %v2741 = vunpack.c.l.b16 %v2638
        %v2742 = vunpack.c.l.b16 %v2639
        %v2743 = vunpack.c.l.b16 %v2640
        %v2744 = vunpack.c.l.b16 %v2641
        %v2745 = vunpack.c.l.b16 %v2642
        %v2746 = vunpack.c.l.b16 %v2643
        %v2747 = vunpack.c.l.b16 %v2644
        %v2748 = vunpack.c.l.b16 %v2645
        %v2749 = vunpack.c.l.b16 %v2646
        %v2750 = vunpack.c.l.b16 %v2647
        %v2751 = vunpack.c.l.b16 %v2648
        %v2752 = vunpack.c.l.b16 %v2649
        %v2753 = vunpack.c.l.b16 %v2650
        %v2754 = vunpack.c.l.b16 %v2651
        %v2755 = vunpack.c.l.b16 %v2652
        %v2756 = vpack.c.b16 %v2709, %v2708
        %v2757 = vpack.c.b16 %v2711, %v2710
        %v2758 = vpack.c.b16 %v2713, %v2712
        %v2759 = vpack.c.b16 %v2715, %v2714
        %v2760 = vpack.c.b16 %v2717, %v2716
        %v2761 = vpack.c.b16 %v2719, %v2718
        %v2762 = vpack.c.b16 %v2721, %v2720
        %v2763 = vpack.c.b16 %v2723, %v2722
        %v2764 = vpack.c.b16 %v2725, %v2724
        %v2765 = vpack.c.b16 %v2727, %v2726
        %v2766 = vpack.c.b16 %v2729, %v2728
        %v2767 = vpack.c.b16 %v2731, %v2730
        %v2768 = vpack.c.b16 %v2733, %v2732
        %v2769 = vpack.c.b16 %v2735, %v2734
        %v2770 = vpack.c.b16 %v2737, %v2736
        %v2771 = vpack.c.b16 %v2739, %v2738
        %v2772 = vpack.c.b16 %v2741, %v2740
        %v2773 = vpack.c.b16 %v2743, %v2742
        %v2774 = vpack.c.b16 %v2745, %v2744
        %v2775 = vpack.c.b16 %v2747, %v2746
        %v2776 = vpack.c.b16 %v2749, %v2748
        %v2777 = vpack.c.b16 %v2751, %v2750
        %v2778 = vpack.c.b16 %v2753, %v2752
        %v2779 = vpack.c.b16 %v2755, %v2754
        %2804 = vmatprep.subr.bf16.mxu0 0
        %2805 = vmatpush1.bf16.msra.mxu0 %v2756
        %2806 = vmatprep.subr.bf16.mxu0 0
        %2807 = vmatpush1.bf16.msra.mxu0 %v2757
        %2808 = vmatprep.subr.bf16.mxu0 0
        %2809 = vmatpush1.bf16.msra.mxu0 %v2758
        %2810 = vmatprep.subr.bf16.mxu0 0
        %2811 = vmatpush1.bf16.msra.mxu0 %v2759
        %2812 = vmatprep.subr.bf16.mxu0 0
        %2813 = vmatpush1.bf16.msra.mxu0 %v2760
        %2814 = vmatprep.subr.bf16.mxu0 0
        %2815 = vmatpush1.bf16.msra.mxu0 %v2761
        %2816 = vmatprep.subr.bf16.mxu0 0
        %2817 = vmatpush1.bf16.msra.mxu0 %v2762
        %2818 = vmatprep.subr.bf16.mxu0 0
        %2819 = vmatpush1.bf16.msra.mxu0 %v2763
        %2820 = vmatprep.subr.bf16.mxu0 0
        %2821 = vmatpush1.bf16.msra.mxu0 %v2764
        %2822 = vmatprep.subr.bf16.mxu0 0
        %2823 = vmatpush1.bf16.msra.mxu0 %v2765
        %2824 = vmatprep.subr.bf16.mxu0 0
        %2825 = vmatpush1.bf16.msra.mxu0 %v2766
        %2826 = vmatprep.subr.bf16.mxu0 0
        %2827 = vmatpush1.bf16.msra.mxu0 %v2767
        %2828 = vmatprep.subr.bf16.mxu0 0
        %2829 = vmatpush1.bf16.msra.mxu0 %v2768
        %2830 = vmatprep.subr.bf16.mxu0 0
        %2831 = vmatpush1.bf16.msra.mxu0 %v2769
        %2832 = vmatprep.subr.bf16.mxu0 0
        %2833 = vmatpush1.bf16.msra.mxu0 %v2770
        %2834 = vmatprep.subr.bf16.mxu0 0
        %2835 = vmatpush1.bf16.msra.mxu0 %v2771
        %2836 = vmatprep.mubr.bf16.mxu0 %v2582
        %2837 = vmatmul.mubr.bf16.gmra.mrb[0].mxu0 %v2581
        %v2838 = vpop.f32.mrb[0].mxu0
        %v2839 = vadd.f32 %v2658, %v2838
        %v2840 = vpop.f32.mrb[0].mxu0
        %v2841 = vpop.f32.mrb[0].mxu0
        %v2842 = vadd.f32 %v2658, %v2841
        %v2843 = vpop.f32.mrb[0].mxu0
        %2844 = vmatprep.mubr.bf16.mxu0 %v2585
        %2845 = vmatmul.mubr.bf16.gmra.mrb[0].mxu0 %v2584
        %v2846 = vpop.f32.mrb[0].mxu0
        %v2847 = vadd.f32 %v2658, %v2846
        %v2848 = vpop.f32.mrb[0].mxu0
        %v2849 = vpop.f32.mrb[0].mxu0
        %v2850 = vadd.f32 %v2658, %v2849
        %v2851 = vpop.f32.mrb[0].mxu0
        %2852 = vmatprep.mubr.bf16.mxu0 %v2588
        %2853 = vmatmul.mubr.bf16.gmra.mrb[0].mxu0 %v2587
        %v2854 = vpop.f32.mrb[0].mxu0
        %v2855 = vadd.f32 %v2658, %v2854
        %v2856 = vpop.f32.mrb[0].mxu0
        %v2857 = vpop.f32.mrb[0].mxu0
        %v2858 = vadd.f32 %v2658, %v2857
        %v2859 = vpop.f32.mrb[0].mxu0
        %2860 = vmatprep.mubr.bf16.mxu0 %v2591
        %2861 = vmatmul.mubr.bf16.gmra.mrb[0].mxu0 %v2590
        %v2862 = vpop.f32.mrb[0].mxu0
        %v2863 = vadd.f32 %v2658, %v2862
        %v2864 = vpop.f32.mrb[0].mxu0
        %v2865 = vpop.f32.mrb[0].mxu0
        %v2866 = vadd.f32 %v2658, %v2865
        %v2867 = vpop.f32.mrb[0].mxu0
        %2868 = vmatprep.mubr.bf16.mxu0 %v2594
        %2869 = vmatmul.mubr.bf16.gmra.mrb[0].mxu0 %v2593
        %v2870 = vpop.f32.mrb[0].mxu0
        %v2871 = vadd.f32 %v2658, %v2870
        %v2872 = vpop.f32.mrb[0].mxu0
        %v2873 = vpop.f32.mrb[0].mxu0
        %v2874 = vadd.f32 %v2658, %v2873
        %v2875 = vpop.f32.mrb[0].mxu0
        %2876 = vmatprep.mubr.bf16.mxu0 %v2597
        %2877 = vmatmul.mubr.bf16.gmra.mrb[0].mxu0 %v2596
        %v2878 = vpop.f32.mrb[0].mxu0
        %v2879 = vadd.f32 %v2658, %v2878
        %v2880 = vpop.f32.mrb[0].mxu0
        %v2881 = vpop.f32.mrb[0].mxu0
        %v2882 = vadd.f32 %v2658, %v2881
        %v2883 = vpop.f32.mrb[0].mxu0
        %2884 = vmatprep.mubr.bf16.mxu0 %v2600
        %2885 = vmatmul.mubr.bf16.gmra.mrb[0].mxu0 %v2599
        %v2886 = vpop.f32.mrb[0].mxu0
        %v2887 = vadd.f32 %v2658, %v2886
        %v2888 = vpop.f32.mrb[0].mxu0
        %v2889 = vpop.f32.mrb[0].mxu0
        %v2890 = vadd.f32 %v2658, %v2889
        %v2891 = vpop.f32.mrb[0].mxu0
        %2892 = vmatprep.mubr.bf16.mxu0 %v2603
        %2893 = vmatmul.mubr.bf16.gmra.mrb[0].mxu0 %v2602
        %v2894 = vpop.f32.mrb[0].mxu0
        %v2895 = vadd.f32 %v2658, %v2894
        %v2896 = vpop.f32.mrb[0].mxu0
        %v2897 = vpop.f32.mrb[0].mxu0
        %v2898 = vadd.f32 %v2658, %v2897
        %v2899 = vpop.f32.mrb[0].mxu0
        %2900 = vdwg.mxu0
        %2901 = vmatprep.subr.bf16.mxu0 0
        %2902 = vmatpush1.bf16.msra.mxu0 %v2772
        %2903 = vmatprep.subr.bf16.mxu0 0
        %2904 = vmatpush1.bf16.msra.mxu0 %v2773
        %2905 = vmatprep.subr.bf16.mxu0 0
        %2906 = vmatpush1.bf16.msra.mxu0 %v2774
        %2907 = vmatprep.subr.bf16.mxu0 0
        %2908 = vmatpush1.bf16.msra.mxu0 %v2775
        %2909 = vmatprep.subr.bf16.mxu0 0
        %2910 = vmatpush1.bf16.msra.mxu0 %v2776
        %2911 = vmatprep.subr.bf16.mxu0 0
        %2912 = vmatpush1.bf16.msra.mxu0 %v2777
        %2913 = vmatprep.subr.bf16.mxu0 0
        %2914 = vmatpush1.bf16.msra.mxu0 %v2778
        %2915 = vmatprep.subr.bf16.mxu0 0
        %2916 = vmatpush1.bf16.msra.mxu0 %v2779
        %2917 = vmatprep.subr.bf16.mxu0 0
        %2918 = vmatpush1.bf16.msra.mxu0 0
        %2919 = vmatprep.subr.bf16.mxu0 0
        %2920 = vmatpush1.bf16.msra.mxu0 0
        %2921 = vmatprep.subr.bf16.mxu0 0
        %2922 = vmatpush1.bf16.msra.mxu0 0
        %2923 = vmatprep.subr.bf16.mxu0 0
        %2924 = vmatpush1.bf16.msra.mxu0 0
        %2925 = vmatprep.subr.bf16.mxu0 0
        %2926 = vmatpush1.bf16.msra.mxu0 0
        %2927 = vmatprep.subr.bf16.mxu0 0
        %2928 = vmatpush1.bf16.msra.mxu0 0
        %2929 = vmatprep.subr.bf16.mxu0 0
        %2930 = vmatpush1.bf16.msra.mxu0 0
        %2931 = vmatprep.subr.bf16.mxu0 0
        %2932 = vmatpush1.bf16.msra.mxu0 0
        %2933 = vmatprep.mubr.bf16.mxu0 0
        %2934 = vmatmul.mubr.bf16.gmra.mrb[0].mxu0 %v2583
        %v2935 = vpop.f32.mrb[0].mxu0
        %v2936 = vadd.f32 %v2839, %v2935
        %v2937 = vpop.f32.mrb[0].mxu0
        %v2938 = vpop.f32.mrb[0].mxu0
        %v2939 = vadd.f32 %v2842, %v2938
        %v2940 = vpop.f32.mrb[0].mxu0
        %2941 = vmatprep.mubr.bf16.mxu0 0
        %2942 = vmatmul.mubr.bf16.gmra.mrb[0].mxu0 %v2586
        %v2943 = vpop.f32.mrb[0].mxu0
        %v2944 = vadd.f32 %v2847, %v2943
        %v2945 = vpop.f32.mrb[0].mxu0
        %v2946 = vpop.f32.mrb[0].mxu0
        %v2947 = vadd.f32 %v2850, %v2946
        %v2948 = vpop.f32.mrb[0].mxu0
        %2949 = vmatprep.mubr.bf16.mxu0 0
        %2950 = vmatmul.mubr.bf16.gmra.mrb[0].mxu0 %v2589
        %v2951 = vpop.f32.mrb[0].mxu0
        %v2952 = vadd.f32 %v2855, %v2951
        %v2953 = vpop.f32.mrb[0].mxu0
        %v2954 = vpop.f32.mrb[0].mxu0
        %v2955 = vadd.f32 %v2858, %v2954
        %v2956 = vpop.f32.mrb[0].mxu0
        %2957 = vmatprep.mubr.bf16.mxu0 0
        %2958 = vmatmul.mubr.bf16.gmra.mrb[0].mxu0 %v2592
        %v2959 = vpop.f32.mrb[0].mxu0
        %v2960 = vadd.f32 %v2863, %v2959
        %v2961 = vpop.f32.mrb[0].mxu0
        %v2962 = vpop.f32.mrb[0].mxu0
        %v2963 = vadd.f32 %v2866, %v2962
        %v2964 = vpop.f32.mrb[0].mxu0
        %2965 = vmatprep.mubr.bf16.mxu0 0
        %2966 = vmatmul.mubr.bf16.gmra.mrb[0].mxu0 %v2595
        %v2967 = vpop.f32.mrb[0].mxu0
        %v2968 = vadd.f32 %v2871, %v2967
        %v2969 = vpop.f32.mrb[0].mxu0
        %v2970 = vpop.f32.mrb[0].mxu0
        %v2971 = vadd.f32 %v2874, %v2970
        %v2972 = vpop.f32.mrb[0].mxu0
        %2973 = vmatprep.mubr.bf16.mxu0 0
        %2974 = vmatmul.mubr.bf16.gmra.mrb[0].mxu0 %v2598
        %v2975 = vpop.f32.mrb[0].mxu0
        %v2976 = vadd.f32 %v2879, %v2975
        %v2977 = vpop.f32.mrb[0].mxu0
        %v2978 = vpop.f32.mrb[0].mxu0
        %v2979 = vadd.f32 %v2882, %v2978
        %v2980 = vpop.f32.mrb[0].mxu0
        %2981 = vmatprep.mubr.bf16.mxu0 0
        %2982 = vmatmul.mubr.bf16.gmra.mrb[0].mxu0 %v2601
        %v2983 = vpop.f32.mrb[0].mxu0
        %v2984 = vadd.f32 %v2887, %v2983
        %v2985 = vpop.f32.mrb[0].mxu0
        %v2986 = vpop.f32.mrb[0].mxu0
        %v2987 = vadd.f32 %v2890, %v2986
        %v2988 = vpop.f32.mrb[0].mxu0
        %2989 = vmatprep.mubr.bf16.mxu0 0
        %2990 = vmatmul.mubr.bf16.gmra.mrb[0].mxu0 %v2604
        %v2991 = vpop.f32.mrb[0].mxu0
        %v2992 = vadd.f32 %v2895, %v2991
        %v2993 = vpop.f32.mrb[0].mxu0
        %v2994 = vpop.f32.mrb[0].mxu0
        %v2995 = vadd.f32 %v2898, %v2994
        %v2996 = vpop.f32.mrb[0].mxu0
        %2997 = vdwg.mxu0
        %v2998 = vmax.f32 %v2936, 0.0
        %v2999 = vmax.f32 %v2939, 0.0
        %v3000 = vmax.f32 %v2944, 0.0
        %v3001 = vmax.f32 %v2947, 0.0
        %v3002 = vmax.f32 %v2952, 0.0
        %v3003 = vmax.f32 %v2955, 0.0
        %v3004 = vmax.f32 %v2960, 0.0
        %v3005 = vmax.f32 %v2963, 0.0
        %v3006 = vmax.f32 %v2968, 0.0
        %v3007 = vmax.f32 %v2971, 0.0
        %v3008 = vmax.f32 %v2976, 0.0
        %v3009 = vmax.f32 %v2979, 0.0
        %v3010 = vmax.f32 %v2984, 0.0
        %v3011 = vmax.f32 %v2987, 0.0
        %v3012 = vmax.f32 %v2992, 0.0
        %v3013 = vmax.f32 %v2995, 0.0
        %v3014 = vadd.f32 %v2998, %v1958
        %v3015 = vadd.f32 %v2999, %v1961
        %v3016 = vadd.f32 %v3000, %v1966
        %v3017 = vadd.f32 %v3001, %v1969
        %v3018 = vadd.f32 %v3002, %v1974
        %v3019 = vadd.f32 %v3003, %v1977
        %v3020 = vadd.f32 %v3004, %v1982
        %v3021 = vadd.f32 %v3005, %v1985
        %v3022 = vadd.f32 %v3006, %v1990
        %v3023 = vadd.f32 %v3007, %v1993
        %v3024 = vadd.f32 %v3008, %v1998
        %v3025 = vadd.f32 %v3009, %v2001
        %v3026 = vadd.f32 %v3010, %v2006
        %v3027 = vadd.f32 %v3011, %v2009
        %v3028 = vadd.f32 %v3012, %v2014
        %v3029 = vadd.f32 %v3013, %v2017
        %v3030 = vmax.f32 %v3014, 0.0
        %v3031 = vmax.f32 %v3015, 0.0
        %v3032 = vmax.f32 %v3016, 0.0
        %v3033 = vmax.f32 %v3017, 0.0
        %v3034 = vmax.f32 %v3018, 0.0
        %v3035 = vmax.f32 %v3019, 0.0
        %v3036 = vmax.f32 %v3020, 0.0
        %v3037 = vmax.f32 %v3021, 0.0
        %v3038 = vmax.f32 %v3022, 0.0
        %v3039 = vmax.f32 %v3023, 0.0
        %v3040 = vmax.f32 %v3024, 0.0
        %v3041 = vmax.f32 %v3025, 0.0
        %v3042 = vmax.f32 %v3026, 0.0
        %v3043 = vmax.f32 %v3027, 0.0
        %v3044 = vmax.f32 %v3028, 0.0
        %v3045 = vmax.f32 %v3029, 0.0
        %v3046 = vlaneseq
        %v3047 = vshrl.u32 %v3046, 7
        %v3048 = vlaneseq
        %v3049 = vand.u32 %v3048, 127
        %v3050 = vmul.u32 %v3047, 16
        %v3051 = vadd.s32 %v3050, 15
        %vm3052 = vcmp.eq.s32.totalorder %v3049, %v3051
        %v3053 = vsel %vm3052, 1, 0
        %v3054 = vcvt.s32.f32 %v3053
        %3055 = vmatprep.subr.mxu0 0.0
        %3056 = vmatpush1.msra.mxu0 %v3030
        %3057 = vmatprep.subr.mxu0 0.0
        %3058 = vmatpush1.msra.mxu0 %v3031
        %3059 = vmatprep.subr.mxu0 0.0
        %3060 = vmatpush1.msra.mxu0 %v3032
        %3061 = vmatprep.subr.mxu0 0.0
        %3062 = vmatpush1.msra.mxu0 %v3033
        %3063 = vmatprep.subr.mxu0 0.0
        %3064 = vmatpush1.msra.mxu0 %v3034
        %3065 = vmatprep.subr.mxu0 0.0
        %3066 = vmatpush1.msra.mxu0 %v3035
        %3067 = vmatprep.subr.mxu0 0.0
        %3068 = vmatpush1.msra.mxu0 %v3036
        %3069 = vmatprep.subr.mxu0 0.0
        %3070 = vmatpush1.msra.mxu0 %v3037
        %3071 = vmatprep.subr.mxu0 0.0
        %3072 = vmatpush1.msra.mxu0 %v3038
        %3073 = vmatprep.subr.mxu0 0.0
        %3074 = vmatpush1.msra.mxu0 %v3039
        %3075 = vmatprep.subr.mxu0 0.0
        %3076 = vmatpush1.msra.mxu0 %v3040
        %3077 = vmatprep.subr.mxu0 0.0
        %3078 = vmatpush1.msra.mxu0 %v3041
        %3079 = vmatprep.subr.mxu0 0.0
        %3080 = vmatpush1.msra.mxu0 %v3042
        %3081 = vmatprep.subr.mxu0 0.0
        %3082 = vmatpush1.msra.mxu0 %v3043
        %3083 = vmatprep.subr.mxu0 0.0
        %3084 = vmatpush1.msra.mxu0 %v3044
        %3085 = vmatprep.subr.mxu0 0.0
        %3086 = vmatpush1.msra.mxu0 %v3045
        %3087 = vmatprep.subr.mxu0 0.0
        %3088 = vmatpush1.msra.mxu0 0.0
        %3089 = vmatprep.subr.mxu0 0.0
        %3090 = vmatpush1.msra.mxu0 0.0
        %3091 = vmatprep.subr.mxu0 0.0
        %3092 = vmatpush1.msra.mxu0 0.0
        %3093 = vmatprep.subr.mxu0 0.0
        %3094 = vmatpush1.msra.mxu0 0.0
        %3095 = vmatprep.subr.mxu0 0.0
        %3096 = vmatpush1.msra.mxu0 0.0
        %3097 = vmatprep.subr.mxu0 0.0
        %3098 = vmatpush1.msra.mxu0 0.0
        %3099 = vmatprep.subr.mxu0 0.0
        %3100 = vmatpush1.msra.mxu0 0.0
        %3101 = vmatprep.subr.mxu0 0.0
        %3102 = vmatpush1.msra.mxu0 0.0
        %3103 = vmatprep.subr.mxu0 0.0
        %3104 = vmatpush1.msra.mxu0 0.0
        %3105 = vmatprep.subr.mxu0 0.0
        %3106 = vmatpush1.msra.mxu0 0.0
        %3107 = vmatprep.subr.mxu0 0.0
        %3108 = vmatpush1.msra.mxu0 0.0
        %3109 = vmatprep.subr.mxu0 0.0
        %3110 = vmatpush1.msra.mxu0 0.0
        %3111 = vmatprep.subr.mxu0 0.0
        %3112 = vmatpush1.msra.mxu0 0.0
        %3113 = vmatprep.subr.mxu0 0.0
        %3114 = vmatpush1.msra.mxu0 0.0
        %3115 = vmatprep.subr.mxu0 0.0
        %3116 = vmatpush1.msra.mxu0 0.0
        %3117 = vmatprep.subr.mxu0 0.0
        %3118 = vmatpush1.msra.mxu0 0.0
        %3119 = vmatprep.mubr.f32.mxu0 0.0
        %3120 = vmatmul.mubr.f32.gmra.mrb[0].mxu0 %v3054
        %v3121 = vpop.f32.mrb[0].mxu0
        %v3122 = vadd.f32 0.0, %v3121
        %v3123 = vpop.f32.mrb[0].mxu0
        %3124 = vdwg.mxu0
        %v3125 = vpack.c.bf16 %v3122, %v3122
        %v3126 = vld [vmem:[#allocation15] sm:$0xf]
        %v3127 = vld [vmem:[#allocation15 + $0x4] sm:$0xf]
        %v3128 = vld [vmem:[#allocation15 + $0x8] sm:$0xf]
        %v3129 = vld [vmem:[#allocation15 + $0xc] sm:$0xf]
        %v3130 = vld [vmem:[#allocation15 + $0x10] sm:$0xf]
        %v3131 = vld [vmem:[#allocation15 + $0x14] sm:$0xf]
        %v3132 = vld [vmem:[#allocation15 + $0x18] sm:$0xf]
        %v3133 = vld [vmem:[#allocation15 + $0x1c] sm:$0xf]
        %v3134 = vld [vmem:[#allocation15 + $0x20] sm:$0xf]
        %v3135 = vld [vmem:[#allocation15 + $0x24] sm:$0xf]
        %v3136 = vld [vmem:[#allocation15 + $0x28] sm:$0xf]
        %v3137 = vld [vmem:[#allocation15 + $0x2c] sm:$0xf]
        %v3138 = vld [vmem:[#allocation15 + $0x30] sm:$0xf]
        %v3139 = vld [vmem:[#allocation15 + $0x34] sm:$0xf]
        %v3140 = vld [vmem:[#allocation15 + $0x38] sm:$0xf]
        %v3141 = vld [vmem:[#allocation15 + $0x3c] sm:$0xf]
        %v3142 = vld [vmem:[%s14] sm:$0x1]
        %v3144 = vlaneseq
        %v3145 = vshrl.u32 %v3144, 7
        %v3146 = vsub.s32 0, %v3145
        %v3147 = vrot.slane %v3142, %v3146
        %v3165 = vunpack.c.l.b16 %v3126
        %v3166 = vunpack.c.l.b16 %v3127
        %v3167 = vunpack.c.l.b16 %v3128
        %v3168 = vunpack.c.l.b16 %v3129
        %v3169 = vunpack.c.l.b16 %v3130
        %v3170 = vunpack.c.l.b16 %v3131
        %v3171 = vunpack.c.l.b16 %v3132
        %v3172 = vunpack.c.l.b16 %v3133
        %v3173 = vunpack.c.l.b16 %v3134
        %v3174 = vunpack.c.l.b16 %v3135
        %v3175 = vunpack.c.l.b16 %v3136
        %v3176 = vunpack.c.l.b16 %v3137
        %v3177 = vunpack.c.l.b16 %v3138
        %v3178 = vunpack.c.l.b16 %v3139
        %v3179 = vunpack.c.l.b16 %v3140
        %v3180 = vunpack.c.l.b16 %v3141
        %v3181 = vpack.c.b16 %v3166, %v3165
        %v3182 = vpack.c.b16 %v3168, %v3167
        %v3183 = vpack.c.b16 %v3170, %v3169
        %v3184 = vpack.c.b16 %v3172, %v3171
        %v3185 = vpack.c.b16 %v3174, %v3173
        %v3186 = vpack.c.b16 %v3176, %v3175
        %v3187 = vpack.c.b16 %v3178, %v3177
        %v3188 = vpack.c.b16 %v3180, %v3179
        %3197 = vmatprep.subr.bf16.mxu0 0
        %3198 = vmatpush1.bf16.msra.mxu0 %v3181
        %3199 = vmatprep.subr.bf16.mxu0 0
        %3200 = vmatpush1.bf16.msra.mxu0 %v3182
        %3201 = vmatprep.subr.bf16.mxu0 0
        %3202 = vmatpush1.bf16.msra.mxu0 %v3183
        %3203 = vmatprep.subr.bf16.mxu0 0
        %3204 = vmatpush1.bf16.msra.mxu0 %v3184
        %3205 = vmatprep.subr.bf16.mxu0 0
        %3206 = vmatpush1.bf16.msra.mxu0 %v3185
        %3207 = vmatprep.subr.bf16.mxu0 0
        %3208 = vmatpush1.bf16.msra.mxu0 %v3186
        %3209 = vmatprep.subr.bf16.mxu0 0
        %3210 = vmatpush1.bf16.msra.mxu0 %v3187
        %3211 = vmatprep.subr.bf16.mxu0 0
        %3212 = vmatpush1.bf16.msra.mxu0 %v3188
        %3213 = vmatprep.subr.bf16.mxu0 0
        %3214 = vmatpush1.bf16.msra.mxu0 0
        %3215 = vmatprep.subr.bf16.mxu0 0
        %3216 = vmatpush1.bf16.msra.mxu0 0
        %3217 = vmatprep.subr.bf16.mxu0 0
        %3218 = vmatpush1.bf16.msra.mxu0 0
        %3219 = vmatprep.subr.bf16.mxu0 0
        %3220 = vmatpush1.bf16.msra.mxu0 0
        %3221 = vmatprep.subr.bf16.mxu0 0
        %3222 = vmatpush1.bf16.msra.mxu0 0
        %3223 = vmatprep.subr.bf16.mxu0 0
        %3224 = vmatpush1.bf16.msra.mxu0 0
        %3225 = vmatprep.subr.bf16.mxu0 0
        %3226 = vmatpush1.bf16.msra.mxu0 0
        %3227 = vmatprep.subr.bf16.mxu0 0
        %3228 = vmatpush1.bf16.msra.mxu0 0
        %3229 = vmatprep.mubr.bf16.mxu0 0
        %3230 = vmatmul.mubr.bf16.gmra.mrb[0].mxu0 %v3125
        %v3231 = vpop.f32.mrb[0].mxu0
        %v3232 = vadd.f32 %v3147, %v3231
        %v3233 = vpop.f32.mrb[0].mxu0
        %v3234 = vpop.f32.mrb[0].mxu0
        %v3235 = vpop.f32.mrb[0].mxu0
        %3236 = vdwg.mxu0
        %3237 = vst [vmem:[%s615] sm:$0xff] %v3232
        %s3238 = sand.u32 %s364, 1
        %s3239 = scalar_lea.sflag [#allocation5], %s3238
        %s3240 = sand.u32 %s364, 1
        %s3241 = smul.addr %s3240, 8
        %s3242 = scalar_lea.vmem [#allocation17], %s3241
        // Predicated region
        $region113: #{tpu_custom_call.1} parent=79 // pred_check
          %p3243 = pneg %p374
        $region114: #{tpu_custom_call.1} parent=79 // pred_check_branch
          %3245 = sbr.rel (%p3243) target = $region116
        $region115: #{tpu_custom_call.1} parent=79 // pred_region
          %s3247 = ssub.s32 128, 128
          %3248 = vsyncadd %s3239, %s3247
          %s3249 = smul.addr %s36, 128
          %s3250 = scalar_lea.hbm %s15, %s3249
          %s3252 = sshll.u32 %s3242, 4
          %s3253 = int_to_ptr.vmem [resolvable:$true] %s3252
          %3255 = dma.vmem_to_hbm [thread:$0]  %s3253, 128, %s3250, %s3239
        $region116: #{tpu_custom_call.1} parent=79 // pred_fallthru
          _
      $region80: #{tpu_custom_call.1} parent=5 // pred_fallthru
        _
      %p3256 = scmp.le.s32.totalorder 2, %s31
      // Predicated region
      $region117: #{tpu_custom_call.1} parent=5 // pred_check
        %p3257 = pneg %p3256
      $region118: #{tpu_custom_call.1} parent=5 // pred_check_branch
        %3259 = sbr.rel (%p3257) target = $region120
      $region119: #{tpu_custom_call.1} parent=5 // pred_region
        %s3260 = ssub.s32 %s31, 2
        // Predicated region
        $region121: #{tpu_custom_call.1} parent=119 // pred_check
          %p3261 = pneg %p380
        $region122: #{tpu_custom_call.1} parent=119 // pred_check_branch
          %3263 = sbr.rel (%p3261) target = $region124
        $region123: #{tpu_custom_call.1} parent=119 // pred_region
          %s3264 = sand.u32 %s365, 1
          %s3265 = scalar_lea.sflag [#allocation5], %s3264
          %s3266 = sand.u32 %s365, 1
          %s3267 = smul.addr %s3266, 8
          %s3268 = scalar_lea.vmem [#allocation17], %s3267
          %3269 = dma.done %s3265, 128
        $region124: #{tpu_custom_call.1} parent=119 // pred_fallthru
          _
      $region120: #{tpu_custom_call.1} parent=5 // pred_fallthru
        _
    $region6: #{tpu_custom_call.1} parent=1 // loop_footer
      %s35 = sadd.s32 1, %s31
    $region7: #{tpu_custom_call.1} parent=1 // loop_footer_branch
      %30 = sbr.rel target = $region3
    $region8: #{tpu_custom_call.1} parent=1 // loop_exit
      _
    %3270 = vsyncpa [#allocation4], 1
    %s3271 = scalar_lea.sflag [#allocation4], 1
    %3272 = vsyncpa %s3271, 1
    %3273 = vsyncpa [#allocation7], 1
    %3274 = vsyncpa [#allocation10], 1
    %3275 = vsyncpa [#allocation13], 1
    %3276 = vsyncpa [#allocation16], 1
    %3277 = vsyncpa [#allocation5], 1
    %s3278 = scalar_lea.sflag [#allocation5], 1
    %3279 = vsyncpa %s3278, 1

</llo_original>
